<compile_context>
chip_gen: v7x
topology: tpu7x:2x2x1
jax: 0.10.0
libtpu: 0.0.40
codegen_flags: <defaults>
</compile_context>

<pallas_src>
import jax
import jax.numpy as jnp
from jax import lax
from jax.experimental import pallas as pl
from jax.experimental.pallas import tpu as pltpu

# ---- model config (mirrors `args`) -------------------------------------------
OBS_DIM = 10          # obs_dim
N_AGENTS = 3          # args.n_agents
OBS_EMB = 32          # args.observation_embedding_dim
N_ACTIONS = 6         # args.n_actions
INPUT_SHAPE = 20      # input_shape
HIDDEN = 32           # args.hidden_dim
USE_RNN = True        # args.use_rnn
USE_L1NORM = True     # args.use_l1norm
EPS = 1e-8

OBS_IN = OBS_DIM + N_AGENTS        # 13
RNN_DIM = OBS_EMB + HIDDEN         # 64

# ---- TPU layout constants ------------------------------------------------------
HID_PAD = 128                      # hidden carried one full 128-lane group wide
GATE_W = 3 * HID_PAD               # r|z|n gates, each in its own 128-lane group
BG_MAX = 128                       # max batch rows per grid block (MXU LHS rows)
M_MAX = 2048                       # max TT*BG rows per chunk (VMEM scratch budget)

# packed input slab lanes:  obs -> [0, 13), inputs -> [16, 36)
OBS_OFF = 0
INP_OFF = 16
IN_W = 40

# output slab lanes:  q -> [0, 6), avail -> [6, 12), h -> [12, 44), zeros -> [44, 64)
O_Q = 0
O_AVAIL = N_ACTIONS
O_H = 2 * N_ACTIONS
OUT_W = 64


def _align8(x):
    return (x + 7) // 8 * 8


# Row offsets inside the packed parameter slab [P_ROWS, GATE_W] (all 8-aligned,
# so in-kernel slices are tile-aligned views).
R_W_OBSP = 0                          # (IN_W, OBS_EMB)   obs_fc   (zero rows on pads)
R_W_FC1P = R_W_OBSP + IN_W            # 40   (IN_W, HIDDEN)    fc1
R_W_A1 = R_W_FC1P + IN_W              # 80   (OBS_EMB, OBS_EMB) aux hidden layer
R_W_IHX = R_W_A1 + OBS_EMB            # 112  (HIDDEN, GATE_W)  GRU W_ih (x1 part)
R_W_IHO = R_W_IHX + HIDDEN            # 144  (OBS_EMB, GATE_W) GRU W_ih (obs part)
R_W_HH = R_W_IHO + OBS_EMB            # 176  (HID_PAD, GATE_W) GRU W_hh (zero pad rows)
R_W_OUTH = R_W_HH + HID_PAD           # 304  (HID_PAD, OUT_W)  [w_fc2 | I_32 h-copy]
R_W_OUTA = R_W_OUTH + HID_PAD         # 432  (OBS_EMB, OUT_W)  [w_a2]
R_B_OBS = R_W_OUTA + OBS_EMB          # 464
R_B_FC1 = R_B_OBS + 8                 # 472
R_B_A1 = R_B_FC1 + 8                  # 480
R_B_IH = R_B_A1 + 8                   # 488
R_B_HH = R_B_IH + 8                   # 496
R_B_OUT = R_B_HH + 8                  # 504
P_ROWS = R_B_OUT + 8                  # 512


def _agent_chunk_kernel(in_ref, h0_ref, p_ref, out_ref, gi_ref, hs_ref, hc_ref):
    """One (batch_group, time_chunk) grid step of the fused rollout."""
    c = pl.program_id(1)
    tt, bg = in_ref.shape[0], in_ref.shape[1]
    m = tt * bg
    f32 = jnp.float32

    # (Re-)initialise the carried hidden state at the start of each rollout.
    @pl.when(c == 0)
    def _():
        hc_ref[...] = h0_ref[...]

    def dot(a, b):
        return jnp.dot(a, b, preferred_element_type=f32)

    # ---- hoisted, h-independent precompute over the whole chunk (big matmuls) --
    x_all = in_ref[...].reshape(m, IN_W)                        # packed obs | inputs

    w_obs = p_ref[R_W_OBSP:R_W_OBSP + IN_W, 0:OBS_EMB]
    b_obs = p_ref[R_B_OBS:R_B_OBS + 1, 0:OBS_EMB]
    obs_emb = dot(x_all, w_obs) + b_obs
    if USE_L1NORM:
        denom = jnp.maximum(jnp.mean(jnp.abs(obs_emb), axis=-1, keepdims=True), EPS)
        obs_emb = obs_emb / denom                               # exact (EUP has slack)

    w_a1 = p_ref[R_W_A1:R_W_A1 + OBS_EMB, 0:OBS_EMB]
    b_a1 = p_ref[R_B_A1:R_B_A1 + 1, 0:OBS_EMB]
    a1 = jnp.maximum(dot(obs_emb, w_a1) + b_a1, 0.0)            # aux hidden layer

    w_fc1 = p_ref[R_W_FC1P:R_W_FC1P + IN_W, 0:HIDDEN]
    b_fc1 = p_ref[R_B_FC1:R_B_FC1 + 1, 0:HIDDEN]
    x1 = jnp.maximum(dot(x_all, w_fc1) + b_fc1, 0.0)

    # GRU input projection without concat: split-K matmul over [x1 | obs_emb].
    # Gate columns are 128-lane aligned; pad columns are zero so pad lanes of
    # gi/gh stay 0 and the carried h keeps exact zeros in lanes >= HIDDEN.
    w_ihx = p_ref[R_W_IHX:R_W_IHX + HIDDEN, :]
    w_iho = p_ref[R_W_IHO:R_W_IHO + OBS_EMB, :]
    b_ih = p_ref[R_B_IH:R_B_IH + 1, :]
    gi_ref[...] = dot(x1, w_ihx) + dot(obs_emb, w_iho) + b_ih   # (m, GATE_W)

    # ---- serial recurrence: only gh + gate math per timestep -------------------
    if USE_RNN:
        w_hh = p_ref[R_W_HH:R_W_HH + HID_PAD, :]                # zero pad rows
        b_hh = p_ref[R_B_HH:R_B_HH + 1, :]

        def step(t, h):
            i0 = pl.multiple_of(t * bg, bg)
            gi_t = gi_ref[pl.ds(i0, bg), :]
            gh = dot(h, w_hh) + b_hh
            r = jax.nn.sigmoid(gi_t[:, 0:HID_PAD] + gh[:, 0:HID_PAD])
            z = jax.nn.sigmoid(gi_t[:, HID_PAD:2 * HID_PAD] + gh[:, HID_PAD:2 * HID_PAD])
            n = jnp.tanh(gi_t[:, 2 * HID_PAD:] + r * gh[:, 2 * HID_PAD:])
            h_new = (1.0 - z) * n + z * h                       # pad lanes stay 0
            hs_ref[pl.ds(i0, bg), :] = h_new
            return h_new

        h_last = lax.fori_loop(0, tt, step, hc_ref[...], unroll=min(tt, 8))
        hc_ref[...] = h_last
    else:
        hs_ref[...] = jnp.maximum(gi_ref[...][:, 0:HID_PAD], 0.0)
        hc_ref[...] = hs_ref[pl.ds((tt - 1) * bg, bg), :]

    # ---- fused lane-dense output: q | avail | h via one post-loop matmul -------
    w_outh = p_ref[R_W_OUTH:R_W_OUTH + HID_PAD, 0:OUT_W]        # [w_fc2 | I_32]
    w_outa = p_ref[R_W_OUTA:R_W_OUTA + OBS_EMB, 0:OUT_W]        # [w_a2]
    b_out = p_ref[R_B_OUT:R_B_OUT + 1, 0:OUT_W]
    out2d = dot(hs_ref[...], w_outh) + dot(a1, w_outa) + b_out  # (m, OUT_W)
    out_ref[...] = out2d.reshape(tt, bg, OUT_W)


@jax.jit
def agent_forward_rollout(observation_seq, inputs_seq, hidden_state, param_slab):
    """Fused T-step forward.

    observation_seq: [T, B, OBS_IN], inputs_seq: [T, B, INPUT_SHAPE],
    hidden_state: [B, HIDDEN] (h at t=0), param_slab: packed [P_ROWS, GATE_W].
    Returns (q [T,B,N_ACTIONS], h [T,B,HIDDEN], avail [T,B,N_ACTIONS]) — identical
    to calling the PyTorch module T times while threading the hidden state.
    """
    T, B = observation_seq.shape[0], observation_seq.shape[1]

    # batch grouping: as many rows per grid step as possible (up to 128 MXU rows)
    b_pad = _align8(max(B, 1))
    bg = min(b_pad, BG_MAX)
    nbg = pl.cdiv(b_pad, bg)
    b_pad = nbg * bg

    # time chunking: amortise grid overhead, bounded by the VMEM scratch budget
    # TODO(synk): for extremely long rollouts also stream gi in sub-chunks.
    tt = max(1, min(T, M_MAX // bg))
    n_chunks = pl.cdiv(T, tt)
    t_pad = n_chunks * tt

    # pack obs + inputs into one lane-padded slab -> one input DMA per chunk
    in_slab = jnp.zeros((t_pad, b_pad, IN_W), jnp.float32)
    in_slab = in_slab.at[:T, :B, OBS_OFF:OBS_OFF + OBS_IN].set(
        observation_seq.astype(jnp.float32))
    in_slab = in_slab.at[:T, :B, INP_OFF:INP_OFF + INPUT_SHAPE].set(
        inputs_seq.astype(jnp.float32))

    h0 = hidden_state.reshape(-1, HIDDEN).astype(jnp.float32)
    h0_p = jnp.zeros((b_pad, HID_PAD), jnp.float32).at[:h0.shape[0], :HIDDEN].set(h0)

    out = pl.pallas_call(
        _agent_chunk_kernel,
        out_shape=jax.ShapeDtypeStruct((t_pad, b_pad, OUT_W), jnp.float32),
        grid_spec=pltpu.PrefetchScalarGridSpec(
            num_scalar_prefetch=0,
            grid=(nbg, n_chunks),
            in_specs=[
                pl.BlockSpec((tt, bg, IN_W), lambda b, c: (c, b, 0)),
                pl.BlockSpec((bg, HID_PAD), lambda b, c: (b, 0)),
                # constant index map -> weights DMA'd once, VMEM-resident
                pl.BlockSpec((P_ROWS, GATE_W), lambda b, c: (0, 0)),
            ],
            out_specs=pl.BlockSpec((tt, bg, OUT_W), lambda b, c: (c, b, 0)),
            scratch_shapes=[
                pltpu.VMEM((tt * bg, GATE_W), jnp.float32),   # gi for the chunk
                pltpu.VMEM((tt * bg, HID_PAD), jnp.float32),  # per-step h for chunk
                pltpu.VMEM((bg, HID_PAD), jnp.float32),       # carried hidden state
            ],
        ),
        compiler_params=pltpu.CompilerParams(
            dimension_semantics=("parallel", "arbitrary")),
    )(in_slab, h0_p, param_slab)

    q = out[:T, :B, O_Q:O_Q + N_ACTIONS]
    avail = out[:T, :B, O_AVAIL:O_AVAIL + N_ACTIONS]
    h = out[:T, :B, O_H:O_H + HIDDEN]
    return q, h, avail


def agent_forward(observation, inputs, hidden_state, param_slab):
    """Single-step API matching the PyTorch module's forward signature."""
    q, h, avail = agent_forward_rollout(
        observation[None], inputs[None], hidden_state, param_slab)
    return q[0], h[0], avail[0]


# ---- host-side parameter packing (done once) -----------------------------------
def pack_params(p):
    slab = jnp.zeros((P_ROWS, GATE_W), jnp.float32)

    def put(s, r0, c0, a):
        a = jnp.asarray(a, jnp.float32)
        if a.ndim == 1:
            a = a[None, :]
        return s.at[r0:r0 + a.shape[0], c0:c0 + a.shape[1]].set(a)

    # obs_fc / fc1 weights laid out against the packed-input lanes (zero pads)
    slab = put(slab, R_W_OBSP + OBS_OFF, 0, p["w_obs"])
    slab = put(slab, R_W_FC1P + INP_OFF, 0, p["w_fc1"])
    slab = put(slab, R_W_A1, 0, p["w_a1"])
    slab = put(slab, R_B_OBS, 0, p["b_obs"])
    slab = put(slab, R_B_FC1, 0, p["b_fc1"])
    slab = put(slab, R_B_A1, 0, p["b_a1"])
    if USE_RNN:
        # split rows into x1 / obs_emb halves, spread the 3 gates (r, z, n) to
        # 128-lane-aligned column groups; pad rows/cols stay zero.
        for g in range(3):
            cols = slice(g * HIDDEN, (g + 1) * HIDDEN)
            slab = put(slab, R_W_IHX, g * HID_PAD, p["w_ih"][:HIDDEN, cols])
            slab = put(slab, R_W_IHO, g * HID_PAD, p["w_ih"][HIDDEN:, cols])
            slab = put(slab, R_B_IH, g * HID_PAD, p["b_ih"][:, cols])
            slab = put(slab, R_W_HH, g * HID_PAD, p["w_hh"][:, cols])
            slab = put(slab, R_B_HH, g * HID_PAD, p["b_hh"][:, cols])
    else:
        slab = put(slab, R_W_IHX, 0, p["w_ih"][:HIDDEN, :])
        slab = put(slab, R_W_IHO, 0, p["w_ih"][HIDDEN:, :])
        slab = put(slab, R_B_IH, 0, p["b_ih"])
    # fused output head: lanes [q | avail | h-copy | zeros]
    slab = put(slab, R_W_OUTH, O_Q, p["w_fc2"])
    slab = put(slab, R_W_OUTH, O_H, jnp.eye(HIDDEN, dtype=jnp.float32))
    slab = put(slab, R_W_OUTA, O_AVAIL, p["w_a2"])
    slab = put(slab, R_B_OUT, O_Q, p["b_fc2"])
    slab = put(slab, R_B_OUT, O_AVAIL, p["b_a2"])
    return slab


# ---- deterministic synthetic parameter init (PyTorch Linear-style uniform) ------
def init_params(key):
    def lin(k, fan_in, fan_out):
        k1, k2 = jax.random.split(k)
        bound = 1.0 / (fan_in ** 0.5)
        w = jax.random.uniform(k1, (fan_in, fan_out), jnp.float32, -bound, bound)
        b = jax.random.uniform(k2, (1, fan_out), jnp.float32, -bound, bound)
        return w, b

    keys = jax.random.split(key, 7)
    p = {}
    p["w_obs"], p["b_obs"] = lin(keys[0], OBS_IN, OBS_EMB)
    p["w_a1"], p["b_a1"] = lin(keys[1], OBS_EMB, OBS_EMB)
    p["w_a2"], p["b_a2"] = lin(keys[2], OBS_EMB, N_ACTIONS)
    p["w_fc1"], p["b_fc1"] = lin(keys[3], INPUT_SHAPE, HIDDEN)
    if USE_RNN:
        p["w_ih"], p["b_ih"] = lin(keys[4], RNN_DIM, 3 * HIDDEN)
        p["w_hh"], p["b_hh"] = lin(keys[5], HIDDEN, 3 * HIDDEN)
    else:
        p["w_ih"], p["b_ih"] = lin(keys[4], RNN_DIM, HIDDEN)
    p["w_fc2"], p["b_fc2"] = lin(keys[6], HIDDEN, N_ACTIONS)
    return p


# ---- pure-JAX reference (mirrors the PyTorch module, one step) -------------------
def _hdot(a, b):
    return jnp.dot(a, b, precision=lax.Precision.HIGHEST)


def reference_forward(observation, inputs, hidden_state, p):
    h_in = hidden_state.reshape(-1, HIDDEN)
    obs_emb = _hdot(observation, p["w_obs"]) + p["b_obs"]
    if USE_L1NORM:
        obs_emb = obs_emb / jnp.maximum(jnp.mean(jnp.abs(obs_emb), -1, keepdims=True), EPS)
    a1 = jnp.maximum(_hdot(obs_emb, p["w_a1"]) + p["b_a1"], 0.0)
    avail = _hdot(a1, p["w_a2"]) + p["b_a2"]
    x = jnp.maximum(_hdot(inputs, p["w_fc1"]) + p["b_fc1"], 0.0)
    x = jnp.concatenate([x, obs_emb], axis=1)
    if USE_RNN:
        gi = _hdot(x, p["w_ih"]) + p["b_ih"]
        gh = _hdot(h_in, p["w_hh"]) + p["b_hh"]
        r = jax.nn.sigmoid(gi[:, :HIDDEN] + gh[:, :HIDDEN])
        z = jax.nn.sigmoid(gi[:, HIDDEN:2 * HIDDEN] + gh[:, HIDDEN:2 * HIDDEN])
        n = jnp.tanh(gi[:, 2 * HIDDEN:] + r * gh[:, 2 * HIDDEN:])
        h = (1.0 - z) * n + z * h_in
    else:
        h = jnp.maximum(_hdot(x, p["w_ih"]) + p["b_ih"], 0.0)
    q = _hdot(h, p["w_fc2"]) + p["b_fc2"]
    return q, h, avail


if __name__ == "__main__":
    key = jax.random.PRNGKey(0)
    k_param, k_obs, k_inp, k_h = jax.random.split(key, 4)

    T, B = 8, 4
    raw_params = init_params(k_param)
    slab = pack_params(raw_params)

    obs_seq = jax.random.normal(k_obs, (T, B, OBS_IN), jnp.float32)
    inp_seq = jax.random.normal(k_inp, (T, B, INPUT_SHAPE), jnp.float32)
    h0 = jax.random.normal(k_h, (B, HIDDEN), jnp.float32)

    q_seq, h_seq, avail_seq = jax.block_until_ready(
        agent_forward_rollout(obs_seq, inp_seq, h0, slab))

    # reference: T sequential calls of the original per-step forward
    h_ref = h0
    q_refs, h_refs, a_refs = [], [], []
    for t in range(T):
        q_r, h_ref, a_r = reference_forward(obs_seq[t], inp_seq[t], h_ref, raw_params)
        q_refs.append(q_r), h_refs.append(h_ref), a_refs.append(a_r)
    q_ref = jnp.stack(q_refs)
    h_ref_seq = jnp.stack(h_refs)
    a_ref = jnp.stack(a_refs)

    # exact in-kernel AvgL1Norm + f32 matmuls -> tight tolerances restored
    TOL = dict(rtol=1e-4, atol=1e-4)
    assert q_seq.shape == (T, B, N_ACTIONS)
    assert h_seq.shape == (T, B, HIDDEN)
    assert avail_seq.shape == (T, B, N_ACTIONS)
    assert jnp.allclose(q_seq, q_ref, **TOL)
    assert jnp.allclose(h_seq, h_ref_seq, **TOL)
    assert jnp.allclose(avail_seq, a_ref, **TOL)

    # single-step API (matches the module's forward signature)
    q1, h1, a1 = jax.block_until_ready(agent_forward(obs_seq[0], inp_seq[0], h0, slab))
    assert jnp.allclose(q1, q_ref[0], **TOL)
    assert jnp.allclose(h1, h_ref_seq[0], **TOL)
    assert jnp.allclose(a1, a_ref[0], **TOL)

    print("KERNEL_OK")
</pallas_src>

<mosaic_0001>
module attributes {stable_mosaic.version = 11 : i64} {
  func.func @_agent_chunk_kernel(%arg0: i32, %arg1: i32, %arg2: memref<8x8x40xf32, #tpu.memory_space<vmem>>, %arg3: memref<8x128xf32, #tpu.memory_space<vmem>>, %arg4: memref<512x384xf32, #tpu.memory_space<vmem>>, %arg5: memref<8x8x64xf32, #tpu.memory_space<vmem>>, %arg6: memref<64x384xf32, #tpu.memory_space<vmem>>, %arg7: memref<64x128xf32, #tpu.memory_space<vmem>>, %arg8: memref<8x128xf32, #tpu.memory_space<vmem>>) attributes {dimension_semantics = [#tpu.dimension_semantics<parallel>, #tpu.dimension_semantics<arbitrary>], iteration_bounds = array<i64: 1, 1>, scalar_prefetch = 0 : i64, scratch_operands = 3 : i64, tpu.core_type = #tpu.core_type<tc>, window_params = [{transform_indices = @transform_0, window_bounds = array<i64: 8, 8, 40>}, {transform_indices = @transform_1, window_bounds = array<i64: 8, 128>}, {pipeline_mode = #tpu.pipeline_mode<synchronous>, transform_indices = @transform_2, window_bounds = array<i64: 512, 384>}, {transform_indices = @transform_3, window_bounds = array<i64: 8, 8, 64>}]} {
    %c0_i32 = arith.constant 0 : i32
    %0 = arith.cmpi eq, %arg1, %c0_i32 : i32
    %1 = arith.extui %0 : i1 to i32
    %c0_i32_0 = arith.constant 0 : i32
    %2 = arith.cmpi ne, %1, %c0_i32_0 : i32
    scf.if %2 {
      %c0_97 = arith.constant 0 : index
      %c0_98 = arith.constant 0 : index
      %337 = vector.load %arg3[%c0_97, %c0_98] : memref<8x128xf32, #tpu.memory_space<vmem>>, vector<8x128xf32>
      %c0_99 = arith.constant 0 : index
      %c0_100 = arith.constant 0 : index
      %338 = vector.load %arg8[%c0_99, %c0_100] : memref<8x128xf32, #tpu.memory_space<vmem>>, vector<8x128xf32>
      tpu.vector_store %arg8[%c0_99, %c0_100], %337 {strides = array<i32>} : memref<8x128xf32, #tpu.memory_space<vmem>>, vector<8x128xf32>,
    } else {
    }
    %c0 = arith.constant 0 : index
    %c0_1 = arith.constant 0 : index
    %c0_2 = arith.constant 0 : index
    %3 = vector.load %arg2[%c0, %c0_1, %c0_2] : memref<8x8x40xf32, #tpu.memory_space<vmem>>, vector<8x8x40xf32>
    %4 = vector.shape_cast %3 : vector<8x8x40xf32> to vector<64x40xf32>
    %c0_3 = arith.constant 0 : index
    %c0_4 = arith.constant 0 : index
    %5 = vector.load %arg4[%c0_3, %c0_4] : memref<512x384xf32, #tpu.memory_space<vmem>>, vector<40x32xf32>
    %c464 = arith.constant 464 : index
    %c0_5 = arith.constant 0 : index
    %6 = vector.load %arg4[%c464, %c0_5] : memref<512x384xf32, #tpu.memory_space<vmem>>, vector<1x32xf32>
    %cst = arith.constant dense<0.000000e+00> : vector<64x32xf32>
    %7 = tpu.matmul %4, %5, %cst {dimension_numbers = #tpu.dot_dimension_numbers<[1], [0], [0], [1], [0, 0, 1, 1], [], []>} : vector<64x40xf32>, vector<40x32xf32>, vector<64x32xf32> -> vector<64x32xf32>
    %8 = vector.broadcast %6 : vector<1x32xf32> to vector<64x32xf32>
    %9 = arith.addf %7, %8 : vector<64x32xf32>
    %10 = math.absf %9 : vector<64x32xf32>
    %cst_6 = arith.constant dense<0.000000e+00> : vector<64xf32>
    %11 = vector.multi_reduction <add>, %10, %cst_6 [1] : vector<64x32xf32> to vector<64xf32>
    %12 = vector.shape_cast %11 : vector<64xf32> to vector<64x1xf32>
    %cst_7 = arith.constant 3.200000e+01 : f32
    %13 = vector.broadcast %cst_7 : f32 to vector<64x1xf32>
    %14 = arith.divf %12, %13 : vector<64x1xf32>
    %cst_8 = arith.constant 9.99999993E-9 : f32
    %15 = vector.broadcast %cst_8 : f32 to vector<64x1xf32>
    %16 = arith.maximumf %14, %15 : vector<64x1xf32>
    %17 = vector.broadcast %16 : vector<64x1xf32> to vector<64x32xf32>
    %18 = arith.divf %9, %17 : vector<64x32xf32>
    %c80 = arith.constant 80 : index
    %c0_9 = arith.constant 0 : index
    %19 = vector.load %arg4[%c80, %c0_9] : memref<512x384xf32, #tpu.memory_space<vmem>>, vector<32x32xf32>
    %c480 = arith.constant 480 : index
    %c0_10 = arith.constant 0 : index
    %20 = vector.load %arg4[%c480, %c0_10] : memref<512x384xf32, #tpu.memory_space<vmem>>, vector<1x32xf32>
    %cst_11 = arith.constant dense<0.000000e+00> : vector<64x32xf32>
    %21 = tpu.matmul %18, %19, %cst_11 {dimension_numbers = #tpu.dot_dimension_numbers<[1], [0], [0], [1], [0, 0, 1, 1], [], []>} : vector<64x32xf32>, vector<32x32xf32>, vector<64x32xf32> -> vector<64x32xf32>
    %22 = vector.broadcast %20 : vector<1x32xf32> to vector<64x32xf32>
    %23 = arith.addf %21, %22 : vector<64x32xf32>
    %cst_12 = arith.constant 0.000000e+00 : f32
    %24 = vector.broadcast %cst_12 : f32 to vector<64x32xf32>
    %25 = arith.maximumf %23, %24 : vector<64x32xf32>
    %c40 = arith.constant 40 : index
    %c0_13 = arith.constant 0 : index
    %26 = vector.load %arg4[%c40, %c0_13] : memref<512x384xf32, #tpu.memory_space<vmem>>, vector<40x32xf32>
    %c472 = arith.constant 472 : index
    %c0_14 = arith.constant 0 : index
    %27 = vector.load %arg4[%c472, %c0_14] : memref<512x384xf32, #tpu.memory_space<vmem>>, vector<1x32xf32>
    %cst_15 = arith.constant dense<0.000000e+00> : vector<64x32xf32>
    %28 = tpu.matmul %4, %26, %cst_15 {dimension_numbers = #tpu.dot_dimension_numbers<[1], [0], [0], [1], [0, 0, 1, 1], [], []>} : vector<64x40xf32>, vector<40x32xf32>, vector<64x32xf32> -> vector<64x32xf32>
    %29 = vector.broadcast %27 : vector<1x32xf32> to vector<64x32xf32>
    %30 = arith.addf %28, %29 : vector<64x32xf32>
    %cst_16 = arith.constant 0.000000e+00 : f32
    %31 = vector.broadcast %cst_16 : f32 to vector<64x32xf32>
    %32 = arith.maximumf %30, %31 : vector<64x32xf32>
    %c112 = arith.constant 112 : index
    %c0_17 = arith.constant 0 : index
    %33 = vector.load %arg4[%c112, %c0_17] : memref<512x384xf32, #tpu.memory_space<vmem>>, vector<32x384xf32>
    %c144 = arith.constant 144 : index
    %c0_18 = arith.constant 0 : index
    %34 = vector.load %arg4[%c144, %c0_18] : memref<512x384xf32, #tpu.memory_space<vmem>>, vector<32x384xf32>
    %c488 = arith.constant 488 : index
    %c0_19 = arith.constant 0 : index
    %35 = vector.load %arg4[%c488, %c0_19] : memref<512x384xf32, #tpu.memory_space<vmem>>, vector<1x384xf32>
    %cst_20 = arith.constant dense<0.000000e+00> : vector<64x384xf32>
    %36 = tpu.matmul %32, %33, %cst_20 {dimension_numbers = #tpu.dot_dimension_numbers<[1], [0], [0], [1], [0, 0, 1, 1], [], []>} : vector<64x32xf32>, vector<32x384xf32>, vector<64x384xf32> -> vector<64x384xf32>
    %cst_21 = arith.constant dense<0.000000e+00> : vector<64x384xf32>
    %37 = tpu.matmul %18, %34, %cst_21 {dimension_numbers = #tpu.dot_dimension_numbers<[1], [0], [0], [1], [0, 0, 1, 1], [], []>} : vector<64x32xf32>, vector<32x384xf32>, vector<64x384xf32> -> vector<64x384xf32>
    %38 = arith.addf %36, %37 : vector<64x384xf32>
    %39 = vector.broadcast %35 : vector<1x384xf32> to vector<64x384xf32>
    %40 = arith.addf %38, %39 : vector<64x384xf32>
    %c0_22 = arith.constant 0 : index
    %c0_23 = arith.constant 0 : index
    %41 = vector.load %arg6[%c0_22, %c0_23] : memref<64x384xf32, #tpu.memory_space<vmem>>, vector<64x384xf32>
    tpu.vector_store %arg6[%c0_22, %c0_23], %40 {strides = array<i32>} : memref<64x384xf32, #tpu.memory_space<vmem>>, vector<64x384xf32>,
    %c176 = arith.constant 176 : index
    %c0_24 = arith.constant 0 : index
    %42 = vector.load %arg4[%c176, %c0_24] : memref<512x384xf32, #tpu.memory_space<vmem>>, vector<128x384xf32>
    %c496 = arith.constant 496 : index
    %c0_25 = arith.constant 0 : index
    %43 = vector.load %arg4[%c496, %c0_25] : memref<512x384xf32, #tpu.memory_space<vmem>>, vector<1x384xf32>
    %c0_26 = arith.constant 0 : index
    %c0_27 = arith.constant 0 : index
    %44 = vector.load %arg8[%c0_26, %c0_27] : memref<8x128xf32, #tpu.memory_space<vmem>>, vector<8x128xf32>
    %c0_i32_28 = arith.constant 0 : i32
    %c8_i32 = arith.constant 8 : i32
    %45 = arith.muli %c0_i32_28, %c8_i32 : i32
    %46 = tpu.assume_multiple %45, 8 : i32
    %47 = arith.index_cast %46 : i32 to index
    %c0_29 = arith.constant 0 : index
    %48 = vector.load %arg6[%47, %c0_29] : memref<64x384xf32, #tpu.memory_space<vmem>>, vector<8x384xf32>
    %cst_30 = arith.constant dense<0.000000e+00> : vector<8x384xf32>
    %49 = tpu.matmul %44, %42, %cst_30 {dimension_numbers = #tpu.dot_dimension_numbers<[1], [0], [0], [1], [0, 0, 1, 1], [], []>} : vector<8x128xf32>, vector<128x384xf32>, vector<8x384xf32> -> vector<8x384xf32>
    %50 = vector.broadcast %43 : vector<1x384xf32> to vector<8x384xf32>
    %51 = arith.addf %49, %50 : vector<8x384xf32>
    %52 = vector.extract_strided_slice %48 {offsets = [0, 0], sizes = [8, 128], strides = [1, 1]} : vector<8x384xf32> to vector<8x128xf32>
    %53 = vector.extract_strided_slice %51 {offsets = [0, 0], sizes = [8, 128], strides = [1, 1]} : vector<8x384xf32> to vector<8x128xf32>
    %54 = arith.addf %52, %53 : vector<8x128xf32>
    %55 = arith.negf %54 : vector<8x128xf32>
    %56 = math.exp %55 : vector<8x128xf32>
    %cst_31 = arith.constant 1.000000e+00 : f32
    %57 = vector.broadcast %cst_31 : f32 to vector<8x128xf32>
    %58 = arith.addf %57, %56 : vector<8x128xf32>
    %59 = arith.divf %57, %58 : vector<8x128xf32>
    %60 = vector.extract_strided_slice %48 {offsets = [0, 128], sizes = [8, 128], strides = [1, 1]} : vector<8x384xf32> to vector<8x128xf32>
    %61 = vector.extract_strided_slice %51 {offsets = [0, 128], sizes = [8, 128], strides = [1, 1]} : vector<8x384xf32> to vector<8x128xf32>
    %62 = arith.addf %60, %61 : vector<8x128xf32>
    %63 = arith.negf %62 : vector<8x128xf32>
    %64 = math.exp %63 : vector<8x128xf32>
    %cst_32 = arith.constant 1.000000e+00 : f32
    %65 = vector.broadcast %cst_32 : f32 to vector<8x128xf32>
    %66 = arith.addf %65, %64 : vector<8x128xf32>
    %67 = arith.divf %65, %66 : vector<8x128xf32>
    %68 = vector.extract_strided_slice %48 {offsets = [0, 256], sizes = [8, 128], strides = [1, 1]} : vector<8x384xf32> to vector<8x128xf32>
    %69 = vector.extract_strided_slice %51 {offsets = [0, 256], sizes = [8, 128], strides = [1, 1]} : vector<8x384xf32> to vector<8x128xf32>
    %70 = arith.mulf %59, %69 : vector<8x128xf32>
    %71 = arith.addf %68, %70 : vector<8x128xf32>
    %72 = math.tanh %71 : vector<8x128xf32>
    %cst_33 = arith.constant 1.000000e+00 : f32
    %73 = vector.broadcast %cst_33 : f32 to vector<8x128xf32>
    %74 = arith.subf %73, %67 : vector<8x128xf32>
    %75 = arith.mulf %74, %72 : vector<8x128xf32>
    %76 = arith.mulf %67, %44 : vector<8x128xf32>
    %77 = arith.addf %75, %76 : vector<8x128xf32>
    %78 = arith.index_cast %46 : i32 to index
    %c0_34 = arith.constant 0 : index
    %79 = vector.load %arg7[%78, %c0_34] : memref<64x128xf32, #tpu.memory_space<vmem>>, vector<8x128xf32>
    tpu.vector_store %arg7[%78, %c0_34], %77 {strides = array<i32>} : memref<64x128xf32, #tpu.memory_space<vmem>>, vector<8x128xf32>,
    %c1_i32 = arith.constant 1 : i32
    %c8_i32_35 = arith.constant 8 : i32
    %80 = arith.muli %c1_i32, %c8_i32_35 : i32
    %81 = tpu.assume_multiple %80, 8 : i32
    %82 = arith.index_cast %81 : i32 to index
    %c0_36 = arith.constant 0 : index
    %83 = vector.load %arg6[%82, %c0_36] : memref<64x384xf32, #tpu.memory_space<vmem>>, vector<8x384xf32>
    %cst_37 = arith.constant dense<0.000000e+00> : vector<8x384xf32>
    %84 = tpu.matmul %77, %42, %cst_37 {dimension_numbers = #tpu.dot_dimension_numbers<[1], [0], [0], [1], [0, 0, 1, 1], [], []>} : vector<8x128xf32>, vector<128x384xf32>, vector<8x384xf32> -> vector<8x384xf32>
    %85 = vector.broadcast %43 : vector<1x384xf32> to vector<8x384xf32>
    %86 = arith.addf %84, %85 : vector<8x384xf32>
    %87 = vector.extract_strided_slice %83 {offsets = [0, 0], sizes = [8, 128], strides = [1, 1]} : vector<8x384xf32> to vector<8x128xf32>
    %88 = vector.extract_strided_slice %86 {offsets = [0, 0], sizes = [8, 128], strides = [1, 1]} : vector<8x384xf32> to vector<8x128xf32>
    %89 = arith.addf %87, %88 : vector<8x128xf32>
    %90 = arith.negf %89 : vector<8x128xf32>
    %91 = math.exp %90 : vector<8x128xf32>
    %cst_38 = arith.constant 1.000000e+00 : f32
    %92 = vector.broadcast %cst_38 : f32 to vector<8x128xf32>
    %93 = arith.addf %92, %91 : vector<8x128xf32>
    %94 = arith.divf %92, %93 : vector<8x128xf32>
    %95 = vector.extract_strided_slice %83 {offsets = [0, 128], sizes = [8, 128], strides = [1, 1]} : vector<8x384xf32> to vector<8x128xf32>
    %96 = vector.extract_strided_slice %86 {offsets = [0, 128], sizes = [8, 128], strides = [1, 1]} : vector<8x384xf32> to vector<8x128xf32>
    %97 = arith.addf %95, %96 : vector<8x128xf32>
    %98 = arith.negf %97 : vector<8x128xf32>
    %99 = math.exp %98 : vector<8x128xf32>
    %cst_39 = arith.constant 1.000000e+00 : f32
    %100 = vector.broadcast %cst_39 : f32 to vector<8x128xf32>
    %101 = arith.addf %100, %99 : vector<8x128xf32>
    %102 = arith.divf %100, %101 : vector<8x128xf32>
    %103 = vector.extract_strided_slice %83 {offsets = [0, 256], sizes = [8, 128], strides = [1, 1]} : vector<8x384xf32> to vector<8x128xf32>
    %104 = vector.extract_strided_slice %86 {offsets = [0, 256], sizes = [8, 128], strides = [1, 1]} : vector<8x384xf32> to vector<8x128xf32>
    %105 = arith.mulf %94, %104 : vector<8x128xf32>
    %106 = arith.addf %103, %105 : vector<8x128xf32>
    %107 = math.tanh %106 : vector<8x128xf32>
    %cst_40 = arith.constant 1.000000e+00 : f32
    %108 = vector.broadcast %cst_40 : f32 to vector<8x128xf32>
    %109 = arith.subf %108, %102 : vector<8x128xf32>
    %110 = arith.mulf %109, %107 : vector<8x128xf32>
    %111 = arith.mulf %102, %77 : vector<8x128xf32>
    %112 = arith.addf %110, %111 : vector<8x128xf32>
    %113 = arith.index_cast %81 : i32 to index
    %c0_41 = arith.constant 0 : index
    %114 = vector.load %arg7[%113, %c0_41] : memref<64x128xf32, #tpu.memory_space<vmem>>, vector<8x128xf32>
    tpu.vector_store %arg7[%113, %c0_41], %112 {strides = array<i32>} : memref<64x128xf32, #tpu.memory_space<vmem>>, vector<8x128xf32>,
    %c2_i32 = arith.constant 2 : i32
    %c8_i32_42 = arith.constant 8 : i32
    %115 = arith.muli %c2_i32, %c8_i32_42 : i32
    %116 = tpu.assume_multiple %115, 8 : i32
    %117 = arith.index_cast %116 : i32 to index
    %c0_43 = arith.constant 0 : index
    %118 = vector.load %arg6[%117, %c0_43] : memref<64x384xf32, #tpu.memory_space<vmem>>, vector<8x384xf32>
    %cst_44 = arith.constant dense<0.000000e+00> : vector<8x384xf32>
    %119 = tpu.matmul %112, %42, %cst_44 {dimension_numbers = #tpu.dot_dimension_numbers<[1], [0], [0], [1], [0, 0, 1, 1], [], []>} : vector<8x128xf32>, vector<128x384xf32>, vector<8x384xf32> -> vector<8x384xf32>
    %120 = vector.broadcast %43 : vector<1x384xf32> to vector<8x384xf32>
    %121 = arith.addf %119, %120 : vector<8x384xf32>
    %122 = vector.extract_strided_slice %118 {offsets = [0, 0], sizes = [8, 128], strides = [1, 1]} : vector<8x384xf32> to vector<8x128xf32>
    %123 = vector.extract_strided_slice %121 {offsets = [0, 0], sizes = [8, 128], strides = [1, 1]} : vector<8x384xf32> to vector<8x128xf32>
    %124 = arith.addf %122, %123 : vector<8x128xf32>
    %125 = arith.negf %124 : vector<8x128xf32>
    %126 = math.exp %125 : vector<8x128xf32>
    %cst_45 = arith.constant 1.000000e+00 : f32
    %127 = vector.broadcast %cst_45 : f32 to vector<8x128xf32>
    %128 = arith.addf %127, %126 : vector<8x128xf32>
    %129 = arith.divf %127, %128 : vector<8x128xf32>
    %130 = vector.extract_strided_slice %118 {offsets = [0, 128], sizes = [8, 128], strides = [1, 1]} : vector<8x384xf32> to vector<8x128xf32>
    %131 = vector.extract_strided_slice %121 {offsets = [0, 128], sizes = [8, 128], strides = [1, 1]} : vector<8x384xf32> to vector<8x128xf32>
    %132 = arith.addf %130, %131 : vector<8x128xf32>
    %133 = arith.negf %132 : vector<8x128xf32>
    %134 = math.exp %133 : vector<8x128xf32>
    %cst_46 = arith.constant 1.000000e+00 : f32
    %135 = vector.broadcast %cst_46 : f32 to vector<8x128xf32>
    %136 = arith.addf %135, %134 : vector<8x128xf32>
    %137 = arith.divf %135, %136 : vector<8x128xf32>
    %138 = vector.extract_strided_slice %118 {offsets = [0, 256], sizes = [8, 128], strides = [1, 1]} : vector<8x384xf32> to vector<8x128xf32>
    %139 = vector.extract_strided_slice %121 {offsets = [0, 256], sizes = [8, 128], strides = [1, 1]} : vector<8x384xf32> to vector<8x128xf32>
    %140 = arith.mulf %129, %139 : vector<8x128xf32>
    %141 = arith.addf %138, %140 : vector<8x128xf32>
    %142 = math.tanh %141 : vector<8x128xf32>
    %cst_47 = arith.constant 1.000000e+00 : f32
    %143 = vector.broadcast %cst_47 : f32 to vector<8x128xf32>
    %144 = arith.subf %143, %137 : vector<8x128xf32>
    %145 = arith.mulf %144, %142 : vector<8x128xf32>
    %146 = arith.mulf %137, %112 : vector<8x128xf32>
    %147 = arith.addf %145, %146 : vector<8x128xf32>
    %148 = arith.index_cast %116 : i32 to index
    %c0_48 = arith.constant 0 : index
    %149 = vector.load %arg7[%148, %c0_48] : memref<64x128xf32, #tpu.memory_space<vmem>>, vector<8x128xf32>
    tpu.vector_store %arg7[%148, %c0_48], %147 {strides = array<i32>} : memref<64x128xf32, #tpu.memory_space<vmem>>, vector<8x128xf32>,
    %c3_i32 = arith.constant 3 : i32
    %c8_i32_49 = arith.constant 8 : i32
    %150 = arith.muli %c3_i32, %c8_i32_49 : i32
    %151 = tpu.assume_multiple %150, 8 : i32
    %152 = arith.index_cast %151 : i32 to index
    %c0_50 = arith.constant 0 : index
    %153 = vector.load %arg6[%152, %c0_50] : memref<64x384xf32, #tpu.memory_space<vmem>>, vector<8x384xf32>
    %cst_51 = arith.constant dense<0.000000e+00> : vector<8x384xf32>
    %154 = tpu.matmul %147, %42, %cst_51 {dimension_numbers = #tpu.dot_dimension_numbers<[1], [0], [0], [1], [0, 0, 1, 1], [], []>} : vector<8x128xf32>, vector<128x384xf32>, vector<8x384xf32> -> vector<8x384xf32>
    %155 = vector.broadcast %43 : vector<1x384xf32> to vector<8x384xf32>
    %156 = arith.addf %154, %155 : vector<8x384xf32>
    %157 = vector.extract_strided_slice %153 {offsets = [0, 0], sizes = [8, 128], strides = [1, 1]} : vector<8x384xf32> to vector<8x128xf32>
    %158 = vector.extract_strided_slice %156 {offsets = [0, 0], sizes = [8, 128], strides = [1, 1]} : vector<8x384xf32> to vector<8x128xf32>
    %159 = arith.addf %157, %158 : vector<8x128xf32>
    %160 = arith.negf %159 : vector<8x128xf32>
    %161 = math.exp %160 : vector<8x128xf32>
    %cst_52 = arith.constant 1.000000e+00 : f32
    %162 = vector.broadcast %cst_52 : f32 to vector<8x128xf32>
    %163 = arith.addf %162, %161 : vector<8x128xf32>
    %164 = arith.divf %162, %163 : vector<8x128xf32>
    %165 = vector.extract_strided_slice %153 {offsets = [0, 128], sizes = [8, 128], strides = [1, 1]} : vector<8x384xf32> to vector<8x128xf32>
    %166 = vector.extract_strided_slice %156 {offsets = [0, 128], sizes = [8, 128], strides = [1, 1]} : vector<8x384xf32> to vector<8x128xf32>
    %167 = arith.addf %165, %166 : vector<8x128xf32>
    %168 = arith.negf %167 : vector<8x128xf32>
    %169 = math.exp %168 : vector<8x128xf32>
    %cst_53 = arith.constant 1.000000e+00 : f32
    %170 = vector.broadcast %cst_53 : f32 to vector<8x128xf32>
    %171 = arith.addf %170, %169 : vector<8x128xf32>
    %172 = arith.divf %170, %171 : vector<8x128xf32>
    %173 = vector.extract_strided_slice %153 {offsets = [0, 256], sizes = [8, 128], strides = [1, 1]} : vector<8x384xf32> to vector<8x128xf32>
    %174 = vector.extract_strided_slice %156 {offsets = [0, 256], sizes = [8, 128], strides = [1, 1]} : vector<8x384xf32> to vector<8x128xf32>
    %175 = arith.mulf %164, %174 : vector<8x128xf32>
    %176 = arith.addf %173, %175 : vector<8x128xf32>
    %177 = math.tanh %176 : vector<8x128xf32>
    %cst_54 = arith.constant 1.000000e+00 : f32
    %178 = vector.broadcast %cst_54 : f32 to vector<8x128xf32>
    %179 = arith.subf %178, %172 : vector<8x128xf32>
    %180 = arith.mulf %179, %177 : vector<8x128xf32>
    %181 = arith.mulf %172, %147 : vector<8x128xf32>
    %182 = arith.addf %180, %181 : vector<8x128xf32>
    %183 = arith.index_cast %151 : i32 to index
    %c0_55 = arith.constant 0 : index
    %184 = vector.load %arg7[%183, %c0_55] : memref<64x128xf32, #tpu.memory_space<vmem>>, vector<8x128xf32>
    tpu.vector_store %arg7[%183, %c0_55], %182 {strides = array<i32>} : memref<64x128xf32, #tpu.memory_space<vmem>>, vector<8x128xf32>,
    %c4_i32 = arith.constant 4 : i32
    %c8_i32_56 = arith.constant 8 : i32
    %185 = arith.muli %c4_i32, %c8_i32_56 : i32
    %186 = tpu.assume_multiple %185, 8 : i32
    %187 = arith.index_cast %186 : i32 to index
    %c0_57 = arith.constant 0 : index
    %188 = vector.load %arg6[%187, %c0_57] : memref<64x384xf32, #tpu.memory_space<vmem>>, vector<8x384xf32>
    %cst_58 = arith.constant dense<0.000000e+00> : vector<8x384xf32>
    %189 = tpu.matmul %182, %42, %cst_58 {dimension_numbers = #tpu.dot_dimension_numbers<[1], [0], [0], [1], [0, 0, 1, 1], [], []>} : vector<8x128xf32>, vector<128x384xf32>, vector<8x384xf32> -> vector<8x384xf32>
    %190 = vector.broadcast %43 : vector<1x384xf32> to vector<8x384xf32>
    %191 = arith.addf %189, %190 : vector<8x384xf32>
    %192 = vector.extract_strided_slice %188 {offsets = [0, 0], sizes = [8, 128], strides = [1, 1]} : vector<8x384xf32> to vector<8x128xf32>
    %193 = vector.extract_strided_slice %191 {offsets = [0, 0], sizes = [8, 128], strides = [1, 1]} : vector<8x384xf32> to vector<8x128xf32>
    %194 = arith.addf %192, %193 : vector<8x128xf32>
    %195 = arith.negf %194 : vector<8x128xf32>
    %196 = math.exp %195 : vector<8x128xf32>
    %cst_59 = arith.constant 1.000000e+00 : f32
    %197 = vector.broadcast %cst_59 : f32 to vector<8x128xf32>
    %198 = arith.addf %197, %196 : vector<8x128xf32>
    %199 = arith.divf %197, %198 : vector<8x128xf32>
    %200 = vector.extract_strided_slice %188 {offsets = [0, 128], sizes = [8, 128], strides = [1, 1]} : vector<8x384xf32> to vector<8x128xf32>
    %201 = vector.extract_strided_slice %191 {offsets = [0, 128], sizes = [8, 128], strides = [1, 1]} : vector<8x384xf32> to vector<8x128xf32>
    %202 = arith.addf %200, %201 : vector<8x128xf32>
    %203 = arith.negf %202 : vector<8x128xf32>
    %204 = math.exp %203 : vector<8x128xf32>
    %cst_60 = arith.constant 1.000000e+00 : f32
    %205 = vector.broadcast %cst_60 : f32 to vector<8x128xf32>
    %206 = arith.addf %205, %204 : vector<8x128xf32>
    %207 = arith.divf %205, %206 : vector<8x128xf32>
    %208 = vector.extract_strided_slice %188 {offsets = [0, 256], sizes = [8, 128], strides = [1, 1]} : vector<8x384xf32> to vector<8x128xf32>
    %209 = vector.extract_strided_slice %191 {offsets = [0, 256], sizes = [8, 128], strides = [1, 1]} : vector<8x384xf32> to vector<8x128xf32>
    %210 = arith.mulf %199, %209 : vector<8x128xf32>
    %211 = arith.addf %208, %210 : vector<8x128xf32>
    %212 = math.tanh %211 : vector<8x128xf32>
    %cst_61 = arith.constant 1.000000e+00 : f32
    %213 = vector.broadcast %cst_61 : f32 to vector<8x128xf32>
    %214 = arith.subf %213, %207 : vector<8x128xf32>
    %215 = arith.mulf %214, %212 : vector<8x128xf32>
    %216 = arith.mulf %207, %182 : vector<8x128xf32>
    %217 = arith.addf %215, %216 : vector<8x128xf32>
    %218 = arith.index_cast %186 : i32 to index
    %c0_62 = arith.constant 0 : index
    %219 = vector.load %arg7[%218, %c0_62] : memref<64x128xf32, #tpu.memory_space<vmem>>, vector<8x128xf32>
    tpu.vector_store %arg7[%218, %c0_62], %217 {strides = array<i32>} : memref<64x128xf32, #tpu.memory_space<vmem>>, vector<8x128xf32>,
    %c5_i32 = arith.constant 5 : i32
    %c8_i32_63 = arith.constant 8 : i32
    %220 = arith.muli %c5_i32, %c8_i32_63 : i32
    %221 = tpu.assume_multiple %220, 8 : i32
    %222 = arith.index_cast %221 : i32 to index
    %c0_64 = arith.constant 0 : index
    %223 = vector.load %arg6[%222, %c0_64] : memref<64x384xf32, #tpu.memory_space<vmem>>, vector<8x384xf32>
    %cst_65 = arith.constant dense<0.000000e+00> : vector<8x384xf32>
    %224 = tpu.matmul %217, %42, %cst_65 {dimension_numbers = #tpu.dot_dimension_numbers<[1], [0], [0], [1], [0, 0, 1, 1], [], []>} : vector<8x128xf32>, vector<128x384xf32>, vector<8x384xf32> -> vector<8x384xf32>
    %225 = vector.broadcast %43 : vector<1x384xf32> to vector<8x384xf32>
    %226 = arith.addf %224, %225 : vector<8x384xf32>
    %227 = vector.extract_strided_slice %223 {offsets = [0, 0], sizes = [8, 128], strides = [1, 1]} : vector<8x384xf32> to vector<8x128xf32>
    %228 = vector.extract_strided_slice %226 {offsets = [0, 0], sizes = [8, 128], strides = [1, 1]} : vector<8x384xf32> to vector<8x128xf32>
    %229 = arith.addf %227, %228 : vector<8x128xf32>
    %230 = arith.negf %229 : vector<8x128xf32>
    %231 = math.exp %230 : vector<8x128xf32>
    %cst_66 = arith.constant 1.000000e+00 : f32
    %232 = vector.broadcast %cst_66 : f32 to vector<8x128xf32>
    %233 = arith.addf %232, %231 : vector<8x128xf32>
    %234 = arith.divf %232, %233 : vector<8x128xf32>
    %235 = vector.extract_strided_slice %223 {offsets = [0, 128], sizes = [8, 128], strides = [1, 1]} : vector<8x384xf32> to vector<8x128xf32>
    %236 = vector.extract_strided_slice %226 {offsets = [0, 128], sizes = [8, 128], strides = [1, 1]} : vector<8x384xf32> to vector<8x128xf32>
    %237 = arith.addf %235, %236 : vector<8x128xf32>
    %238 = arith.negf %237 : vector<8x128xf32>
    %239 = math.exp %238 : vector<8x128xf32>
    %cst_67 = arith.constant 1.000000e+00 : f32
    %240 = vector.broadcast %cst_67 : f32 to vector<8x128xf32>
    %241 = arith.addf %240, %239 : vector<8x128xf32>
    %242 = arith.divf %240, %241 : vector<8x128xf32>
    %243 = vector.extract_strided_slice %223 {offsets = [0, 256], sizes = [8, 128], strides = [1, 1]} : vector<8x384xf32> to vector<8x128xf32>
    %244 = vector.extract_strided_slice %226 {offsets = [0, 256], sizes = [8, 128], strides = [1, 1]} : vector<8x384xf32> to vector<8x128xf32>
    %245 = arith.mulf %234, %244 : vector<8x128xf32>
    %246 = arith.addf %243, %245 : vector<8x128xf32>
    %247 = math.tanh %246 : vector<8x128xf32>
    %cst_68 = arith.constant 1.000000e+00 : f32
    %248 = vector.broadcast %cst_68 : f32 to vector<8x128xf32>
    %249 = arith.subf %248, %242 : vector<8x128xf32>
    %250 = arith.mulf %249, %247 : vector<8x128xf32>
    %251 = arith.mulf %242, %217 : vector<8x128xf32>
    %252 = arith.addf %250, %251 : vector<8x128xf32>
    %253 = arith.index_cast %221 : i32 to index
    %c0_69 = arith.constant 0 : index
    %254 = vector.load %arg7[%253, %c0_69] : memref<64x128xf32, #tpu.memory_space<vmem>>, vector<8x128xf32>
    tpu.vector_store %arg7[%253, %c0_69], %252 {strides = array<i32>} : memref<64x128xf32, #tpu.memory_space<vmem>>, vector<8x128xf32>,
    %c6_i32 = arith.constant 6 : i32
    %c8_i32_70 = arith.constant 8 : i32
    %255 = arith.muli %c6_i32, %c8_i32_70 : i32
    %256 = tpu.assume_multiple %255, 8 : i32
    %257 = arith.index_cast %256 : i32 to index
    %c0_71 = arith.constant 0 : index
    %258 = vector.load %arg6[%257, %c0_71] : memref<64x384xf32, #tpu.memory_space<vmem>>, vector<8x384xf32>
    %cst_72 = arith.constant dense<0.000000e+00> : vector<8x384xf32>
    %259 = tpu.matmul %252, %42, %cst_72 {dimension_numbers = #tpu.dot_dimension_numbers<[1], [0], [0], [1], [0, 0, 1, 1], [], []>} : vector<8x128xf32>, vector<128x384xf32>, vector<8x384xf32> -> vector<8x384xf32>
    %260 = vector.broadcast %43 : vector<1x384xf32> to vector<8x384xf32>
    %261 = arith.addf %259, %260 : vector<8x384xf32>
    %262 = vector.extract_strided_slice %258 {offsets = [0, 0], sizes = [8, 128], strides = [1, 1]} : vector<8x384xf32> to vector<8x128xf32>
    %263 = vector.extract_strided_slice %261 {offsets = [0, 0], sizes = [8, 128], strides = [1, 1]} : vector<8x384xf32> to vector<8x128xf32>
    %264 = arith.addf %262, %263 : vector<8x128xf32>
    %265 = arith.negf %264 : vector<8x128xf32>
    %266 = math.exp %265 : vector<8x128xf32>
    %cst_73 = arith.constant 1.000000e+00 : f32
    %267 = vector.broadcast %cst_73 : f32 to vector<8x128xf32>
    %268 = arith.addf %267, %266 : vector<8x128xf32>
    %269 = arith.divf %267, %268 : vector<8x128xf32>
    %270 = vector.extract_strided_slice %258 {offsets = [0, 128], sizes = [8, 128], strides = [1, 1]} : vector<8x384xf32> to vector<8x128xf32>
    %271 = vector.extract_strided_slice %261 {offsets = [0, 128], sizes = [8, 128], strides = [1, 1]} : vector<8x384xf32> to vector<8x128xf32>
    %272 = arith.addf %270, %271 : vector<8x128xf32>
    %273 = arith.negf %272 : vector<8x128xf32>
    %274 = math.exp %273 : vector<8x128xf32>
    %cst_74 = arith.constant 1.000000e+00 : f32
    %275 = vector.broadcast %cst_74 : f32 to vector<8x128xf32>
    %276 = arith.addf %275, %274 : vector<8x128xf32>
    %277 = arith.divf %275, %276 : vector<8x128xf32>
    %278 = vector.extract_strided_slice %258 {offsets = [0, 256], sizes = [8, 128], strides = [1, 1]} : vector<8x384xf32> to vector<8x128xf32>
    %279 = vector.extract_strided_slice %261 {offsets = [0, 256], sizes = [8, 128], strides = [1, 1]} : vector<8x384xf32> to vector<8x128xf32>
    %280 = arith.mulf %269, %279 : vector<8x128xf32>
    %281 = arith.addf %278, %280 : vector<8x128xf32>
    %282 = math.tanh %281 : vector<8x128xf32>
    %cst_75 = arith.constant 1.000000e+00 : f32
    %283 = vector.broadcast %cst_75 : f32 to vector<8x128xf32>
    %284 = arith.subf %283, %277 : vector<8x128xf32>
    %285 = arith.mulf %284, %282 : vector<8x128xf32>
    %286 = arith.mulf %277, %252 : vector<8x128xf32>
    %287 = arith.addf %285, %286 : vector<8x128xf32>
    %288 = arith.index_cast %256 : i32 to index
    %c0_76 = arith.constant 0 : index
    %289 = vector.load %arg7[%288, %c0_76] : memref<64x128xf32, #tpu.memory_space<vmem>>, vector<8x128xf32>
    tpu.vector_store %arg7[%288, %c0_76], %287 {strides = array<i32>} : memref<64x128xf32, #tpu.memory_space<vmem>>, vector<8x128xf32>,
    %c7_i32 = arith.constant 7 : i32
    %c8_i32_77 = arith.constant 8 : i32
    %290 = arith.muli %c7_i32, %c8_i32_77 : i32
    %291 = tpu.assume_multiple %290, 8 : i32
    %292 = arith.index_cast %291 : i32 to index
    %c0_78 = arith.constant 0 : index
    %293 = vector.load %arg6[%292, %c0_78] : memref<64x384xf32, #tpu.memory_space<vmem>>, vector<8x384xf32>
    %cst_79 = arith.constant dense<0.000000e+00> : vector<8x384xf32>
    %294 = tpu.matmul %287, %42, %cst_79 {dimension_numbers = #tpu.dot_dimension_numbers<[1], [0], [0], [1], [0, 0, 1, 1], [], []>} : vector<8x128xf32>, vector<128x384xf32>, vector<8x384xf32> -> vector<8x384xf32>
    %295 = vector.broadcast %43 : vector<1x384xf32> to vector<8x384xf32>
    %296 = arith.addf %294, %295 : vector<8x384xf32>
    %297 = vector.extract_strided_slice %293 {offsets = [0, 0], sizes = [8, 128], strides = [1, 1]} : vector<8x384xf32> to vector<8x128xf32>
    %298 = vector.extract_strided_slice %296 {offsets = [0, 0], sizes = [8, 128], strides = [1, 1]} : vector<8x384xf32> to vector<8x128xf32>
    %299 = arith.addf %297, %298 : vector<8x128xf32>
    %300 = arith.negf %299 : vector<8x128xf32>
    %301 = math.exp %300 : vector<8x128xf32>
    %cst_80 = arith.constant 1.000000e+00 : f32
    %302 = vector.broadcast %cst_80 : f32 to vector<8x128xf32>
    %303 = arith.addf %302, %301 : vector<8x128xf32>
    %304 = arith.divf %302, %303 : vector<8x128xf32>
    %305 = vector.extract_strided_slice %293 {offsets = [0, 128], sizes = [8, 128], strides = [1, 1]} : vector<8x384xf32> to vector<8x128xf32>
    %306 = vector.extract_strided_slice %296 {offsets = [0, 128], sizes = [8, 128], strides = [1, 1]} : vector<8x384xf32> to vector<8x128xf32>
    %307 = arith.addf %305, %306 : vector<8x128xf32>
    %308 = arith.negf %307 : vector<8x128xf32>
    %309 = math.exp %308 : vector<8x128xf32>
    %cst_81 = arith.constant 1.000000e+00 : f32
    %310 = vector.broadcast %cst_81 : f32 to vector<8x128xf32>
    %311 = arith.addf %310, %309 : vector<8x128xf32>
    %312 = arith.divf %310, %311 : vector<8x128xf32>
    %313 = vector.extract_strided_slice %293 {offsets = [0, 256], sizes = [8, 128], strides = [1, 1]} : vector<8x384xf32> to vector<8x128xf32>
    %314 = vector.extract_strided_slice %296 {offsets = [0, 256], sizes = [8, 128], strides = [1, 1]} : vector<8x384xf32> to vector<8x128xf32>
    %315 = arith.mulf %304, %314 : vector<8x128xf32>
    %316 = arith.addf %313, %315 : vector<8x128xf32>
    %317 = math.tanh %316 : vector<8x128xf32>
    %cst_82 = arith.constant 1.000000e+00 : f32
    %318 = vector.broadcast %cst_82 : f32 to vector<8x128xf32>
    %319 = arith.subf %318, %312 : vector<8x128xf32>
    %320 = arith.mulf %319, %317 : vector<8x128xf32>
    %321 = arith.mulf %312, %287 : vector<8x128xf32>
    %322 = arith.addf %320, %321 : vector<8x128xf32>
    %323 = arith.index_cast %291 : i32 to index
    %c0_83 = arith.constant 0 : index
    %324 = vector.load %arg7[%323, %c0_83] : memref<64x128xf32, #tpu.memory_space<vmem>>, vector<8x128xf32>
    tpu.vector_store %arg7[%323, %c0_83], %322 {strides = array<i32>} : memref<64x128xf32, #tpu.memory_space<vmem>>, vector<8x128xf32>,
    %c8_i32_84 = arith.constant 8 : i32
    %c0_85 = arith.constant 0 : index
    %c0_86 = arith.constant 0 : index
    %325 = vector.load %arg8[%c0_85, %c0_86] : memref<8x128xf32, #tpu.memory_space<vmem>>, vector<8x128xf32>
    tpu.vector_store %arg8[%c0_85, %c0_86], %322 {strides = array<i32>} : memref<8x128xf32, #tpu.memory_space<vmem>>, vector<8x128xf32>,
    %c304 = arith.constant 304 : index
    %c0_87 = arith.constant 0 : index
    %326 = vector.load %arg4[%c304, %c0_87] : memref<512x384xf32, #tpu.memory_space<vmem>>, vector<128x64xf32>
    %c432 = arith.constant 432 : index
    %c0_88 = arith.constant 0 : index
    %327 = vector.load %arg4[%c432, %c0_88] : memref<512x384xf32, #tpu.memory_space<vmem>>, vector<32x64xf32>
    %c504 = arith.constant 504 : index
    %c0_89 = arith.constant 0 : index
    %328 = vector.load %arg4[%c504, %c0_89] : memref<512x384xf32, #tpu.memory_space<vmem>>, vector<1x64xf32>
    %c0_90 = arith.constant 0 : index
    %c0_91 = arith.constant 0 : index
    %329 = vector.load %arg7[%c0_90, %c0_91] : memref<64x128xf32, #tpu.memory_space<vmem>>, vector<64x128xf32>
    %cst_92 = arith.constant dense<0.000000e+00> : vector<64x64xf32>
    %330 = tpu.matmul %329, %326, %cst_92 {dimension_numbers = #tpu.dot_dimension_numbers<[1], [0], [0], [1], [0, 0, 1, 1], [], []>} : vector<64x128xf32>, vector<128x64xf32>, vector<64x64xf32> -> vector<64x64xf32>
    %cst_93 = arith.constant dense<0.000000e+00> : vector<64x64xf32>
    %331 = tpu.matmul %25, %327, %cst_93 {dimension_numbers = #tpu.dot_dimension_numbers<[1], [0], [0], [1], [0, 0, 1, 1], [], []>} : vector<64x32xf32>, vector<32x64xf32>, vector<64x64xf32> -> vector<64x64xf32>
    %332 = arith.addf %330, %331 : vector<64x64xf32>
    %333 = vector.broadcast %328 : vector<1x64xf32> to vector<64x64xf32>
    %334 = arith.addf %332, %333 : vector<64x64xf32>
    %335 = vector.shape_cast %334 : vector<64x64xf32> to vector<8x8x64xf32>
    %c0_94 = arith.constant 0 : index
    %c0_95 = arith.constant 0 : index
    %c0_96 = arith.constant 0 : index
    %336 = vector.load %arg5[%c0_94, %c0_95, %c0_96] : memref<8x8x64xf32, #tpu.memory_space<vmem>>, vector<8x8x64xf32>
    tpu.vector_store %arg5[%c0_94, %c0_95, %c0_96], %335 {strides = array<i32>} : memref<8x8x64xf32, #tpu.memory_space<vmem>>, vector<8x8x64xf32>,
    return
  }
  func.func @transform_0(%arg0: i32, %arg1: i32) -> (i32, i32, i32) {
    %c0_i32 = arith.constant 0 : i32
    %c0_i32_0 = arith.constant 0 : i32
    return %arg1, %arg0, %c0_i32 : i32, i32, i32
  }
  func.func @transform_1(%arg0: i32, %arg1: i32) -> (i32, i32) {
    %c0_i32 = arith.constant 0 : i32
    %c0_i32_0 = arith.constant 0 : i32
    return %arg0, %c0_i32 : i32, i32
  }
  func.func @transform_2(%arg0: i32, %arg1: i32) -> (i32, i32) {
    %c0_i32 = arith.constant 0 : i32
    %c0_i32_0 = arith.constant 0 : i32
    %c0_i32_1 = arith.constant 0 : i32
    return %c0_i32, %c0_i32_0 : i32, i32
  }
  func.func @transform_3(%arg0: i32, %arg1: i32) -> (i32, i32, i32) {
    %c0_i32 = arith.constant 0 : i32
    %c0_i32_0 = arith.constant 0 : i32
    return %arg1, %arg0, %c0_i32 : i32, i32, i32
  }
}

</mosaic_0001>

<llo_original>
// kernel: agent_forward_rollout.1
$region0: #{agent_forward_rollout.1}
  #allocation0 [shape = 'u32[]', space=smem, size = 0x4, offset = 0x4, fixed_abs, tag = 'smem constant byte address 0x4 - core index']
  #allocation1 [shape = 'u32[144,128]{1,0:T(1,128)}', space=vmem, size = 0x12000, scoped, tag = 'internal scratch']
  #allocation2 [shape = 'f32[64,384]{1,0:T(8,128)}', space=vmem, size = 0x18000, scoped, tag = 'scratch operand']
  #allocation3 [shape = 'f32[64,128]{1,0:T(8,128)}', space=vmem, size = 0x8000, scoped, tag = 'scratch operand']
  #allocation4 [shape = 'f32[8,128]{1,0:T(8,128)}', space=vmem, size = 0x1000, scoped, tag = 'scratch operand']
  %s0 = inlined_call_operand.vmem [shape: f32[8,8,40], index: 0, kind: input, shape index: {}]
  %s1 = inlined_call_operand.vmem [shape: f32[8,128], index: 1, kind: input, shape index: {}]
  %s2 = inlined_call_operand.hbm [shape: f32[512,384], index: 2, kind: input, shape index: {}]
  %s3 = inlined_call_operand.vmem [shape: f32[8,8,64], index: 3, kind: output, shape index: {}]
  %s4 = sld [smem:[#allocation0]]
  $region30: #{agent_forward_rollout.1} parent=0
    _
  %s6 = ssub.s32 1, %s4
  %s7 = scalar_select 0, %s6, %s4
  $region1: #{agent_forward_rollout.1} parent=0
    #allocation5 [shape = 'u8[786432]{0}', space=vmem, size = 0xc0000, scoped, tag = 'input window, operand 2, single buffered']
    #allocation6 [shape = 's32[1]{0}', space=sflag, size = 0x4, scoped, tag = 'scoped memory for agent_forward_rollout.1']
    %8 = vsyncpa [#allocation6], 0
    // Predicated region
    $region2: #{agent_forward_rollout.1} parent=1 // pred_check
      _
    $region3: #{agent_forward_rollout.1} parent=1 // pred_check_branch
      %10 = sbr.rel (0) target = $region5
    $region4: #{agent_forward_rollout.1} parent=1 // pred_region
      _
    $region5: #{agent_forward_rollout.1} parent=1 // pred_fallthru
      _
    // Predicated region
    $region6: #{agent_forward_rollout.1} parent=1 // pred_check
      _
    $region7: #{agent_forward_rollout.1} parent=1 // pred_check_branch
      %12 = sbr.rel (0) target = $region9
    $region8: #{agent_forward_rollout.1} parent=1 // pred_region
      _
    $region9: #{agent_forward_rollout.1} parent=1 // pred_fallthru
      _
    // Predicated region
    $region10: #{agent_forward_rollout.1} parent=1 // pred_check
      _
    $region11: #{agent_forward_rollout.1} parent=1 // pred_check_branch
      %14 = sbr.rel (0) target = $region13
    $region12: #{agent_forward_rollout.1} parent=1 // pred_region
      %s16 = ssub.s32 24576, 24576
      %17 = vsyncadd [#allocation6], %s16
      %s18 = sshll.u32 [#allocation5], 4
      %s19 = int_to_ptr.vmem [resolvable:$true] %s18
      %24 = dma.hbm_to_vmem [thread:$0]  %s2, 24576, %s19, [#allocation6], 384, 384, 24
    $region13: #{agent_forward_rollout.1} parent=1 // pred_fallthru
      _
    // Predicated region
    $region14: #{agent_forward_rollout.1} parent=1 // pred_check
      _
    $region15: #{agent_forward_rollout.1} parent=1 // pred_check_branch
      %26 = sbr.rel (0) target = $region17
    $region16: #{agent_forward_rollout.1} parent=1 // pred_region
      %27 = dma.done [#allocation6], 24576
    $region17: #{agent_forward_rollout.1} parent=1 // pred_fallthru
      _
    %p28 = scmp.eq.s32.totalorder 0, 0
    // Predicated region
    $region18: #{agent_forward_rollout.1} parent=1 // pred_check
      %p29 = pneg %p28
    $region19: #{agent_forward_rollout.1} parent=1 // pred_check_branch
      %31 = sbr.rel (%p29) target = $region21
    $region20: #{agent_forward_rollout.1} parent=1 // pred_region
      %v32 = vld [vmem:[%s1] sm:$0xff]
      %33 = vst [vmem:[#allocation4] sm:$0xff] %v32
    $region21: #{agent_forward_rollout.1} parent=1 // pred_fallthru
      _
    %v34 = vld [vmem:[%s0] sm:$0xff]
    %v35 = vld [vmem:[%s0 + $0x8] sm:$0xff]
    %v36 = vld [vmem:[%s0 + $0x10] sm:$0xff]
    %v37 = vld [vmem:[%s0 + $0x18] sm:$0xff]
    %v38 = vld [vmem:[%s0 + $0x20] sm:$0xff]
    %v39 = vld [vmem:[%s0 + $0x28] sm:$0xff]
    %v40 = vld [vmem:[%s0 + $0x30] sm:$0xff]
    %v41 = vld [vmem:[%s0 + $0x38] sm:$0xff]
    %v42 = vld [vmem:[#allocation5] sm:$0xff]
    %v43 = vld [vmem:[#allocation5 + $0x18] sm:$0xff]
    %v44 = vld [vmem:[#allocation5 + $0x30] sm:$0xff]
    %v45 = vld [vmem:[#allocation5 + $0x48] sm:$0xff]
    %v46 = vld [vmem:[#allocation5 + $0x60] sm:$0xff]
    %v47 = vld [vmem:[#allocation5 + $0x570] ss:$0 sm:$0xff]
    %vm48 = vcmask 326656
    %v50 = vsel %vm48, %v34, 0
    %v53 = vsel %vm48, %v35, 0
    %v56 = vsel %vm48, %v36, 0
    %v59 = vsel %vm48, %v37, 0
    %v62 = vsel %vm48, %v38, 0
    %v65 = vsel %vm48, %v39, 0
    %v68 = vsel %vm48, %v40, 0
    %v71 = vsel %vm48, %v41, 0
    %73 = vmatprep.subr.mxu0 0.0
    %74 = vmatpush1.msra.mxu0 %v42
    %75 = vmatprep.subr.mxu0 0.0
    %76 = vmatpush1.msra.mxu0 %v43
    %77 = vmatprep.subr.mxu0 0.0
    %78 = vmatpush1.msra.mxu0 %v44
    %79 = vmatprep.subr.mxu0 0.0
    %80 = vmatpush1.msra.mxu0 %v45
    %81 = vmatprep.subr.mxu0 0.0
    %82 = vmatpush1.msra.mxu0 %v46
    %83 = vmatprep.subr.mxu0 0.0
    %84 = vmatpush1.msra.mxu0 0.0
    %85 = vmatprep.subr.mxu0 0.0
    %86 = vmatpush1.msra.mxu0 0.0
    %87 = vmatprep.subr.mxu0 0.0
    %88 = vmatpush1.msra.mxu0 0.0
    %89 = vmatprep.subr.mxu0 0.0
    %90 = vmatpush1.msra.mxu0 0.0
    %91 = vmatprep.subr.mxu0 0.0
    %92 = vmatpush1.msra.mxu0 0.0
    %93 = vmatprep.subr.mxu0 0.0
    %94 = vmatpush1.msra.mxu0 0.0
    %95 = vmatprep.subr.mxu0 0.0
    %96 = vmatpush1.msra.mxu0 0.0
    %97 = vmatprep.subr.mxu0 0.0
    %98 = vmatpush1.msra.mxu0 0.0
    %99 = vmatprep.subr.mxu0 0.0
    %100 = vmatpush1.msra.mxu0 0.0
    %101 = vmatprep.subr.mxu0 0.0
    %102 = vmatpush1.msra.mxu0 0.0
    %103 = vmatprep.subr.mxu0 0.0
    %104 = vmatpush1.msra.mxu0 0.0
    %105 = vmatprep.subr.mxu0 0.0
    %106 = vmatpush1.msra.mxu0 0.0
    %107 = vmatprep.subr.mxu0 0.0
    %108 = vmatpush1.msra.mxu0 0.0
    %109 = vmatprep.subr.mxu0 0.0
    %110 = vmatpush1.msra.mxu0 0.0
    %111 = vmatprep.subr.mxu0 0.0
    %112 = vmatpush1.msra.mxu0 0.0
    %113 = vmatprep.subr.mxu0 0.0
    %114 = vmatpush1.msra.mxu0 0.0
    %115 = vmatprep.subr.mxu0 0.0
    %116 = vmatpush1.msra.mxu0 0.0
    %117 = vmatprep.subr.mxu0 0.0
    %118 = vmatpush1.msra.mxu0 0.0
    %119 = vmatprep.subr.mxu0 0.0
    %120 = vmatpush1.msra.mxu0 0.0
    %121 = vmatprep.subr.mxu0 0.0
    %122 = vmatpush1.msra.mxu0 0.0
    %123 = vmatprep.subr.mxu0 0.0
    %124 = vmatpush1.msra.mxu0 0.0
    %125 = vmatprep.subr.mxu0 0.0
    %126 = vmatpush1.msra.mxu0 0.0
    %127 = vmatprep.subr.mxu0 0.0
    %128 = vmatpush1.msra.mxu0 0.0
    %129 = vmatprep.subr.mxu0 0.0
    %130 = vmatpush1.msra.mxu0 0.0
    %131 = vmatprep.subr.mxu0 0.0
    %132 = vmatpush1.msra.mxu0 0.0
    %133 = vmatprep.subr.mxu0 0.0
    %134 = vmatpush1.msra.mxu0 0.0
    %135 = vmatprep.subr.mxu0 0.0
    %136 = vmatpush1.msra.mxu0 0.0
    %137 = vmatprep.mubr.f32.mxu0 0.0
    %138 = vmatmul.mubr.f32.gmra.mrb[0].mxu0 %v50
    %v139 = vpop.f32.mrb[0].mxu0
    %v140 = vadd.f32 %v47, %v139
    %v141 = vpop.f32.mrb[0].mxu0
    %142 = vmatprep.mubr.f32.mxu0 0.0
    %143 = vmatmul.mubr.f32.gmra.mrb[0].mxu0 %v53
    %v144 = vpop.f32.mrb[0].mxu0
    %v145 = vadd.f32 %v47, %v144
    %v146 = vpop.f32.mrb[0].mxu0
    %147 = vmatprep.mubr.f32.mxu0 0.0
    %148 = vmatmul.mubr.f32.gmra.mrb[0].mxu0 %v56
    %v149 = vpop.f32.mrb[0].mxu0
    %v150 = vadd.f32 %v47, %v149
    %v151 = vpop.f32.mrb[0].mxu0
    %152 = vmatprep.mubr.f32.mxu0 0.0
    %153 = vmatmul.mubr.f32.gmra.mrb[0].mxu0 %v59
    %v154 = vpop.f32.mrb[0].mxu0
    %v155 = vadd.f32 %v47, %v154
    %v156 = vpop.f32.mrb[0].mxu0
    %157 = vmatprep.mubr.f32.mxu0 0.0
    %158 = vmatmul.mubr.f32.gmra.mrb[0].mxu0 %v62
    %v159 = vpop.f32.mrb[0].mxu0
    %v160 = vadd.f32 %v47, %v159
    %v161 = vpop.f32.mrb[0].mxu0
    %162 = vmatprep.mubr.f32.mxu0 0.0
    %163 = vmatmul.mubr.f32.gmra.mrb[0].mxu0 %v65
    %v164 = vpop.f32.mrb[0].mxu0
    %v165 = vadd.f32 %v47, %v164
    %v166 = vpop.f32.mrb[0].mxu0
    %167 = vmatprep.mubr.f32.mxu0 0.0
    %168 = vmatmul.mubr.f32.gmra.mrb[0].mxu0 %v68
    %v169 = vpop.f32.mrb[0].mxu0
    %v170 = vadd.f32 %v47, %v169
    %v171 = vpop.f32.mrb[0].mxu0
    %172 = vmatprep.mubr.f32.mxu0 0.0
    %173 = vmatmul.mubr.f32.gmra.mrb[0].mxu0 %v71
    %v174 = vpop.f32.mrb[0].mxu0
    %v175 = vadd.f32 %v47, %v174
    %v176 = vpop.f32.mrb[0].mxu0
    %177 = vdwg.mxu0
    %v178 = vand.u32 2147483647, %v140
    %v179 = vand.u32 2147483647, %v145
    %v180 = vand.u32 2147483647, %v150
    %v181 = vand.u32 2147483647, %v155
    %v182 = vand.u32 2147483647, %v160
    %v183 = vand.u32 2147483647, %v165
    %v184 = vand.u32 2147483647, %v170
    %v185 = vand.u32 2147483647, %v175
    %vm186 = vcmask 261120
    %v187 = vsel %vm186, %v178, 0.0
    %188 = vadd.xlane.f32.xlu0 %v187
    %v189 = vpop.xlane.xlu0 %188
    %v190 = vsel %vm186, %v179, 0.0
    %191 = vadd.xlane.f32.xlu0 %v190
    %v192 = vpop.xlane.xlu0 %191
    %v193 = vsel %vm186, %v180, 0.0
    %194 = vadd.xlane.f32.xlu0 %v193
    %v195 = vpop.xlane.xlu0 %194
    %v196 = vsel %vm186, %v181, 0.0
    %197 = vadd.xlane.f32.xlu0 %v196
    %v198 = vpop.xlane.xlu0 %197
    %v199 = vsel %vm186, %v182, 0.0
    %200 = vadd.xlane.f32.xlu0 %v199
    %v201 = vpop.xlane.xlu0 %200
    %v202 = vsel %vm186, %v183, 0.0
    %203 = vadd.xlane.f32.xlu0 %v202
    %v204 = vpop.xlane.xlu0 %203
    %v205 = vsel %vm186, %v184, 0.0
    %206 = vadd.xlane.f32.xlu0 %v205
    %v207 = vpop.xlane.xlu0 %206
    %v208 = vsel %vm186, %v185, 0.0
    %209 = vadd.xlane.f32.xlu0 %v208
    %v210 = vpop.xlane.xlu0 %209
    %v211 = vrcp.pop 32.0
    %v212 = vmul.f32 %v189, %v211
    %v213 = vmul.f32 %v192, %v211
    %v214 = vmul.f32 %v195, %v211
    %v215 = vmul.f32 %v198, %v211
    %v216 = vmul.f32 %v201, %v211
    %v217 = vmul.f32 %v204, %v211
    %v218 = vmul.f32 %v207, %v211
    %v219 = vmul.f32 %v210, %v211
    %v220 = vmax.f32 %v212, 1e-08
    %v221 = vmax.f32 %v213, 1e-08
    %v222 = vmax.f32 %v214, 1e-08
    %v223 = vmax.f32 %v215, 1e-08
    %v224 = vmax.f32 %v216, 1e-08
    %v225 = vmax.f32 %v217, 1e-08
    %v226 = vmax.f32 %v218, 1e-08
    %v227 = vmax.f32 %v219, 1e-08
    %v228 = vrcp.pop %v220
    %v229 = vmul.f32 %v140, %v228
    %v230 = vrcp.pop %v221
    %v231 = vmul.f32 %v145, %v230
    %v232 = vrcp.pop %v222
    %v233 = vmul.f32 %v150, %v232
    %v234 = vrcp.pop %v223
    %v235 = vmul.f32 %v155, %v234
    %v236 = vrcp.pop %v224
    %v237 = vmul.f32 %v160, %v236
    %v238 = vrcp.pop %v225
    %v239 = vmul.f32 %v165, %v238
    %v240 = vrcp.pop %v226
    %v241 = vmul.f32 %v170, %v240
    %v242 = vrcp.pop %v227
    %v243 = vmul.f32 %v175, %v242
    %v244 = vld [vmem:[#allocation5 + $0xf0] sm:$0xff]
    %v245 = vld [vmem:[#allocation5 + $0x108] sm:$0xff]
    %v246 = vld [vmem:[#allocation5 + $0x120] sm:$0xff]
    %v247 = vld [vmem:[#allocation5 + $0x138] sm:$0xff]
    %v248 = vld [vmem:[#allocation5 + $0x5a0] ss:$0 sm:$0xff]
    %v250 = vsel %vm186, %v229, 0
    %v253 = vsel %vm186, %v231, 0
    %v256 = vsel %vm186, %v233, 0
    %v259 = vsel %vm186, %v235, 0
    %v262 = vsel %vm186, %v237, 0
    %v265 = vsel %vm186, %v239, 0
    %v268 = vsel %vm186, %v241, 0
    %v271 = vsel %vm186, %v243, 0
    %273 = vmatprep.subr.mxu0 0.0
    %274 = vmatpush1.msra.mxu0 %v244
    %275 = vmatprep.subr.mxu0 0.0
    %276 = vmatpush1.msra.mxu0 %v245
    %277 = vmatprep.subr.mxu0 0.0
    %278 = vmatpush1.msra.mxu0 %v246
    %279 = vmatprep.subr.mxu0 0.0
    %280 = vmatpush1.msra.mxu0 %v247
    %281 = vmatprep.subr.mxu0 0.0
    %282 = vmatpush1.msra.mxu0 0.0
    %283 = vmatprep.subr.mxu0 0.0
    %284 = vmatpush1.msra.mxu0 0.0
    %285 = vmatprep.subr.mxu0 0.0
    %286 = vmatpush1.msra.mxu0 0.0
    %287 = vmatprep.subr.mxu0 0.0
    %288 = vmatpush1.msra.mxu0 0.0
    %289 = vmatprep.subr.mxu0 0.0
    %290 = vmatpush1.msra.mxu0 0.0
    %291 = vmatprep.subr.mxu0 0.0
    %292 = vmatpush1.msra.mxu0 0.0
    %293 = vmatprep.subr.mxu0 0.0
    %294 = vmatpush1.msra.mxu0 0.0
    %295 = vmatprep.subr.mxu0 0.0
    %296 = vmatpush1.msra.mxu0 0.0
    %297 = vmatprep.subr.mxu0 0.0
    %298 = vmatpush1.msra.mxu0 0.0
    %299 = vmatprep.subr.mxu0 0.0
    %300 = vmatpush1.msra.mxu0 0.0
    %301 = vmatprep.subr.mxu0 0.0
    %302 = vmatpush1.msra.mxu0 0.0
    %303 = vmatprep.subr.mxu0 0.0
    %304 = vmatpush1.msra.mxu0 0.0
    %305 = vmatprep.subr.mxu0 0.0
    %306 = vmatpush1.msra.mxu0 0.0
    %307 = vmatprep.subr.mxu0 0.0
    %308 = vmatpush1.msra.mxu0 0.0
    %309 = vmatprep.subr.mxu0 0.0
    %310 = vmatpush1.msra.mxu0 0.0
    %311 = vmatprep.subr.mxu0 0.0
    %312 = vmatpush1.msra.mxu0 0.0
    %313 = vmatprep.subr.mxu0 0.0
    %314 = vmatpush1.msra.mxu0 0.0
    %315 = vmatprep.subr.mxu0 0.0
    %316 = vmatpush1.msra.mxu0 0.0
    %317 = vmatprep.subr.mxu0 0.0
    %318 = vmatpush1.msra.mxu0 0.0
    %319 = vmatprep.subr.mxu0 0.0
    %320 = vmatpush1.msra.mxu0 0.0
    %321 = vmatprep.subr.mxu0 0.0
    %322 = vmatpush1.msra.mxu0 0.0
    %323 = vmatprep.subr.mxu0 0.0
    %324 = vmatpush1.msra.mxu0 0.0
    %325 = vmatprep.subr.mxu0 0.0
    %326 = vmatpush1.msra.mxu0 0.0
    %327 = vmatprep.subr.mxu0 0.0
    %328 = vmatpush1.msra.mxu0 0.0
    %329 = vmatprep.subr.mxu0 0.0
    %330 = vmatpush1.msra.mxu0 0.0
    %331 = vmatprep.subr.mxu0 0.0
    %332 = vmatpush1.msra.mxu0 0.0
    %333 = vmatprep.subr.mxu0 0.0
    %334 = vmatpush1.msra.mxu0 0.0
    %335 = vmatprep.subr.mxu0 0.0
    %336 = vmatpush1.msra.mxu0 0.0
    %337 = vmatprep.mubr.f32.mxu0 0.0
    %338 = vmatmul.mubr.f32.gmra.mrb[0].mxu0 %v250
    %v339 = vpop.f32.mrb[0].mxu0
    %v340 = vadd.f32 %v248, %v339
    %v341 = vpop.f32.mrb[0].mxu0
    %342 = vmatprep.mubr.f32.mxu0 0.0
    %343 = vmatmul.mubr.f32.gmra.mrb[0].mxu0 %v253
    %v344 = vpop.f32.mrb[0].mxu0
    %v345 = vadd.f32 %v248, %v344
    %v346 = vpop.f32.mrb[0].mxu0
    %347 = vmatprep.mubr.f32.mxu0 0.0
    %348 = vmatmul.mubr.f32.gmra.mrb[0].mxu0 %v256
    %v349 = vpop.f32.mrb[0].mxu0
    %v350 = vadd.f32 %v248, %v349
    %v351 = vpop.f32.mrb[0].mxu0
    %352 = vmatprep.mubr.f32.mxu0 0.0
    %353 = vmatmul.mubr.f32.gmra.mrb[0].mxu0 %v259
    %v354 = vpop.f32.mrb[0].mxu0
    %v355 = vadd.f32 %v248, %v354
    %v356 = vpop.f32.mrb[0].mxu0
    %357 = vmatprep.mubr.f32.mxu0 0.0
    %358 = vmatmul.mubr.f32.gmra.mrb[0].mxu0 %v262
    %v359 = vpop.f32.mrb[0].mxu0
    %v360 = vadd.f32 %v248, %v359
    %v361 = vpop.f32.mrb[0].mxu0
    %362 = vmatprep.mubr.f32.mxu0 0.0
    %363 = vmatmul.mubr.f32.gmra.mrb[0].mxu0 %v265
    %v364 = vpop.f32.mrb[0].mxu0
    %v365 = vadd.f32 %v248, %v364
    %v366 = vpop.f32.mrb[0].mxu0
    %367 = vmatprep.mubr.f32.mxu0 0.0
    %368 = vmatmul.mubr.f32.gmra.mrb[0].mxu0 %v268
    %v369 = vpop.f32.mrb[0].mxu0
    %v370 = vadd.f32 %v248, %v369
    %v371 = vpop.f32.mrb[0].mxu0
    %372 = vmatprep.mubr.f32.mxu0 0.0
    %373 = vmatmul.mubr.f32.gmra.mrb[0].mxu0 %v271
    %v374 = vpop.f32.mrb[0].mxu0
    %v375 = vadd.f32 %v248, %v374
    %v376 = vpop.f32.mrb[0].mxu0
    %377 = vdwg.mxu0
    %v378 = vmax.f32 %v340, 0.0
    %v379 = vmax.f32 %v345, 0.0
    %v380 = vmax.f32 %v350, 0.0
    %v381 = vmax.f32 %v355, 0.0
    %v382 = vmax.f32 %v360, 0.0
    %v383 = vmax.f32 %v365, 0.0
    %v384 = vmax.f32 %v370, 0.0
    %v385 = vmax.f32 %v375, 0.0
    %v386 = vld [vmem:[#allocation5 + $0x78] sm:$0xff]
    %v387 = vld [vmem:[#allocation5 + $0x90] sm:$0xff]
    %v388 = vld [vmem:[#allocation5 + $0xa8] sm:$0xff]
    %v389 = vld [vmem:[#allocation5 + $0xc0] sm:$0xff]
    %v390 = vld [vmem:[#allocation5 + $0xd8] sm:$0xff]
    %v391 = vld [vmem:[#allocation5 + $0x588] ss:$0 sm:$0xff]
    %392 = vmatprep.subr.mxu0 0.0
    %393 = vmatpush1.msra.mxu0 %v386
    %394 = vmatprep.subr.mxu0 0.0
    %395 = vmatpush1.msra.mxu0 %v387
    %396 = vmatprep.subr.mxu0 0.0
    %397 = vmatpush1.msra.mxu0 %v388
    %398 = vmatprep.subr.mxu0 0.0
    %399 = vmatpush1.msra.mxu0 %v389
    %400 = vmatprep.subr.mxu0 0.0
    %401 = vmatpush1.msra.mxu0 %v390
    %402 = vmatprep.subr.mxu0 0.0
    %403 = vmatpush1.msra.mxu0 0.0
    %404 = vmatprep.subr.mxu0 0.0
    %405 = vmatpush1.msra.mxu0 0.0
    %406 = vmatprep.subr.mxu0 0.0
    %407 = vmatpush1.msra.mxu0 0.0
    %408 = vmatprep.subr.mxu0 0.0
    %409 = vmatpush1.msra.mxu0 0.0
    %410 = vmatprep.subr.mxu0 0.0
    %411 = vmatpush1.msra.mxu0 0.0
    %412 = vmatprep.subr.mxu0 0.0
    %413 = vmatpush1.msra.mxu0 0.0
    %414 = vmatprep.subr.mxu0 0.0
    %415 = vmatpush1.msra.mxu0 0.0
    %416 = vmatprep.subr.mxu0 0.0
    %417 = vmatpush1.msra.mxu0 0.0
    %418 = vmatprep.subr.mxu0 0.0
    %419 = vmatpush1.msra.mxu0 0.0
    %420 = vmatprep.subr.mxu0 0.0
    %421 = vmatpush1.msra.mxu0 0.0
    %422 = vmatprep.subr.mxu0 0.0
    %423 = vmatpush1.msra.mxu0 0.0
    %424 = vmatprep.subr.mxu0 0.0
    %425 = vmatpush1.msra.mxu0 0.0
    %426 = vmatprep.subr.mxu0 0.0
    %427 = vmatpush1.msra.mxu0 0.0
    %428 = vmatprep.subr.mxu0 0.0
    %429 = vmatpush1.msra.mxu0 0.0
    %430 = vmatprep.subr.mxu0 0.0
    %431 = vmatpush1.msra.mxu0 0.0
    %432 = vmatprep.subr.mxu0 0.0
    %433 = vmatpush1.msra.mxu0 0.0
    %434 = vmatprep.subr.mxu0 0.0
    %435 = vmatpush1.msra.mxu0 0.0
    %436 = vmatprep.subr.mxu0 0.0
    %437 = vmatpush1.msra.mxu0 0.0
    %438 = vmatprep.subr.mxu0 0.0
    %439 = vmatpush1.msra.mxu0 0.0
    %440 = vmatprep.subr.mxu0 0.0
    %441 = vmatpush1.msra.mxu0 0.0
    %442 = vmatprep.subr.mxu0 0.0
    %443 = vmatpush1.msra.mxu0 0.0
    %444 = vmatprep.subr.mxu0 0.0
    %445 = vmatpush1.msra.mxu0 0.0
    %446 = vmatprep.subr.mxu0 0.0
    %447 = vmatpush1.msra.mxu0 0.0
    %448 = vmatprep.subr.mxu0 0.0
    %449 = vmatpush1.msra.mxu0 0.0
    %450 = vmatprep.subr.mxu0 0.0
    %451 = vmatpush1.msra.mxu0 0.0
    %452 = vmatprep.subr.mxu0 0.0
    %453 = vmatpush1.msra.mxu0 0.0
    %454 = vmatprep.subr.mxu0 0.0
    %455 = vmatpush1.msra.mxu0 0.0
    %456 = vmatprep.mubr.f32.mxu0 0.0
    %457 = vmatmul.mubr.f32.gmra.mrb[0].mxu0 %v50
    %v458 = vpop.f32.mrb[0].mxu0
    %v459 = vadd.f32 %v391, %v458
    %v460 = vpop.f32.mrb[0].mxu0
    %461 = vmatprep.mubr.f32.mxu0 0.0
    %462 = vmatmul.mubr.f32.gmra.mrb[0].mxu0 %v53
    %v463 = vpop.f32.mrb[0].mxu0
    %v464 = vadd.f32 %v391, %v463
    %v465 = vpop.f32.mrb[0].mxu0
    %466 = vmatprep.mubr.f32.mxu0 0.0
    %467 = vmatmul.mubr.f32.gmra.mrb[0].mxu0 %v56
    %v468 = vpop.f32.mrb[0].mxu0
    %v469 = vadd.f32 %v391, %v468
    %v470 = vpop.f32.mrb[0].mxu0
    %471 = vmatprep.mubr.f32.mxu0 0.0
    %472 = vmatmul.mubr.f32.gmra.mrb[0].mxu0 %v59
    %v473 = vpop.f32.mrb[0].mxu0
    %v474 = vadd.f32 %v391, %v473
    %v475 = vpop.f32.mrb[0].mxu0
    %476 = vmatprep.mubr.f32.mxu0 0.0
    %477 = vmatmul.mubr.f32.gmra.mrb[0].mxu0 %v62
    %v478 = vpop.f32.mrb[0].mxu0
    %v479 = vadd.f32 %v391, %v478
    %v480 = vpop.f32.mrb[0].mxu0
    %481 = vmatprep.mubr.f32.mxu0 0.0
    %482 = vmatmul.mubr.f32.gmra.mrb[0].mxu0 %v65
    %v483 = vpop.f32.mrb[0].mxu0
    %v484 = vadd.f32 %v391, %v483
    %v485 = vpop.f32.mrb[0].mxu0
    %486 = vmatprep.mubr.f32.mxu0 0.0
    %487 = vmatmul.mubr.f32.gmra.mrb[0].mxu0 %v68
    %v488 = vpop.f32.mrb[0].mxu0
    %v489 = vadd.f32 %v391, %v488
    %v490 = vpop.f32.mrb[0].mxu0
    %491 = vmatprep.mubr.f32.mxu0 0.0
    %492 = vmatmul.mubr.f32.gmra.mrb[0].mxu0 %v71
    %v493 = vpop.f32.mrb[0].mxu0
    %v494 = vadd.f32 %v391, %v493
    %v495 = vpop.f32.mrb[0].mxu0
    %496 = vdwg.mxu0
    %v497 = vmax.f32 %v459, 0.0
    %v498 = vmax.f32 %v464, 0.0
    %v499 = vmax.f32 %v469, 0.0
    %v500 = vmax.f32 %v474, 0.0
    %v501 = vmax.f32 %v479, 0.0
    %v502 = vmax.f32 %v484, 0.0
    %v503 = vmax.f32 %v489, 0.0
    %v504 = vmax.f32 %v494, 0.0
    %v505 = vld [vmem:[#allocation5 + $0x150] sm:$0xff]
    %v506 = vld [vmem:[#allocation5 + $0x158] sm:$0xff]
    %v507 = vld [vmem:[#allocation5 + $0x160] sm:$0xff]
    %v508 = vld [vmem:[#allocation5 + $0x168] sm:$0xff]
    %v509 = vld [vmem:[#allocation5 + $0x170] sm:$0xff]
    %v510 = vld [vmem:[#allocation5 + $0x178] sm:$0xff]
    %v511 = vld [vmem:[#allocation5 + $0x180] sm:$0xff]
    %v512 = vld [vmem:[#allocation5 + $0x188] sm:$0xff]
    %v513 = vld [vmem:[#allocation5 + $0x190] sm:$0xff]
    %v514 = vld [vmem:[#allocation5 + $0x198] sm:$0xff]
    %v515 = vld [vmem:[#allocation5 + $0x1a0] sm:$0xff]
    %v516 = vld [vmem:[#allocation5 + $0x1a8] sm:$0xff]
    %v517 = vld [vmem:[#allocation5 + $0x1b0] sm:$0xff]
    %v518 = vld [vmem:[#allocation5 + $0x1b8] sm:$0xff]
    %v519 = vld [vmem:[#allocation5 + $0x1c0] sm:$0xff]
    %v520 = vld [vmem:[#allocation5 + $0x1c8] sm:$0xff]
    %v521 = vld [vmem:[#allocation5 + $0x1d0] sm:$0xff]
    %v522 = vld [vmem:[#allocation5 + $0x1d8] sm:$0xff]
    %v523 = vld [vmem:[#allocation5 + $0x1e0] sm:$0xff]
    %v524 = vld [vmem:[#allocation5 + $0x1e8] sm:$0xff]
    %v525 = vld [vmem:[#allocation5 + $0x1f0] sm:$0xff]
    %v526 = vld [vmem:[#allocation5 + $0x1f8] sm:$0xff]
    %v527 = vld [vmem:[#allocation5 + $0x200] sm:$0xff]
    %v528 = vld [vmem:[#allocation5 + $0x208] sm:$0xff]
    %s529 = scalar_lea.vmem [#allocation5], 1464
    %v530 = vld [vmem:[%s529] ss:$8 sm:$0x7]
    %531 = vmatprep.subr.mxu0 %v518
    %532 = vmatpush1.msra.mxu0 %v517
    %533 = vmatprep.subr.mxu0 %v521
    %534 = vmatpush1.msra.mxu0 %v520
    %535 = vmatprep.subr.mxu0 %v524
    %536 = vmatpush1.msra.mxu0 %v523
    %537 = vmatprep.subr.mxu0 %v527
    %538 = vmatpush1.msra.mxu0 %v526
    %539 = vmatprep.subr.mxu0 0.0
    %540 = vmatpush1.msra.mxu0 0.0
    %541 = vmatprep.subr.mxu0 0.0
    %542 = vmatpush1.msra.mxu0 0.0
    %543 = vmatprep.subr.mxu0 0.0
    %544 = vmatpush1.msra.mxu0 0.0
    %545 = vmatprep.subr.mxu0 0.0
    %546 = vmatpush1.msra.mxu0 0.0
    %547 = vmatprep.subr.mxu0 0.0
    %548 = vmatpush1.msra.mxu0 0.0
    %549 = vmatprep.subr.mxu0 0.0
    %550 = vmatpush1.msra.mxu0 0.0
    %551 = vmatprep.subr.mxu0 0.0
    %552 = vmatpush1.msra.mxu0 0.0
    %553 = vmatprep.subr.mxu0 0.0
    %554 = vmatpush1.msra.mxu0 0.0
    %555 = vmatprep.subr.mxu0 0.0
    %556 = vmatpush1.msra.mxu0 0.0
    %557 = vmatprep.subr.mxu0 0.0
    %558 = vmatpush1.msra.mxu0 0.0
    %559 = vmatprep.subr.mxu0 0.0
    %560 = vmatpush1.msra.mxu0 0.0
    %561 = vmatprep.subr.mxu0 0.0
    %562 = vmatpush1.msra.mxu0 0.0
    %563 = vmatprep.subr.mxu0 0.0
    %564 = vmatpush1.msra.mxu0 0.0
    %565 = vmatprep.subr.mxu0 0.0
    %566 = vmatpush1.msra.mxu0 0.0
    %567 = vmatprep.subr.mxu0 0.0
    %568 = vmatpush1.msra.mxu0 0.0
    %569 = vmatprep.subr.mxu0 0.0
    %570 = vmatpush1.msra.mxu0 0.0
    %571 = vmatprep.subr.mxu0 0.0
    %572 = vmatpush1.msra.mxu0 0.0
    %573 = vmatprep.subr.mxu0 0.0
    %574 = vmatpush1.msra.mxu0 0.0
    %575 = vmatprep.subr.mxu0 0.0
    %576 = vmatpush1.msra.mxu0 0.0
    %577 = vmatprep.subr.mxu0 0.0
    %578 = vmatpush1.msra.mxu0 0.0
    %579 = vmatprep.subr.mxu0 0.0
    %580 = vmatpush1.msra.mxu0 0.0
    %581 = vmatprep.subr.mxu0 0.0
    %582 = vmatpush1.msra.mxu0 0.0
    %583 = vmatprep.subr.mxu0 0.0
    %584 = vmatpush1.msra.mxu0 0.0
    %585 = vmatprep.subr.mxu0 0.0
    %586 = vmatpush1.msra.mxu0 0.0
    %587 = vmatprep.subr.mxu0 0.0
    %588 = vmatpush1.msra.mxu0 0.0
    %589 = vmatprep.subr.mxu0 0.0
    %590 = vmatpush1.msra.mxu0 0.0
    %591 = vmatprep.subr.mxu0 0.0
    %592 = vmatpush1.msra.mxu0 0.0
    %593 = vmatprep.subr.mxu0 0.0
    %594 = vmatpush1.msra.mxu0 0.0
    %595 = vmatprep.mubr.f32.mxu0 0.0
    %596 = vmatmul.mubr.f32.gmra.mrb[0].mxu0 %v250
    %v597 = vpop.f32.mrb[0].mxu0
    %v598 = vadd.f32 0.0, %v597
    %v599 = vpop.f32.mrb[0].mxu0
    %v600 = vadd.f32 0.0, %v599
    %601 = vmatprep.mubr.f32.mxu0 0.0
    %602 = vmatmul.mubr.f32.gmra.mrb[0].mxu0 %v253
    %v603 = vpop.f32.mrb[0].mxu0
    %v604 = vadd.f32 0.0, %v603
    %v605 = vpop.f32.mrb[0].mxu0
    %v606 = vadd.f32 0.0, %v605
    %607 = vmatprep.mubr.f32.mxu0 0.0
    %608 = vmatmul.mubr.f32.gmra.mrb[0].mxu0 %v256
    %v609 = vpop.f32.mrb[0].mxu0
    %v610 = vadd.f32 0.0, %v609
    %v611 = vpop.f32.mrb[0].mxu0
    %v612 = vadd.f32 0.0, %v611
    %613 = vmatprep.mubr.f32.mxu0 0.0
    %614 = vmatmul.mubr.f32.gmra.mrb[0].mxu0 %v259
    %v615 = vpop.f32.mrb[0].mxu0
    %v616 = vadd.f32 0.0, %v615
    %v617 = vpop.f32.mrb[0].mxu0
    %v618 = vadd.f32 0.0, %v617
    %619 = vmatprep.mubr.f32.mxu0 0.0
    %620 = vmatmul.mubr.f32.gmra.mrb[0].mxu0 %v262
    %v621 = vpop.f32.mrb[0].mxu0
    %v622 = vadd.f32 0.0, %v621
    %v623 = vpop.f32.mrb[0].mxu0
    %v624 = vadd.f32 0.0, %v623
    %625 = vmatprep.mubr.f32.mxu0 0.0
    %626 = vmatmul.mubr.f32.gmra.mrb[0].mxu0 %v265
    %v627 = vpop.f32.mrb[0].mxu0
    %v628 = vadd.f32 0.0, %v627
    %v629 = vpop.f32.mrb[0].mxu0
    %v630 = vadd.f32 0.0, %v629
    %631 = vmatprep.mubr.f32.mxu0 0.0
    %632 = vmatmul.mubr.f32.gmra.mrb[0].mxu0 %v268
    %v633 = vpop.f32.mrb[0].mxu0
    %v634 = vadd.f32 0.0, %v633
    %v635 = vpop.f32.mrb[0].mxu0
    %v636 = vadd.f32 0.0, %v635
    %637 = vmatprep.mubr.f32.mxu0 0.0
    %638 = vmatmul.mubr.f32.gmra.mrb[0].mxu0 %v271
    %v639 = vpop.f32.mrb[0].mxu0
    %v640 = vadd.f32 0.0, %v639
    %v641 = vpop.f32.mrb[0].mxu0
    %v642 = vadd.f32 0.0, %v641
    %643 = vdwg.mxu0
    %644 = vmatprep.subr.mxu0 0.0
    %645 = vmatpush1.msra.mxu0 %v519
    %646 = vmatprep.subr.mxu0 0.0
    %647 = vmatpush1.msra.mxu0 %v522
    %648 = vmatprep.subr.mxu0 0.0
    %649 = vmatpush1.msra.mxu0 %v525
    %650 = vmatprep.subr.mxu0 0.0
    %651 = vmatpush1.msra.mxu0 %v528
    %652 = vmatprep.subr.mxu0 0.0
    %653 = vmatpush1.msra.mxu0 0.0
    %654 = vmatprep.subr.mxu0 0.0
    %655 = vmatpush1.msra.mxu0 0.0
    %656 = vmatprep.subr.mxu0 0.0
    %657 = vmatpush1.msra.mxu0 0.0
    %658 = vmatprep.subr.mxu0 0.0
    %659 = vmatpush1.msra.mxu0 0.0
    %660 = vmatprep.subr.mxu0 0.0
    %661 = vmatpush1.msra.mxu0 0.0
    %662 = vmatprep.subr.mxu0 0.0
    %663 = vmatpush1.msra.mxu0 0.0
    %664 = vmatprep.subr.mxu0 0.0
    %665 = vmatpush1.msra.mxu0 0.0
    %666 = vmatprep.subr.mxu0 0.0
    %667 = vmatpush1.msra.mxu0 0.0
    %668 = vmatprep.subr.mxu0 0.0
    %669 = vmatpush1.msra.mxu0 0.0
    %670 = vmatprep.subr.mxu0 0.0
    %671 = vmatpush1.msra.mxu0 0.0
    %672 = vmatprep.subr.mxu0 0.0
    %673 = vmatpush1.msra.mxu0 0.0
    %674 = vmatprep.subr.mxu0 0.0
    %675 = vmatpush1.msra.mxu0 0.0
    %676 = vmatprep.subr.mxu0 0.0
    %677 = vmatpush1.msra.mxu0 0.0
    %678 = vmatprep.subr.mxu0 0.0
    %679 = vmatpush1.msra.mxu0 0.0
    %680 = vmatprep.subr.mxu0 0.0
    %681 = vmatpush1.msra.mxu0 0.0
    %682 = vmatprep.subr.mxu0 0.0
    %683 = vmatpush1.msra.mxu0 0.0
    %684 = vmatprep.subr.mxu0 0.0
    %685 = vmatpush1.msra.mxu0 0.0
    %686 = vmatprep.subr.mxu0 0.0
    %687 = vmatpush1.msra.mxu0 0.0
    %688 = vmatprep.subr.mxu0 0.0
    %689 = vmatpush1.msra.mxu0 0.0
    %690 = vmatprep.subr.mxu0 0.0
    %691 = vmatpush1.msra.mxu0 0.0
    %692 = vmatprep.subr.mxu0 0.0
    %693 = vmatpush1.msra.mxu0 0.0
    %694 = vmatprep.subr.mxu0 0.0
    %695 = vmatpush1.msra.mxu0 0.0
    %696 = vmatprep.subr.mxu0 0.0
    %697 = vmatpush1.msra.mxu0 0.0
    %698 = vmatprep.subr.mxu0 0.0
    %699 = vmatpush1.msra.mxu0 0.0
    %700 = vmatprep.subr.mxu0 0.0
    %701 = vmatpush1.msra.mxu0 0.0
    %702 = vmatprep.subr.mxu0 0.0
    %703 = vmatpush1.msra.mxu0 0.0
    %704 = vmatprep.subr.mxu0 0.0
    %705 = vmatpush1.msra.mxu0 0.0
    %706 = vmatprep.subr.mxu0 0.0
    %707 = vmatpush1.msra.mxu0 0.0
    %708 = vmatprep.mubr.f32.mxu0 0.0
    %709 = vmatmul.mubr.f32.gmra.mrb[0].mxu0 %v250
    %v710 = vpop.f32.mrb[0].mxu0
    %v711 = vadd.f32 0.0, %v710
    %v712 = vpop.f32.mrb[0].mxu0
    %713 = vmatprep.mubr.f32.mxu0 0.0
    %714 = vmatmul.mubr.f32.gmra.mrb[0].mxu0 %v253
    %v715 = vpop.f32.mrb[0].mxu0
    %v716 = vadd.f32 0.0, %v715
    %v717 = vpop.f32.mrb[0].mxu0
    %718 = vmatprep.mubr.f32.mxu0 0.0
    %719 = vmatmul.mubr.f32.gmra.mrb[0].mxu0 %v256
    %v720 = vpop.f32.mrb[0].mxu0
    %v721 = vadd.f32 0.0, %v720
    %v722 = vpop.f32.mrb[0].mxu0
    %723 = vmatprep.mubr.f32.mxu0 0.0
    %724 = vmatmul.mubr.f32.gmra.mrb[0].mxu0 %v259
    %v725 = vpop.f32.mrb[0].mxu0
    %v726 = vadd.f32 0.0, %v725
    %v727 = vpop.f32.mrb[0].mxu0
    %728 = vmatprep.mubr.f32.mxu0 0.0
    %729 = vmatmul.mubr.f32.gmra.mrb[0].mxu0 %v262
    %v730 = vpop.f32.mrb[0].mxu0
    %v731 = vadd.f32 0.0, %v730
    %v732 = vpop.f32.mrb[0].mxu0
    %733 = vmatprep.mubr.f32.mxu0 0.0
    %734 = vmatmul.mubr.f32.gmra.mrb[0].mxu0 %v265
    %v735 = vpop.f32.mrb[0].mxu0
    %v736 = vadd.f32 0.0, %v735
    %v737 = vpop.f32.mrb[0].mxu0
    %738 = vmatprep.mubr.f32.mxu0 0.0
    %739 = vmatmul.mubr.f32.gmra.mrb[0].mxu0 %v268
    %v740 = vpop.f32.mrb[0].mxu0
    %v741 = vadd.f32 0.0, %v740
    %v742 = vpop.f32.mrb[0].mxu0
    %743 = vmatprep.mubr.f32.mxu0 0.0
    %744 = vmatmul.mubr.f32.gmra.mrb[0].mxu0 %v271
    %v745 = vpop.f32.mrb[0].mxu0
    %v746 = vadd.f32 0.0, %v745
    %v747 = vpop.f32.mrb[0].mxu0
    %748 = vdwg.mxu0
    %v750 = vsel %vm186, %v497, 0
    %v753 = vsel %vm186, %v498, 0
    %v756 = vsel %vm186, %v499, 0
    %v759 = vsel %vm186, %v500, 0
    %v762 = vsel %vm186, %v501, 0
    %v765 = vsel %vm186, %v502, 0
    %v768 = vsel %vm186, %v503, 0
    %v771 = vsel %vm186, %v504, 0
    %773 = vmatprep.subr.mxu0 %v506
    %774 = vmatpush1.msra.mxu0 %v505
    %775 = vmatprep.subr.mxu0 %v509
    %776 = vmatpush1.msra.mxu0 %v508
    %777 = vmatprep.subr.mxu0 %v512
    %778 = vmatpush1.msra.mxu0 %v511
    %779 = vmatprep.subr.mxu0 %v515
    %780 = vmatpush1.msra.mxu0 %v514
    %781 = vmatprep.subr.mxu0 0.0
    %782 = vmatpush1.msra.mxu0 0.0
    %783 = vmatprep.subr.mxu0 0.0
    %784 = vmatpush1.msra.mxu0 0.0
    %785 = vmatprep.subr.mxu0 0.0
    %786 = vmatpush1.msra.mxu0 0.0
    %787 = vmatprep.subr.mxu0 0.0
    %788 = vmatpush1.msra.mxu0 0.0
    %789 = vmatprep.subr.mxu0 0.0
    %790 = vmatpush1.msra.mxu0 0.0
    %791 = vmatprep.subr.mxu0 0.0
    %792 = vmatpush1.msra.mxu0 0.0
    %793 = vmatprep.subr.mxu0 0.0
    %794 = vmatpush1.msra.mxu0 0.0
    %795 = vmatprep.subr.mxu0 0.0
    %796 = vmatpush1.msra.mxu0 0.0
    %797 = vmatprep.subr.mxu0 0.0
    %798 = vmatpush1.msra.mxu0 0.0
    %799 = vmatprep.subr.mxu0 0.0
    %800 = vmatpush1.msra.mxu0 0.0
    %801 = vmatprep.subr.mxu0 0.0
    %802 = vmatpush1.msra.mxu0 0.0
    %803 = vmatprep.subr.mxu0 0.0
    %804 = vmatpush1.msra.mxu0 0.0
    %805 = vmatprep.subr.mxu0 0.0
    %806 = vmatpush1.msra.mxu0 0.0
    %807 = vmatprep.subr.mxu0 0.0
    %808 = vmatpush1.msra.mxu0 0.0
    %809 = vmatprep.subr.mxu0 0.0
    %810 = vmatpush1.msra.mxu0 0.0
    %811 = vmatprep.subr.mxu0 0.0
    %812 = vmatpush1.msra.mxu0 0.0
    %813 = vmatprep.subr.mxu0 0.0
    %814 = vmatpush1.msra.mxu0 0.0
    %815 = vmatprep.subr.mxu0 0.0
    %816 = vmatpush1.msra.mxu0 0.0
    %817 = vmatprep.subr.mxu0 0.0
    %818 = vmatpush1.msra.mxu0 0.0
    %819 = vmatprep.subr.mxu0 0.0
    %820 = vmatpush1.msra.mxu0 0.0
    %821 = vmatprep.subr.mxu0 0.0
    %822 = vmatpush1.msra.mxu0 0.0
    %823 = vmatprep.subr.mxu0 0.0
    %824 = vmatpush1.msra.mxu0 0.0
    %825 = vmatprep.subr.mxu0 0.0
    %826 = vmatpush1.msra.mxu0 0.0
    %827 = vmatprep.subr.mxu0 0.0
    %828 = vmatpush1.msra.mxu0 0.0
    %829 = vmatprep.subr.mxu0 0.0
    %830 = vmatpush1.msra.mxu0 0.0
    %831 = vmatprep.subr.mxu0 0.0
    %832 = vmatpush1.msra.mxu0 0.0
    %833 = vmatprep.subr.mxu0 0.0
    %834 = vmatpush1.msra.mxu0 0.0
    %835 = vmatprep.subr.mxu0 0.0
    %836 = vmatpush1.msra.mxu0 0.0
    %837 = vmatprep.mubr.f32.mxu0 0.0
    %838 = vmatmul.mubr.f32.gmra.mrb[0].mxu0 %v750
    %v839 = vpop.f32.mrb[0].mxu0
    %v840 = vadd.f32 %v598, %v839
    %v841 = vpop.f32.mrb[0].mxu0
    %v842 = vadd.f32 %v600, %v841
    %843 = vmatprep.mubr.f32.mxu0 0.0
    %844 = vmatmul.mubr.f32.gmra.mrb[0].mxu0 %v753
    %v845 = vpop.f32.mrb[0].mxu0
    %v846 = vadd.f32 %v604, %v845
    %v847 = vpop.f32.mrb[0].mxu0
    %v848 = vadd.f32 %v606, %v847
    %849 = vmatprep.mubr.f32.mxu0 0.0
    %850 = vmatmul.mubr.f32.gmra.mrb[0].mxu0 %v756
    %v851 = vpop.f32.mrb[0].mxu0
    %v852 = vadd.f32 %v610, %v851
    %v853 = vpop.f32.mrb[0].mxu0
    %v854 = vadd.f32 %v612, %v853
    %855 = vmatprep.mubr.f32.mxu0 0.0
    %856 = vmatmul.mubr.f32.gmra.mrb[0].mxu0 %v759
    %v857 = vpop.f32.mrb[0].mxu0
    %v858 = vadd.f32 %v616, %v857
    %v859 = vpop.f32.mrb[0].mxu0
    %v860 = vadd.f32 %v618, %v859
    %861 = vmatprep.mubr.f32.mxu0 0.0
    %862 = vmatmul.mubr.f32.gmra.mrb[0].mxu0 %v762
    %v863 = vpop.f32.mrb[0].mxu0
    %v864 = vadd.f32 %v622, %v863
    %v865 = vpop.f32.mrb[0].mxu0
    %v866 = vadd.f32 %v624, %v865
    %867 = vmatprep.mubr.f32.mxu0 0.0
    %868 = vmatmul.mubr.f32.gmra.mrb[0].mxu0 %v765
    %v869 = vpop.f32.mrb[0].mxu0
    %v870 = vadd.f32 %v628, %v869
    %v871 = vpop.f32.mrb[0].mxu0
    %v872 = vadd.f32 %v630, %v871
    %873 = vmatprep.mubr.f32.mxu0 0.0
    %874 = vmatmul.mubr.f32.gmra.mrb[0].mxu0 %v768
    %v875 = vpop.f32.mrb[0].mxu0
    %v876 = vadd.f32 %v634, %v875
    %v877 = vpop.f32.mrb[0].mxu0
    %v878 = vadd.f32 %v636, %v877
    %879 = vmatprep.mubr.f32.mxu0 0.0
    %880 = vmatmul.mubr.f32.gmra.mrb[0].mxu0 %v771
    %v881 = vpop.f32.mrb[0].mxu0
    %v882 = vadd.f32 %v640, %v881
    %v883 = vpop.f32.mrb[0].mxu0
    %v884 = vadd.f32 %v642, %v883
    %885 = vdwg.mxu0
    %886 = vmatprep.subr.mxu0 0.0
    %887 = vmatpush1.msra.mxu0 %v507
    %888 = vmatprep.subr.mxu0 0.0
    %889 = vmatpush1.msra.mxu0 %v510
    %890 = vmatprep.subr.mxu0 0.0
    %891 = vmatpush1.msra.mxu0 %v513
    %892 = vmatprep.subr.mxu0 0.0
    %893 = vmatpush1.msra.mxu0 %v516
    %894 = vmatprep.subr.mxu0 0.0
    %895 = vmatpush1.msra.mxu0 0.0
    %896 = vmatprep.subr.mxu0 0.0
    %897 = vmatpush1.msra.mxu0 0.0
    %898 = vmatprep.subr.mxu0 0.0
    %899 = vmatpush1.msra.mxu0 0.0
    %900 = vmatprep.subr.mxu0 0.0
    %901 = vmatpush1.msra.mxu0 0.0
    %902 = vmatprep.subr.mxu0 0.0
    %903 = vmatpush1.msra.mxu0 0.0
    %904 = vmatprep.subr.mxu0 0.0
    %905 = vmatpush1.msra.mxu0 0.0
    %906 = vmatprep.subr.mxu0 0.0
    %907 = vmatpush1.msra.mxu0 0.0
    %908 = vmatprep.subr.mxu0 0.0
    %909 = vmatpush1.msra.mxu0 0.0
    %910 = vmatprep.subr.mxu0 0.0
    %911 = vmatpush1.msra.mxu0 0.0
    %912 = vmatprep.subr.mxu0 0.0
    %913 = vmatpush1.msra.mxu0 0.0
    %914 = vmatprep.subr.mxu0 0.0
    %915 = vmatpush1.msra.mxu0 0.0
    %916 = vmatprep.subr.mxu0 0.0
    %917 = vmatpush1.msra.mxu0 0.0
    %918 = vmatprep.subr.mxu0 0.0
    %919 = vmatpush1.msra.mxu0 0.0
    %920 = vmatprep.subr.mxu0 0.0
    %921 = vmatpush1.msra.mxu0 0.0
    %922 = vmatprep.subr.mxu0 0.0
    %923 = vmatpush1.msra.mxu0 0.0
    %924 = vmatprep.subr.mxu0 0.0
    %925 = vmatpush1.msra.mxu0 0.0
    %926 = vmatprep.subr.mxu0 0.0
    %927 = vmatpush1.msra.mxu0 0.0
    %928 = vmatprep.subr.mxu0 0.0
    %929 = vmatpush1.msra.mxu0 0.0
    %930 = vmatprep.subr.mxu0 0.0
    %931 = vmatpush1.msra.mxu0 0.0
    %932 = vmatprep.subr.mxu0 0.0
    %933 = vmatpush1.msra.mxu0 0.0
    %934 = vmatprep.subr.mxu0 0.0
    %935 = vmatpush1.msra.mxu0 0.0
    %936 = vmatprep.subr.mxu0 0.0
    %937 = vmatpush1.msra.mxu0 0.0
    %938 = vmatprep.subr.mxu0 0.0
    %939 = vmatpush1.msra.mxu0 0.0
    %940 = vmatprep.subr.mxu0 0.0
    %941 = vmatpush1.msra.mxu0 0.0
    %942 = vmatprep.subr.mxu0 0.0
    %943 = vmatpush1.msra.mxu0 0.0
    %944 = vmatprep.subr.mxu0 0.0
    %945 = vmatpush1.msra.mxu0 0.0
    %946 = vmatprep.subr.mxu0 0.0
    %947 = vmatpush1.msra.mxu0 0.0
    %948 = vmatprep.subr.mxu0 0.0
    %949 = vmatpush1.msra.mxu0 0.0
    %950 = vmatprep.mubr.f32.mxu0 0.0
    %951 = vmatmul.mubr.f32.gmra.mrb[0].mxu0 %v750
    %v952 = vpop.f32.mrb[0].mxu0
    %v953 = vadd.f32 %v711, %v952
    %v954 = vpop.f32.mrb[0].mxu0
    %955 = vmatprep.mubr.f32.mxu0 0.0
    %956 = vmatmul.mubr.f32.gmra.mrb[0].mxu0 %v753
    %v957 = vpop.f32.mrb[0].mxu0
    %v958 = vadd.f32 %v716, %v957
    %v959 = vpop.f32.mrb[0].mxu0
    %960 = vmatprep.mubr.f32.mxu0 0.0
    %961 = vmatmul.mubr.f32.gmra.mrb[0].mxu0 %v756
    %v962 = vpop.f32.mrb[0].mxu0
    %v963 = vadd.f32 %v721, %v962
    %v964 = vpop.f32.mrb[0].mxu0
    %965 = vmatprep.mubr.f32.mxu0 0.0
    %966 = vmatmul.mubr.f32.gmra.mrb[0].mxu0 %v759
    %v967 = vpop.f32.mrb[0].mxu0
    %v968 = vadd.f32 %v726, %v967
    %v969 = vpop.f32.mrb[0].mxu0
    %970 = vmatprep.mubr.f32.mxu0 0.0
    %971 = vmatmul.mubr.f32.gmra.mrb[0].mxu0 %v762
    %v972 = vpop.f32.mrb[0].mxu0
    %v973 = vadd.f32 %v731, %v972
    %v974 = vpop.f32.mrb[0].mxu0
    %975 = vmatprep.mubr.f32.mxu0 0.0
    %976 = vmatmul.mubr.f32.gmra.mrb[0].mxu0 %v765
    %v977 = vpop.f32.mrb[0].mxu0
    %v978 = vadd.f32 %v736, %v977
    %v979 = vpop.f32.mrb[0].mxu0
    %980 = vmatprep.mubr.f32.mxu0 0.0
    %981 = vmatmul.mubr.f32.gmra.mrb[0].mxu0 %v768
    %v982 = vpop.f32.mrb[0].mxu0
    %v983 = vadd.f32 %v741, %v982
    %v984 = vpop.f32.mrb[0].mxu0
    %985 = vmatprep.mubr.f32.mxu0 0.0
    %986 = vmatmul.mubr.f32.gmra.mrb[0].mxu0 %v771
    %v987 = vpop.f32.mrb[0].mxu0
    %v988 = vadd.f32 %v746, %v987
    %v989 = vpop.f32.mrb[0].mxu0
    %990 = vdwg.mxu0
    %v992 = vlaneseq
    %v993 = vshrl.u32 %v992, 7
    %v994 = vsub.s32 0, %v993
    %v995 = vrot.slane %v530, %v994
    %v996 = vlaneseq
    %v997 = vshrl.u32 %v996, 7
    %v998 = vsub.s32 1, %v997
    %v999 = vrot.slane %v530, %v998
    %v1000 = vlaneseq
    %v1001 = vshrl.u32 %v1000, 7
    %v1002 = vsub.s32 2, %v1001
    %v1003 = vrot.slane %v530, %v1002
    %v1007 = vadd.f32 %v840, %v995
    %v1008 = vadd.f32 %v842, %v999
    %v1009 = vadd.f32 %v953, %v1003
    %v1010 = vadd.f32 %v846, %v995
    %v1011 = vadd.f32 %v848, %v999
    %v1012 = vadd.f32 %v958, %v1003
    %v1013 = vadd.f32 %v852, %v995
    %v1014 = vadd.f32 %v854, %v999
    %v1015 = vadd.f32 %v963, %v1003
    %v1016 = vadd.f32 %v858, %v995
    %v1017 = vadd.f32 %v860, %v999
    %v1018 = vadd.f32 %v968, %v1003
    %v1019 = vadd.f32 %v864, %v995
    %v1020 = vadd.f32 %v866, %v999
    %v1021 = vadd.f32 %v973, %v1003
    %v1022 = vadd.f32 %v870, %v995
    %v1023 = vadd.f32 %v872, %v999
    %v1024 = vadd.f32 %v978, %v1003
    %v1025 = vadd.f32 %v876, %v995
    %v1026 = vadd.f32 %v878, %v999
    %v1027 = vadd.f32 %v983, %v1003
    %v1028 = vadd.f32 %v882, %v995
    %v1029 = vadd.f32 %v884, %v999
    %v1030 = vadd.f32 %v988, %v1003
    %1031 = vst [vmem:[#allocation2] sm:$0xff] %v1007
    %1032 = vst [vmem:[#allocation2 + $0x8] sm:$0xff] %v1008
    %1033 = vst [vmem:[#allocation2 + $0x10] sm:$0xff] %v1009
    %1034 = vst [vmem:[#allocation2 + $0x18] sm:$0xff] %v1010
    %1035 = vst [vmem:[#allocation2 + $0x20] sm:$0xff] %v1011
    %1036 = vst [vmem:[#allocation2 + $0x28] sm:$0xff] %v1012
    %1037 = vst [vmem:[#allocation2 + $0x30] sm:$0xff] %v1013
    %1038 = vst [vmem:[#allocation2 + $0x38] sm:$0xff] %v1014
    %1039 = vst [vmem:[#allocation2 + $0x40] sm:$0xff] %v1015
    %1040 = vst [vmem:[#allocation2 + $0x48] sm:$0xff] %v1016
    %1041 = vst [vmem:[#allocation2 + $0x50] sm:$0xff] %v1017
    %1042 = vst [vmem:[#allocation2 + $0x58] sm:$0xff] %v1018
    %1043 = vst [vmem:[#allocation2 + $0x60] sm:$0xff] %v1019
    %1044 = vst [vmem:[#allocation2 + $0x68] sm:$0xff] %v1020
    %1045 = vst [vmem:[#allocation2 + $0x70] sm:$0xff] %v1021
    %1046 = vst [vmem:[#allocation2 + $0x78] sm:$0xff] %v1022
    %1047 = vst [vmem:[#allocation2 + $0x80] sm:$0xff] %v1023
    %1048 = vst [vmem:[#allocation2 + $0x88] sm:$0xff] %v1024
    %1049 = vst [vmem:[#allocation2 + $0x90] sm:$0xff] %v1025
    %1050 = vst [vmem:[#allocation2 + $0x98] sm:$0xff] %v1026
    %1051 = vst [vmem:[#allocation2 + $0xa0] sm:$0xff] %v1027
    %1052 = vst [vmem:[#allocation2 + $0xa8] sm:$0xff] %v1028
    %1053 = vst [vmem:[#allocation2 + $0xb0] sm:$0xff] %v1029
    %1054 = vst [vmem:[#allocation2 + $0xb8] sm:$0xff] %v1030
    %v1055 = vld [vmem:[#allocation5 + $0x210] sm:$0xff]
    %v1056 = vld [vmem:[#allocation5 + $0x218] sm:$0xff]
    %v1057 = vld [vmem:[#allocation5 + $0x220] sm:$0xff]
    %v1058 = vld [vmem:[#allocation5 + $0x228] sm:$0xff]
    %v1059 = vld [vmem:[#allocation5 + $0x230] sm:$0xff]
    %v1060 = vld [vmem:[#allocation5 + $0x238] sm:$0xff]
    %v1061 = vld [vmem:[#allocation5 + $0x240] sm:$0xff]
    %v1062 = vld [vmem:[#allocation5 + $0x248] sm:$0xff]
    %v1063 = vld [vmem:[#allocation5 + $0x250] sm:$0xff]
    %v1064 = vld [vmem:[#allocation5 + $0x258] sm:$0xff]
    %v1065 = vld [vmem:[#allocation5 + $0x260] sm:$0xff]
    %v1066 = vld [vmem:[#allocation5 + $0x268] sm:$0xff]
    %v1067 = vld [vmem:[#allocation5 + $0x270] sm:$0xff]
    %v1068 = vld [vmem:[#allocation5 + $0x278] sm:$0xff]
    %v1069 = vld [vmem:[#allocation5 + $0x280] sm:$0xff]
    %v1070 = vld [vmem:[#allocation5 + $0x288] sm:$0xff]
    %v1071 = vld [vmem:[#allocation5 + $0x290] sm:$0xff]
    %v1072 = vld [vmem:[#allocation5 + $0x298] sm:$0xff]
    %v1073 = vld [vmem:[#allocation5 + $0x2a0] sm:$0xff]
    %v1074 = vld [vmem:[#allocation5 + $0x2a8] sm:$0xff]
    %v1075 = vld [vmem:[#allocation5 + $0x2b0] sm:$0xff]
    %v1076 = vld [vmem:[#allocation5 + $0x2b8] sm:$0xff]
    %v1077 = vld [vmem:[#allocation5 + $0x2c0] sm:$0xff]
    %v1078 = vld [vmem:[#allocation5 + $0x2c8] sm:$0xff]
    %v1079 = vld [vmem:[#allocation5 + $0x2d0] sm:$0xff]
    %v1080 = vld [vmem:[#allocation5 + $0x2d8] sm:$0xff]
    %v1081 = vld [vmem:[#allocation5 + $0x2e0] sm:$0xff]
    %v1082 = vld [vmem:[#allocation5 + $0x2e8] sm:$0xff]
    %v1083 = vld [vmem:[#allocation5 + $0x2f0] sm:$0xff]
    %v1084 = vld [vmem:[#allocation5 + $0x2f8] sm:$0xff]
    %v1085 = vld [vmem:[#allocation5 + $0x300] sm:$0xff]
    %v1086 = vld [vmem:[#allocation5 + $0x308] sm:$0xff]
    %v1087 = vld [vmem:[#allocation5 + $0x310] sm:$0xff]
    %v1088 = vld [vmem:[#allocation5 + $0x318] sm:$0xff]
    %v1089 = vld [vmem:[#allocation5 + $0x320] sm:$0xff]
    %v1090 = vld [vmem:[#allocation5 + $0x328] sm:$0xff]
    %v1091 = vld [vmem:[#allocation5 + $0x330] sm:$0xff]
    %v1092 = vld [vmem:[#allocation5 + $0x338] sm:$0xff]
    %v1093 = vld [vmem:[#allocation5 + $0x340] sm:$0xff]
    %v1094 = vld [vmem:[#allocation5 + $0x348] sm:$0xff]
    %v1095 = vld [vmem:[#allocation5 + $0x350] sm:$0xff]
    %v1096 = vld [vmem:[#allocation5 + $0x358] sm:$0xff]
    %v1097 = vld [vmem:[#allocation5 + $0x360] sm:$0xff]
    %v1098 = vld [vmem:[#allocation5 + $0x368] sm:$0xff]
    %v1099 = vld [vmem:[#allocation5 + $0x370] sm:$0xff]
    %v1100 = vld [vmem:[#allocation5 + $0x378] sm:$0xff]
    %v1101 = vld [vmem:[#allocation5 + $0x380] sm:$0xff]
    %v1102 = vld [vmem:[#allocation5 + $0x388] sm:$0xff]
    %s1103 = scalar_lea.vmem [#allocation5], 1488
    %v1104 = vld [vmem:[%s1103] ss:$8 sm:$0x7]
    %v1105 = vld [vmem:[#allocation4] sm:$0xff]
    %s1106 = smul.u32 0, 3
    %s1107 = smul.addr %s1106, 8
    %s1108 = scalar_lea.vmem [#allocation2], %s1107
    %v1109 = vld [vmem:[%s1108] sm:$0xff]
    %v1110 = vld [vmem:[%s1108 + $0x8] sm:$0xff]
    %v1111 = vld [vmem:[%s1108 + $0x10] sm:$0xff]
    %v1113 = vlaneseq
    %v1114 = vshrl.u32 %v1113, 7
    %v1115 = vsub.s32 0, %v1114
    %v1116 = vrot.slane %v1104, %v1115
    %v1117 = vlaneseq
    %v1118 = vshrl.u32 %v1117, 7
    %v1119 = vsub.s32 1, %v1118
    %v1120 = vrot.slane %v1104, %v1119
    %v1121 = vlaneseq
    %v1122 = vshrl.u32 %v1121, 7
    %v1123 = vsub.s32 2, %v1122
    %v1124 = vrot.slane %v1104, %v1123
    %1128 = vmatprep.subr.mxu0 %v1056
    %1129 = vmatpush1.msra.mxu0 %v1055
    %1130 = vmatprep.subr.mxu0 %v1059
    %1131 = vmatpush1.msra.mxu0 %v1058
    %1132 = vmatprep.subr.mxu0 %v1062
    %1133 = vmatpush1.msra.mxu0 %v1061
    %1134 = vmatprep.subr.mxu0 %v1065
    %1135 = vmatpush1.msra.mxu0 %v1064
    %1136 = vmatprep.subr.mxu0 %v1068
    %1137 = vmatpush1.msra.mxu0 %v1067
    %1138 = vmatprep.subr.mxu0 %v1071
    %1139 = vmatpush1.msra.mxu0 %v1070
    %1140 = vmatprep.subr.mxu0 %v1074
    %1141 = vmatpush1.msra.mxu0 %v1073
    %1142 = vmatprep.subr.mxu0 %v1077
    %1143 = vmatpush1.msra.mxu0 %v1076
    %1144 = vmatprep.subr.mxu0 %v1080
    %1145 = vmatpush1.msra.mxu0 %v1079
    %1146 = vmatprep.subr.mxu0 %v1083
    %1147 = vmatpush1.msra.mxu0 %v1082
    %1148 = vmatprep.subr.mxu0 %v1086
    %1149 = vmatpush1.msra.mxu0 %v1085
    %1150 = vmatprep.subr.mxu0 %v1089
    %1151 = vmatpush1.msra.mxu0 %v1088
    %1152 = vmatprep.subr.mxu0 %v1092
    %1153 = vmatpush1.msra.mxu0 %v1091
    %1154 = vmatprep.subr.mxu0 %v1095
    %1155 = vmatpush1.msra.mxu0 %v1094
    %1156 = vmatprep.subr.mxu0 %v1098
    %1157 = vmatpush1.msra.mxu0 %v1097
    %1158 = vmatprep.subr.mxu0 %v1101
    %1159 = vmatpush1.msra.mxu0 %v1100
    %1160 = vmatprep.subr.mxu0 0.0
    %1161 = vmatpush1.msra.mxu0 0.0
    %1162 = vmatprep.subr.mxu0 0.0
    %1163 = vmatpush1.msra.mxu0 0.0
    %1164 = vmatprep.subr.mxu0 0.0
    %1165 = vmatpush1.msra.mxu0 0.0
    %1166 = vmatprep.subr.mxu0 0.0
    %1167 = vmatpush1.msra.mxu0 0.0
    %1168 = vmatprep.subr.mxu0 0.0
    %1169 = vmatpush1.msra.mxu0 0.0
    %1170 = vmatprep.subr.mxu0 0.0
    %1171 = vmatpush1.msra.mxu0 0.0
    %1172 = vmatprep.subr.mxu0 0.0
    %1173 = vmatpush1.msra.mxu0 0.0
    %1174 = vmatprep.subr.mxu0 0.0
    %1175 = vmatpush1.msra.mxu0 0.0
    %1176 = vmatprep.subr.mxu0 0.0
    %1177 = vmatpush1.msra.mxu0 0.0
    %1178 = vmatprep.subr.mxu0 0.0
    %1179 = vmatpush1.msra.mxu0 0.0
    %1180 = vmatprep.subr.mxu0 0.0
    %1181 = vmatpush1.msra.mxu0 0.0
    %1182 = vmatprep.subr.mxu0 0.0
    %1183 = vmatpush1.msra.mxu0 0.0
    %1184 = vmatprep.subr.mxu0 0.0
    %1185 = vmatpush1.msra.mxu0 0.0
    %1186 = vmatprep.subr.mxu0 0.0
    %1187 = vmatpush1.msra.mxu0 0.0
    %1188 = vmatprep.subr.mxu0 0.0
    %1189 = vmatpush1.msra.mxu0 0.0
    %1190 = vmatprep.subr.mxu0 0.0
    %1191 = vmatpush1.msra.mxu0 0.0
    %1192 = vmatprep.mubr.f32.mxu0 0.0
    %1193 = vmatmul.mubr.f32.gmra.mrb[0].mxu0 %v1105
    %v1194 = vpop.f32.mrb[0].mxu0
    %v1195 = vadd.f32 %v1116, %v1194
    %v1196 = vpop.f32.mrb[0].mxu0
    %v1197 = vadd.f32 %v1120, %v1196
    %1198 = vdwg.mxu0
    %1199 = vmatprep.subr.mxu0 0.0
    %1200 = vmatpush1.msra.mxu0 %v1057
    %1201 = vmatprep.subr.mxu0 0.0
    %1202 = vmatpush1.msra.mxu0 %v1060
    %1203 = vmatprep.subr.mxu0 0.0
    %1204 = vmatpush1.msra.mxu0 %v1063
    %1205 = vmatprep.subr.mxu0 0.0
    %1206 = vmatpush1.msra.mxu0 %v1066
    %1207 = vmatprep.subr.mxu0 0.0
    %1208 = vmatpush1.msra.mxu0 %v1069
    %1209 = vmatprep.subr.mxu0 0.0
    %1210 = vmatpush1.msra.mxu0 %v1072
    %1211 = vmatprep.subr.mxu0 0.0
    %1212 = vmatpush1.msra.mxu0 %v1075
    %1213 = vmatprep.subr.mxu0 0.0
    %1214 = vmatpush1.msra.mxu0 %v1078
    %1215 = vmatprep.subr.mxu0 0.0
    %1216 = vmatpush1.msra.mxu0 %v1081
    %1217 = vmatprep.subr.mxu0 0.0
    %1218 = vmatpush1.msra.mxu0 %v1084
    %1219 = vmatprep.subr.mxu0 0.0
    %1220 = vmatpush1.msra.mxu0 %v1087
    %1221 = vmatprep.subr.mxu0 0.0
    %1222 = vmatpush1.msra.mxu0 %v1090
    %1223 = vmatprep.subr.mxu0 0.0
    %1224 = vmatpush1.msra.mxu0 %v1093
    %1225 = vmatprep.subr.mxu0 0.0
    %1226 = vmatpush1.msra.mxu0 %v1096
    %1227 = vmatprep.subr.mxu0 0.0
    %1228 = vmatpush1.msra.mxu0 %v1099
    %1229 = vmatprep.subr.mxu0 0.0
    %1230 = vmatpush1.msra.mxu0 %v1102
    %1231 = vmatprep.subr.mxu0 0.0
    %1232 = vmatpush1.msra.mxu0 0.0
    %1233 = vmatprep.subr.mxu0 0.0
    %1234 = vmatpush1.msra.mxu0 0.0
    %1235 = vmatprep.subr.mxu0 0.0
    %1236 = vmatpush1.msra.mxu0 0.0
    %1237 = vmatprep.subr.mxu0 0.0
    %1238 = vmatpush1.msra.mxu0 0.0
    %1239 = vmatprep.subr.mxu0 0.0
    %1240 = vmatpush1.msra.mxu0 0.0
    %1241 = vmatprep.subr.mxu0 0.0
    %1242 = vmatpush1.msra.mxu0 0.0
    %1243 = vmatprep.subr.mxu0 0.0
    %1244 = vmatpush1.msra.mxu0 0.0
    %1245 = vmatprep.subr.mxu0 0.0
    %1246 = vmatpush1.msra.mxu0 0.0
    %1247 = vmatprep.subr.mxu0 0.0
    %1248 = vmatpush1.msra.mxu0 0.0
    %1249 = vmatprep.subr.mxu0 0.0
    %1250 = vmatpush1.msra.mxu0 0.0
    %1251 = vmatprep.subr.mxu0 0.0
    %1252 = vmatpush1.msra.mxu0 0.0
    %1253 = vmatprep.subr.mxu0 0.0
    %1254 = vmatpush1.msra.mxu0 0.0
    %1255 = vmatprep.subr.mxu0 0.0
    %1256 = vmatpush1.msra.mxu0 0.0
    %1257 = vmatprep.subr.mxu0 0.0
    %1258 = vmatpush1.msra.mxu0 0.0
    %1259 = vmatprep.subr.mxu0 0.0
    %1260 = vmatpush1.msra.mxu0 0.0
    %1261 = vmatprep.subr.mxu0 0.0
    %1262 = vmatpush1.msra.mxu0 0.0
    %1263 = vmatprep.mubr.f32.mxu0 0.0
    %1264 = vmatmul.mubr.f32.gmra.mrb[0].mxu0 %v1105
    %v1265 = vpop.f32.mrb[0].mxu0
    %v1266 = vadd.f32 %v1124, %v1265
    %v1267 = vpop.f32.mrb[0].mxu0
    %1268 = vdwg.mxu0
    %v1269 = vadd.f32 %v1109, %v1195
    %v1270 = vxor.u32 %v1269, 2147483648
    %v1271 = vmul.f32 %v1270, 1.442695
    %v1272 = vpow.pop %v1271
    %v1273 = vadd.f32 %v1272, 1.0
    %v1274 = vrcp.pop %v1273
    %v1275 = vmul.f32 1.0, %v1274
    %v1276 = vadd.f32 %v1110, %v1197
    %v1277 = vxor.u32 %v1276, 2147483648
    %v1278 = vmul.f32 %v1277, 1.442695
    %v1279 = vpow.pop %v1278
    %v1280 = vadd.f32 %v1279, 1.0
    %v1281 = vrcp.pop %v1280
    %v1282 = vmul.f32 1.0, %v1281
    %v1283 = vmul.f32 %v1275, %v1266
    %v1284 = vadd.f32 %v1111, %v1283
    %v1285 = vtanh.pop %v1284
    %v1286 = vsub.f32 1.0, %v1282
    %v1287 = vmul.f32 %v1286, %v1285
    %v1288 = vmul.f32 %v1282, %v1105
    %v1289 = vadd.f32 %v1287, %v1288
    %1290 = vst [vmem:[#allocation3] sm:$0xff] %v1289
    %s1291 = smul.u32 1, 3
    %s1292 = smul.addr %s1291, 8
    %s1293 = scalar_lea.vmem [#allocation2], %s1292
    %v1294 = vld [vmem:[%s1293] sm:$0xff]
    %v1295 = vld [vmem:[%s1293 + $0x8] sm:$0xff]
    %v1296 = vld [vmem:[%s1293 + $0x10] sm:$0xff]
    %1297 = vmatprep.subr.mxu0 %v1056
    %1298 = vmatpush1.msra.mxu0 %v1055
    %1299 = vmatprep.subr.mxu0 %v1059
    %1300 = vmatpush1.msra.mxu0 %v1058
    %1301 = vmatprep.subr.mxu0 %v1062
    %1302 = vmatpush1.msra.mxu0 %v1061
    %1303 = vmatprep.subr.mxu0 %v1065
    %1304 = vmatpush1.msra.mxu0 %v1064
    %1305 = vmatprep.subr.mxu0 %v1068
    %1306 = vmatpush1.msra.mxu0 %v1067
    %1307 = vmatprep.subr.mxu0 %v1071
    %1308 = vmatpush1.msra.mxu0 %v1070
    %1309 = vmatprep.subr.mxu0 %v1074
    %1310 = vmatpush1.msra.mxu0 %v1073
    %1311 = vmatprep.subr.mxu0 %v1077
    %1312 = vmatpush1.msra.mxu0 %v1076
    %1313 = vmatprep.subr.mxu0 %v1080
    %1314 = vmatpush1.msra.mxu0 %v1079
    %1315 = vmatprep.subr.mxu0 %v1083
    %1316 = vmatpush1.msra.mxu0 %v1082
    %1317 = vmatprep.subr.mxu0 %v1086
    %1318 = vmatpush1.msra.mxu0 %v1085
    %1319 = vmatprep.subr.mxu0 %v1089
    %1320 = vmatpush1.msra.mxu0 %v1088
    %1321 = vmatprep.subr.mxu0 %v1092
    %1322 = vmatpush1.msra.mxu0 %v1091
    %1323 = vmatprep.subr.mxu0 %v1095
    %1324 = vmatpush1.msra.mxu0 %v1094
    %1325 = vmatprep.subr.mxu0 %v1098
    %1326 = vmatpush1.msra.mxu0 %v1097
    %1327 = vmatprep.subr.mxu0 %v1101
    %1328 = vmatpush1.msra.mxu0 %v1100
    %1329 = vmatprep.subr.mxu0 0.0
    %1330 = vmatpush1.msra.mxu0 0.0
    %1331 = vmatprep.subr.mxu0 0.0
    %1332 = vmatpush1.msra.mxu0 0.0
    %1333 = vmatprep.subr.mxu0 0.0
    %1334 = vmatpush1.msra.mxu0 0.0
    %1335 = vmatprep.subr.mxu0 0.0
    %1336 = vmatpush1.msra.mxu0 0.0
    %1337 = vmatprep.subr.mxu0 0.0
    %1338 = vmatpush1.msra.mxu0 0.0
    %1339 = vmatprep.subr.mxu0 0.0
    %1340 = vmatpush1.msra.mxu0 0.0
    %1341 = vmatprep.subr.mxu0 0.0
    %1342 = vmatpush1.msra.mxu0 0.0
    %1343 = vmatprep.subr.mxu0 0.0
    %1344 = vmatpush1.msra.mxu0 0.0
    %1345 = vmatprep.subr.mxu0 0.0
    %1346 = vmatpush1.msra.mxu0 0.0
    %1347 = vmatprep.subr.mxu0 0.0
    %1348 = vmatpush1.msra.mxu0 0.0
    %1349 = vmatprep.subr.mxu0 0.0
    %1350 = vmatpush1.msra.mxu0 0.0
    %1351 = vmatprep.subr.mxu0 0.0
    %1352 = vmatpush1.msra.mxu0 0.0
    %1353 = vmatprep.subr.mxu0 0.0
    %1354 = vmatpush1.msra.mxu0 0.0
    %1355 = vmatprep.subr.mxu0 0.0
    %1356 = vmatpush1.msra.mxu0 0.0
    %1357 = vmatprep.subr.mxu0 0.0
    %1358 = vmatpush1.msra.mxu0 0.0
    %1359 = vmatprep.subr.mxu0 0.0
    %1360 = vmatpush1.msra.mxu0 0.0
    %1361 = vmatprep.mubr.f32.mxu0 0.0
    %1362 = vmatmul.mubr.f32.gmra.mrb[0].mxu0 %v1289
    %v1363 = vpop.f32.mrb[0].mxu0
    %v1364 = vadd.f32 %v1116, %v1363
    %v1365 = vpop.f32.mrb[0].mxu0
    %v1366 = vadd.f32 %v1120, %v1365
    %1367 = vdwg.mxu0
    %1368 = vmatprep.subr.mxu0 0.0
    %1369 = vmatpush1.msra.mxu0 %v1057
    %1370 = vmatprep.subr.mxu0 0.0
    %1371 = vmatpush1.msra.mxu0 %v1060
    %1372 = vmatprep.subr.mxu0 0.0
    %1373 = vmatpush1.msra.mxu0 %v1063
    %1374 = vmatprep.subr.mxu0 0.0
    %1375 = vmatpush1.msra.mxu0 %v1066
    %1376 = vmatprep.subr.mxu0 0.0
    %1377 = vmatpush1.msra.mxu0 %v1069
    %1378 = vmatprep.subr.mxu0 0.0
    %1379 = vmatpush1.msra.mxu0 %v1072
    %1380 = vmatprep.subr.mxu0 0.0
    %1381 = vmatpush1.msra.mxu0 %v1075
    %1382 = vmatprep.subr.mxu0 0.0
    %1383 = vmatpush1.msra.mxu0 %v1078
    %1384 = vmatprep.subr.mxu0 0.0
    %1385 = vmatpush1.msra.mxu0 %v1081
    %1386 = vmatprep.subr.mxu0 0.0
    %1387 = vmatpush1.msra.mxu0 %v1084
    %1388 = vmatprep.subr.mxu0 0.0
    %1389 = vmatpush1.msra.mxu0 %v1087
    %1390 = vmatprep.subr.mxu0 0.0
    %1391 = vmatpush1.msra.mxu0 %v1090
    %1392 = vmatprep.subr.mxu0 0.0
    %1393 = vmatpush1.msra.mxu0 %v1093
    %1394 = vmatprep.subr.mxu0 0.0
    %1395 = vmatpush1.msra.mxu0 %v1096
    %1396 = vmatprep.subr.mxu0 0.0
    %1397 = vmatpush1.msra.mxu0 %v1099
    %1398 = vmatprep.subr.mxu0 0.0
    %1399 = vmatpush1.msra.mxu0 %v1102
    %1400 = vmatprep.subr.mxu0 0.0
    %1401 = vmatpush1.msra.mxu0 0.0
    %1402 = vmatprep.subr.mxu0 0.0
    %1403 = vmatpush1.msra.mxu0 0.0
    %1404 = vmatprep.subr.mxu0 0.0
    %1405 = vmatpush1.msra.mxu0 0.0
    %1406 = vmatprep.subr.mxu0 0.0
    %1407 = vmatpush1.msra.mxu0 0.0
    %1408 = vmatprep.subr.mxu0 0.0
    %1409 = vmatpush1.msra.mxu0 0.0
    %1410 = vmatprep.subr.mxu0 0.0
    %1411 = vmatpush1.msra.mxu0 0.0
    %1412 = vmatprep.subr.mxu0 0.0
    %1413 = vmatpush1.msra.mxu0 0.0
    %1414 = vmatprep.subr.mxu0 0.0
    %1415 = vmatpush1.msra.mxu0 0.0
    %1416 = vmatprep.subr.mxu0 0.0
    %1417 = vmatpush1.msra.mxu0 0.0
    %1418 = vmatprep.subr.mxu0 0.0
    %1419 = vmatpush1.msra.mxu0 0.0
    %1420 = vmatprep.subr.mxu0 0.0
    %1421 = vmatpush1.msra.mxu0 0.0
    %1422 = vmatprep.subr.mxu0 0.0
    %1423 = vmatpush1.msra.mxu0 0.0
    %1424 = vmatprep.subr.mxu0 0.0
    %1425 = vmatpush1.msra.mxu0 0.0
    %1426 = vmatprep.subr.mxu0 0.0
    %1427 = vmatpush1.msra.mxu0 0.0
    %1428 = vmatprep.subr.mxu0 0.0
    %1429 = vmatpush1.msra.mxu0 0.0
    %1430 = vmatprep.subr.mxu0 0.0
    %1431 = vmatpush1.msra.mxu0 0.0
    %1432 = vmatprep.mubr.f32.mxu0 0.0
    %1433 = vmatmul.mubr.f32.gmra.mrb[0].mxu0 %v1289
    %v1434 = vpop.f32.mrb[0].mxu0
    %v1435 = vadd.f32 %v1124, %v1434
    %v1436 = vpop.f32.mrb[0].mxu0
    %1437 = vdwg.mxu0
    %v1438 = vadd.f32 %v1294, %v1364
    %v1439 = vxor.u32 %v1438, 2147483648
    %v1440 = vmul.f32 %v1439, 1.442695
    %v1441 = vpow.pop %v1440
    %v1442 = vadd.f32 %v1441, 1.0
    %v1443 = vrcp.pop %v1442
    %v1444 = vmul.f32 1.0, %v1443
    %v1445 = vadd.f32 %v1295, %v1366
    %v1446 = vxor.u32 %v1445, 2147483648
    %v1447 = vmul.f32 %v1446, 1.442695
    %v1448 = vpow.pop %v1447
    %v1449 = vadd.f32 %v1448, 1.0
    %v1450 = vrcp.pop %v1449
    %v1451 = vmul.f32 1.0, %v1450
    %v1452 = vmul.f32 %v1444, %v1435
    %v1453 = vadd.f32 %v1296, %v1452
    %v1454 = vtanh.pop %v1453
    %v1455 = vsub.f32 1.0, %v1451
    %v1456 = vmul.f32 %v1455, %v1454
    %v1457 = vmul.f32 %v1451, %v1289
    %v1458 = vadd.f32 %v1456, %v1457
    %s1459 = scalar_lea.vmem [#allocation3], 8
    %1460 = vst [vmem:[%s1459] sm:$0xff] %v1458
    %s1461 = smul.u32 2, 3
    %s1462 = smul.addr %s1461, 8
    %s1463 = scalar_lea.vmem [#allocation2], %s1462
    %v1464 = vld [vmem:[%s1463] sm:$0xff]
    %v1465 = vld [vmem:[%s1463 + $0x8] sm:$0xff]
    %v1466 = vld [vmem:[%s1463 + $0x10] sm:$0xff]
    %1467 = vmatprep.subr.mxu0 %v1056
    %1468 = vmatpush1.msra.mxu0 %v1055
    %1469 = vmatprep.subr.mxu0 %v1059
    %1470 = vmatpush1.msra.mxu0 %v1058
    %1471 = vmatprep.subr.mxu0 %v1062
    %1472 = vmatpush1.msra.mxu0 %v1061
    %1473 = vmatprep.subr.mxu0 %v1065
    %1474 = vmatpush1.msra.mxu0 %v1064
    %1475 = vmatprep.subr.mxu0 %v1068
    %1476 = vmatpush1.msra.mxu0 %v1067
    %1477 = vmatprep.subr.mxu0 %v1071
    %1478 = vmatpush1.msra.mxu0 %v1070
    %1479 = vmatprep.subr.mxu0 %v1074
    %1480 = vmatpush1.msra.mxu0 %v1073
    %1481 = vmatprep.subr.mxu0 %v1077
    %1482 = vmatpush1.msra.mxu0 %v1076
    %1483 = vmatprep.subr.mxu0 %v1080
    %1484 = vmatpush1.msra.mxu0 %v1079
    %1485 = vmatprep.subr.mxu0 %v1083
    %1486 = vmatpush1.msra.mxu0 %v1082
    %1487 = vmatprep.subr.mxu0 %v1086
    %1488 = vmatpush1.msra.mxu0 %v1085
    %1489 = vmatprep.subr.mxu0 %v1089
    %1490 = vmatpush1.msra.mxu0 %v1088
    %1491 = vmatprep.subr.mxu0 %v1092
    %1492 = vmatpush1.msra.mxu0 %v1091
    %1493 = vmatprep.subr.mxu0 %v1095
    %1494 = vmatpush1.msra.mxu0 %v1094
    %1495 = vmatprep.subr.mxu0 %v1098
    %1496 = vmatpush1.msra.mxu0 %v1097
    %1497 = vmatprep.subr.mxu0 %v1101
    %1498 = vmatpush1.msra.mxu0 %v1100
    %1499 = vmatprep.subr.mxu0 0.0
    %1500 = vmatpush1.msra.mxu0 0.0
    %1501 = vmatprep.subr.mxu0 0.0
    %1502 = vmatpush1.msra.mxu0 0.0
    %1503 = vmatprep.subr.mxu0 0.0
    %1504 = vmatpush1.msra.mxu0 0.0
    %1505 = vmatprep.subr.mxu0 0.0
    %1506 = vmatpush1.msra.mxu0 0.0
    %1507 = vmatprep.subr.mxu0 0.0
    %1508 = vmatpush1.msra.mxu0 0.0
    %1509 = vmatprep.subr.mxu0 0.0
    %1510 = vmatpush1.msra.mxu0 0.0
    %1511 = vmatprep.subr.mxu0 0.0
    %1512 = vmatpush1.msra.mxu0 0.0
    %1513 = vmatprep.subr.mxu0 0.0
    %1514 = vmatpush1.msra.mxu0 0.0
    %1515 = vmatprep.subr.mxu0 0.0
    %1516 = vmatpush1.msra.mxu0 0.0
    %1517 = vmatprep.subr.mxu0 0.0
    %1518 = vmatpush1.msra.mxu0 0.0
    %1519 = vmatprep.subr.mxu0 0.0
    %1520 = vmatpush1.msra.mxu0 0.0
    %1521 = vmatprep.subr.mxu0 0.0
    %1522 = vmatpush1.msra.mxu0 0.0
    %1523 = vmatprep.subr.mxu0 0.0
    %1524 = vmatpush1.msra.mxu0 0.0
    %1525 = vmatprep.subr.mxu0 0.0
    %1526 = vmatpush1.msra.mxu0 0.0
    %1527 = vmatprep.subr.mxu0 0.0
    %1528 = vmatpush1.msra.mxu0 0.0
    %1529 = vmatprep.subr.mxu0 0.0
    %1530 = vmatpush1.msra.mxu0 0.0
    %1531 = vmatprep.mubr.f32.mxu0 0.0
    %1532 = vmatmul.mubr.f32.gmra.mrb[0].mxu0 %v1458
    %v1533 = vpop.f32.mrb[0].mxu0
    %v1534 = vadd.f32 %v1116, %v1533
    %v1535 = vpop.f32.mrb[0].mxu0
    %v1536 = vadd.f32 %v1120, %v1535
    %1537 = vdwg.mxu0
    %1538 = vmatprep.subr.mxu0 0.0
    %1539 = vmatpush1.msra.mxu0 %v1057
    %1540 = vmatprep.subr.mxu0 0.0
    %1541 = vmatpush1.msra.mxu0 %v1060
    %1542 = vmatprep.subr.mxu0 0.0
    %1543 = vmatpush1.msra.mxu0 %v1063
    %1544 = vmatprep.subr.mxu0 0.0
    %1545 = vmatpush1.msra.mxu0 %v1066
    %1546 = vmatprep.subr.mxu0 0.0
    %1547 = vmatpush1.msra.mxu0 %v1069
    %1548 = vmatprep.subr.mxu0 0.0
    %1549 = vmatpush1.msra.mxu0 %v1072
    %1550 = vmatprep.subr.mxu0 0.0
    %1551 = vmatpush1.msra.mxu0 %v1075
    %1552 = vmatprep.subr.mxu0 0.0
    %1553 = vmatpush1.msra.mxu0 %v1078
    %1554 = vmatprep.subr.mxu0 0.0
    %1555 = vmatpush1.msra.mxu0 %v1081
    %1556 = vmatprep.subr.mxu0 0.0
    %1557 = vmatpush1.msra.mxu0 %v1084
    %1558 = vmatprep.subr.mxu0 0.0
    %1559 = vmatpush1.msra.mxu0 %v1087
    %1560 = vmatprep.subr.mxu0 0.0
    %1561 = vmatpush1.msra.mxu0 %v1090
    %1562 = vmatprep.subr.mxu0 0.0
    %1563 = vmatpush1.msra.mxu0 %v1093
    %1564 = vmatprep.subr.mxu0 0.0
    %1565 = vmatpush1.msra.mxu0 %v1096
    %1566 = vmatprep.subr.mxu0 0.0
    %1567 = vmatpush1.msra.mxu0 %v1099
    %1568 = vmatprep.subr.mxu0 0.0
    %1569 = vmatpush1.msra.mxu0 %v1102
    %1570 = vmatprep.subr.mxu0 0.0
    %1571 = vmatpush1.msra.mxu0 0.0
    %1572 = vmatprep.subr.mxu0 0.0
    %1573 = vmatpush1.msra.mxu0 0.0
    %1574 = vmatprep.subr.mxu0 0.0
    %1575 = vmatpush1.msra.mxu0 0.0
    %1576 = vmatprep.subr.mxu0 0.0
    %1577 = vmatpush1.msra.mxu0 0.0
    %1578 = vmatprep.subr.mxu0 0.0
    %1579 = vmatpush1.msra.mxu0 0.0
    %1580 = vmatprep.subr.mxu0 0.0
    %1581 = vmatpush1.msra.mxu0 0.0
    %1582 = vmatprep.subr.mxu0 0.0
    %1583 = vmatpush1.msra.mxu0 0.0
    %1584 = vmatprep.subr.mxu0 0.0
    %1585 = vmatpush1.msra.mxu0 0.0
    %1586 = vmatprep.subr.mxu0 0.0
    %1587 = vmatpush1.msra.mxu0 0.0
    %1588 = vmatprep.subr.mxu0 0.0
    %1589 = vmatpush1.msra.mxu0 0.0
    %1590 = vmatprep.subr.mxu0 0.0
    %1591 = vmatpush1.msra.mxu0 0.0
    %1592 = vmatprep.subr.mxu0 0.0
    %1593 = vmatpush1.msra.mxu0 0.0
    %1594 = vmatprep.subr.mxu0 0.0
    %1595 = vmatpush1.msra.mxu0 0.0
    %1596 = vmatprep.subr.mxu0 0.0
    %1597 = vmatpush1.msra.mxu0 0.0
    %1598 = vmatprep.subr.mxu0 0.0
    %1599 = vmatpush1.msra.mxu0 0.0
    %1600 = vmatprep.subr.mxu0 0.0
    %1601 = vmatpush1.msra.mxu0 0.0
    %1602 = vmatprep.mubr.f32.mxu0 0.0
    %1603 = vmatmul.mubr.f32.gmra.mrb[0].mxu0 %v1458
    %v1604 = vpop.f32.mrb[0].mxu0
    %v1605 = vadd.f32 %v1124, %v1604
    %v1606 = vpop.f32.mrb[0].mxu0
    %1607 = vdwg.mxu0
    %v1608 = vadd.f32 %v1464, %v1534
    %v1609 = vxor.u32 %v1608, 2147483648
    %v1610 = vmul.f32 %v1609, 1.442695
    %v1611 = vpow.pop %v1610
    %v1612 = vadd.f32 %v1611, 1.0
    %v1613 = vrcp.pop %v1612
    %v1614 = vmul.f32 1.0, %v1613
    %v1615 = vadd.f32 %v1465, %v1536
    %v1616 = vxor.u32 %v1615, 2147483648
    %v1617 = vmul.f32 %v1616, 1.442695
    %v1618 = vpow.pop %v1617
    %v1619 = vadd.f32 %v1618, 1.0
    %v1620 = vrcp.pop %v1619
    %v1621 = vmul.f32 1.0, %v1620
    %v1622 = vmul.f32 %v1614, %v1605
    %v1623 = vadd.f32 %v1466, %v1622
    %v1624 = vtanh.pop %v1623
    %v1625 = vsub.f32 1.0, %v1621
    %v1626 = vmul.f32 %v1625, %v1624
    %v1627 = vmul.f32 %v1621, %v1458
    %v1628 = vadd.f32 %v1626, %v1627
    %s1629 = scalar_lea.vmem [#allocation3], 16
    %1630 = vst [vmem:[%s1629] sm:$0xff] %v1628
    %s1631 = smul.u32 3, 3
    %s1632 = smul.addr %s1631, 8
    %s1633 = scalar_lea.vmem [#allocation2], %s1632
    %v1634 = vld [vmem:[%s1633] sm:$0xff]
    %v1635 = vld [vmem:[%s1633 + $0x8] sm:$0xff]
    %v1636 = vld [vmem:[%s1633 + $0x10] sm:$0xff]
    %1637 = vmatprep.subr.mxu0 %v1056
    %1638 = vmatpush1.msra.mxu0 %v1055
    %1639 = vmatprep.subr.mxu0 %v1059
    %1640 = vmatpush1.msra.mxu0 %v1058
    %1641 = vmatprep.subr.mxu0 %v1062
    %1642 = vmatpush1.msra.mxu0 %v1061
    %1643 = vmatprep.subr.mxu0 %v1065
    %1644 = vmatpush1.msra.mxu0 %v1064
    %1645 = vmatprep.subr.mxu0 %v1068
    %1646 = vmatpush1.msra.mxu0 %v1067
    %1647 = vmatprep.subr.mxu0 %v1071
    %1648 = vmatpush1.msra.mxu0 %v1070
    %1649 = vmatprep.subr.mxu0 %v1074
    %1650 = vmatpush1.msra.mxu0 %v1073
    %1651 = vmatprep.subr.mxu0 %v1077
    %1652 = vmatpush1.msra.mxu0 %v1076
    %1653 = vmatprep.subr.mxu0 %v1080
    %1654 = vmatpush1.msra.mxu0 %v1079
    %1655 = vmatprep.subr.mxu0 %v1083
    %1656 = vmatpush1.msra.mxu0 %v1082
    %1657 = vmatprep.subr.mxu0 %v1086
    %1658 = vmatpush1.msra.mxu0 %v1085
    %1659 = vmatprep.subr.mxu0 %v1089
    %1660 = vmatpush1.msra.mxu0 %v1088
    %1661 = vmatprep.subr.mxu0 %v1092
    %1662 = vmatpush1.msra.mxu0 %v1091
    %1663 = vmatprep.subr.mxu0 %v1095
    %1664 = vmatpush1.msra.mxu0 %v1094
    %1665 = vmatprep.subr.mxu0 %v1098
    %1666 = vmatpush1.msra.mxu0 %v1097
    %1667 = vmatprep.subr.mxu0 %v1101
    %1668 = vmatpush1.msra.mxu0 %v1100
    %1669 = vmatprep.subr.mxu0 0.0
    %1670 = vmatpush1.msra.mxu0 0.0
    %1671 = vmatprep.subr.mxu0 0.0
    %1672 = vmatpush1.msra.mxu0 0.0
    %1673 = vmatprep.subr.mxu0 0.0
    %1674 = vmatpush1.msra.mxu0 0.0
    %1675 = vmatprep.subr.mxu0 0.0
    %1676 = vmatpush1.msra.mxu0 0.0
    %1677 = vmatprep.subr.mxu0 0.0
    %1678 = vmatpush1.msra.mxu0 0.0
    %1679 = vmatprep.subr.mxu0 0.0
    %1680 = vmatpush1.msra.mxu0 0.0
    %1681 = vmatprep.subr.mxu0 0.0
    %1682 = vmatpush1.msra.mxu0 0.0
    %1683 = vmatprep.subr.mxu0 0.0
    %1684 = vmatpush1.msra.mxu0 0.0
    %1685 = vmatprep.subr.mxu0 0.0
    %1686 = vmatpush1.msra.mxu0 0.0
    %1687 = vmatprep.subr.mxu0 0.0
    %1688 = vmatpush1.msra.mxu0 0.0
    %1689 = vmatprep.subr.mxu0 0.0
    %1690 = vmatpush1.msra.mxu0 0.0
    %1691 = vmatprep.subr.mxu0 0.0
    %1692 = vmatpush1.msra.mxu0 0.0
    %1693 = vmatprep.subr.mxu0 0.0
    %1694 = vmatpush1.msra.mxu0 0.0
    %1695 = vmatprep.subr.mxu0 0.0
    %1696 = vmatpush1.msra.mxu0 0.0
    %1697 = vmatprep.subr.mxu0 0.0
    %1698 = vmatpush1.msra.mxu0 0.0
    %1699 = vmatprep.subr.mxu0 0.0
    %1700 = vmatpush1.msra.mxu0 0.0
    %1701 = vmatprep.mubr.f32.mxu0 0.0
    %1702 = vmatmul.mubr.f32.gmra.mrb[0].mxu0 %v1628
    %v1703 = vpop.f32.mrb[0].mxu0
    %v1704 = vadd.f32 %v1116, %v1703
    %v1705 = vpop.f32.mrb[0].mxu0
    %v1706 = vadd.f32 %v1120, %v1705
    %1707 = vdwg.mxu0
    %1708 = vmatprep.subr.mxu0 0.0
    %1709 = vmatpush1.msra.mxu0 %v1057
    %1710 = vmatprep.subr.mxu0 0.0
    %1711 = vmatpush1.msra.mxu0 %v1060
    %1712 = vmatprep.subr.mxu0 0.0
    %1713 = vmatpush1.msra.mxu0 %v1063
    %1714 = vmatprep.subr.mxu0 0.0
    %1715 = vmatpush1.msra.mxu0 %v1066
    %1716 = vmatprep.subr.mxu0 0.0
    %1717 = vmatpush1.msra.mxu0 %v1069
    %1718 = vmatprep.subr.mxu0 0.0
    %1719 = vmatpush1.msra.mxu0 %v1072
    %1720 = vmatprep.subr.mxu0 0.0
    %1721 = vmatpush1.msra.mxu0 %v1075
    %1722 = vmatprep.subr.mxu0 0.0
    %1723 = vmatpush1.msra.mxu0 %v1078
    %1724 = vmatprep.subr.mxu0 0.0
    %1725 = vmatpush1.msra.mxu0 %v1081
    %1726 = vmatprep.subr.mxu0 0.0
    %1727 = vmatpush1.msra.mxu0 %v1084
    %1728 = vmatprep.subr.mxu0 0.0
    %1729 = vmatpush1.msra.mxu0 %v1087
    %1730 = vmatprep.subr.mxu0 0.0
    %1731 = vmatpush1.msra.mxu0 %v1090
    %1732 = vmatprep.subr.mxu0 0.0
    %1733 = vmatpush1.msra.mxu0 %v1093
    %1734 = vmatprep.subr.mxu0 0.0
    %1735 = vmatpush1.msra.mxu0 %v1096
    %1736 = vmatprep.subr.mxu0 0.0
    %1737 = vmatpush1.msra.mxu0 %v1099
    %1738 = vmatprep.subr.mxu0 0.0
    %1739 = vmatpush1.msra.mxu0 %v1102
    %1740 = vmatprep.subr.mxu0 0.0
    %1741 = vmatpush1.msra.mxu0 0.0
    %1742 = vmatprep.subr.mxu0 0.0
    %1743 = vmatpush1.msra.mxu0 0.0
    %1744 = vmatprep.subr.mxu0 0.0
    %1745 = vmatpush1.msra.mxu0 0.0
    %1746 = vmatprep.subr.mxu0 0.0
    %1747 = vmatpush1.msra.mxu0 0.0
    %1748 = vmatprep.subr.mxu0 0.0
    %1749 = vmatpush1.msra.mxu0 0.0
    %1750 = vmatprep.subr.mxu0 0.0
    %1751 = vmatpush1.msra.mxu0 0.0
    %1752 = vmatprep.subr.mxu0 0.0
    %1753 = vmatpush1.msra.mxu0 0.0
    %1754 = vmatprep.subr.mxu0 0.0
    %1755 = vmatpush1.msra.mxu0 0.0
    %1756 = vmatprep.subr.mxu0 0.0
    %1757 = vmatpush1.msra.mxu0 0.0
    %1758 = vmatprep.subr.mxu0 0.0
    %1759 = vmatpush1.msra.mxu0 0.0
    %1760 = vmatprep.subr.mxu0 0.0
    %1761 = vmatpush1.msra.mxu0 0.0
    %1762 = vmatprep.subr.mxu0 0.0
    %1763 = vmatpush1.msra.mxu0 0.0
    %1764 = vmatprep.subr.mxu0 0.0
    %1765 = vmatpush1.msra.mxu0 0.0
    %1766 = vmatprep.subr.mxu0 0.0
    %1767 = vmatpush1.msra.mxu0 0.0
    %1768 = vmatprep.subr.mxu0 0.0
    %1769 = vmatpush1.msra.mxu0 0.0
    %1770 = vmatprep.subr.mxu0 0.0
    %1771 = vmatpush1.msra.mxu0 0.0
    %1772 = vmatprep.mubr.f32.mxu0 0.0
    %1773 = vmatmul.mubr.f32.gmra.mrb[0].mxu0 %v1628
    %v1774 = vpop.f32.mrb[0].mxu0
    %v1775 = vadd.f32 %v1124, %v1774
    %v1776 = vpop.f32.mrb[0].mxu0
    %1777 = vdwg.mxu0
    %v1778 = vadd.f32 %v1634, %v1704
    %v1779 = vxor.u32 %v1778, 2147483648
    %v1780 = vmul.f32 %v1779, 1.442695
    %v1781 = vpow.pop %v1780
    %v1782 = vadd.f32 %v1781, 1.0
    %v1783 = vrcp.pop %v1782
    %v1784 = vmul.f32 1.0, %v1783
    %v1785 = vadd.f32 %v1635, %v1706
    %v1786 = vxor.u32 %v1785, 2147483648
    %v1787 = vmul.f32 %v1786, 1.442695
    %v1788 = vpow.pop %v1787
    %v1789 = vadd.f32 %v1788, 1.0
    %v1790 = vrcp.pop %v1789
    %v1791 = vmul.f32 1.0, %v1790
    %v1792 = vmul.f32 %v1784, %v1775
    %v1793 = vadd.f32 %v1636, %v1792
    %v1794 = vtanh.pop %v1793
    %v1795 = vsub.f32 1.0, %v1791
    %v1796 = vmul.f32 %v1795, %v1794
    %v1797 = vmul.f32 %v1791, %v1628
    %v1798 = vadd.f32 %v1796, %v1797
    %s1799 = scalar_lea.vmem [#allocation3], 24
    %1800 = vst [vmem:[%s1799] sm:$0xff] %v1798
    %s1801 = smul.u32 4, 3
    %s1802 = smul.addr %s1801, 8
    %s1803 = scalar_lea.vmem [#allocation2], %s1802
    %v1804 = vld [vmem:[%s1803] sm:$0xff]
    %v1805 = vld [vmem:[%s1803 + $0x8] sm:$0xff]
    %v1806 = vld [vmem:[%s1803 + $0x10] sm:$0xff]
    %1807 = vmatprep.subr.mxu0 %v1056
    %1808 = vmatpush1.msra.mxu0 %v1055
    %1809 = vmatprep.subr.mxu0 %v1059
    %1810 = vmatpush1.msra.mxu0 %v1058
    %1811 = vmatprep.subr.mxu0 %v1062
    %1812 = vmatpush1.msra.mxu0 %v1061
    %1813 = vmatprep.subr.mxu0 %v1065
    %1814 = vmatpush1.msra.mxu0 %v1064
    %1815 = vmatprep.subr.mxu0 %v1068
    %1816 = vmatpush1.msra.mxu0 %v1067
    %1817 = vmatprep.subr.mxu0 %v1071
    %1818 = vmatpush1.msra.mxu0 %v1070
    %1819 = vmatprep.subr.mxu0 %v1074
    %1820 = vmatpush1.msra.mxu0 %v1073
    %1821 = vmatprep.subr.mxu0 %v1077
    %1822 = vmatpush1.msra.mxu0 %v1076
    %1823 = vmatprep.subr.mxu0 %v1080
    %1824 = vmatpush1.msra.mxu0 %v1079
    %1825 = vmatprep.subr.mxu0 %v1083
    %1826 = vmatpush1.msra.mxu0 %v1082
    %1827 = vmatprep.subr.mxu0 %v1086
    %1828 = vmatpush1.msra.mxu0 %v1085
    %1829 = vmatprep.subr.mxu0 %v1089
    %1830 = vmatpush1.msra.mxu0 %v1088
    %1831 = vmatprep.subr.mxu0 %v1092
    %1832 = vmatpush1.msra.mxu0 %v1091
    %1833 = vmatprep.subr.mxu0 %v1095
    %1834 = vmatpush1.msra.mxu0 %v1094
    %1835 = vmatprep.subr.mxu0 %v1098
    %1836 = vmatpush1.msra.mxu0 %v1097
    %1837 = vmatprep.subr.mxu0 %v1101
    %1838 = vmatpush1.msra.mxu0 %v1100
    %1839 = vmatprep.subr.mxu0 0.0
    %1840 = vmatpush1.msra.mxu0 0.0
    %1841 = vmatprep.subr.mxu0 0.0
    %1842 = vmatpush1.msra.mxu0 0.0
    %1843 = vmatprep.subr.mxu0 0.0
    %1844 = vmatpush1.msra.mxu0 0.0
    %1845 = vmatprep.subr.mxu0 0.0
    %1846 = vmatpush1.msra.mxu0 0.0
    %1847 = vmatprep.subr.mxu0 0.0
    %1848 = vmatpush1.msra.mxu0 0.0
    %1849 = vmatprep.subr.mxu0 0.0
    %1850 = vmatpush1.msra.mxu0 0.0
    %1851 = vmatprep.subr.mxu0 0.0
    %1852 = vmatpush1.msra.mxu0 0.0
    %1853 = vmatprep.subr.mxu0 0.0
    %1854 = vmatpush1.msra.mxu0 0.0
    %1855 = vmatprep.subr.mxu0 0.0
    %1856 = vmatpush1.msra.mxu0 0.0
    %1857 = vmatprep.subr.mxu0 0.0
    %1858 = vmatpush1.msra.mxu0 0.0
    %1859 = vmatprep.subr.mxu0 0.0
    %1860 = vmatpush1.msra.mxu0 0.0
    %1861 = vmatprep.subr.mxu0 0.0
    %1862 = vmatpush1.msra.mxu0 0.0
    %1863 = vmatprep.subr.mxu0 0.0
    %1864 = vmatpush1.msra.mxu0 0.0
    %1865 = vmatprep.subr.mxu0 0.0
    %1866 = vmatpush1.msra.mxu0 0.0
    %1867 = vmatprep.subr.mxu0 0.0
    %1868 = vmatpush1.msra.mxu0 0.0
    %1869 = vmatprep.subr.mxu0 0.0
    %1870 = vmatpush1.msra.mxu0 0.0
    %1871 = vmatprep.mubr.f32.mxu0 0.0
    %1872 = vmatmul.mubr.f32.gmra.mrb[0].mxu0 %v1798
    %v1873 = vpop.f32.mrb[0].mxu0
    %v1874 = vadd.f32 %v1116, %v1873
    %v1875 = vpop.f32.mrb[0].mxu0
    %v1876 = vadd.f32 %v1120, %v1875
    %1877 = vdwg.mxu0
    %1878 = vmatprep.subr.mxu0 0.0
    %1879 = vmatpush1.msra.mxu0 %v1057
    %1880 = vmatprep.subr.mxu0 0.0
    %1881 = vmatpush1.msra.mxu0 %v1060
    %1882 = vmatprep.subr.mxu0 0.0
    %1883 = vmatpush1.msra.mxu0 %v1063
    %1884 = vmatprep.subr.mxu0 0.0
    %1885 = vmatpush1.msra.mxu0 %v1066
    %1886 = vmatprep.subr.mxu0 0.0
    %1887 = vmatpush1.msra.mxu0 %v1069
    %1888 = vmatprep.subr.mxu0 0.0
    %1889 = vmatpush1.msra.mxu0 %v1072
    %1890 = vmatprep.subr.mxu0 0.0
    %1891 = vmatpush1.msra.mxu0 %v1075
    %1892 = vmatprep.subr.mxu0 0.0
    %1893 = vmatpush1.msra.mxu0 %v1078
    %1894 = vmatprep.subr.mxu0 0.0
    %1895 = vmatpush1.msra.mxu0 %v1081
    %1896 = vmatprep.subr.mxu0 0.0
    %1897 = vmatpush1.msra.mxu0 %v1084
    %1898 = vmatprep.subr.mxu0 0.0
    %1899 = vmatpush1.msra.mxu0 %v1087
    %1900 = vmatprep.subr.mxu0 0.0
    %1901 = vmatpush1.msra.mxu0 %v1090
    %1902 = vmatprep.subr.mxu0 0.0
    %1903 = vmatpush1.msra.mxu0 %v1093
    %1904 = vmatprep.subr.mxu0 0.0
    %1905 = vmatpush1.msra.mxu0 %v1096
    %1906 = vmatprep.subr.mxu0 0.0
    %1907 = vmatpush1.msra.mxu0 %v1099
    %1908 = vmatprep.subr.mxu0 0.0
    %1909 = vmatpush1.msra.mxu0 %v1102
    %1910 = vmatprep.subr.mxu0 0.0
    %1911 = vmatpush1.msra.mxu0 0.0
    %1912 = vmatprep.subr.mxu0 0.0
    %1913 = vmatpush1.msra.mxu0 0.0
    %1914 = vmatprep.subr.mxu0 0.0
    %1915 = vmatpush1.msra.mxu0 0.0
    %1916 = vmatprep.subr.mxu0 0.0
    %1917 = vmatpush1.msra.mxu0 0.0
    %1918 = vmatprep.subr.mxu0 0.0
    %1919 = vmatpush1.msra.mxu0 0.0
    %1920 = vmatprep.subr.mxu0 0.0
    %1921 = vmatpush1.msra.mxu0 0.0
    %1922 = vmatprep.subr.mxu0 0.0
    %1923 = vmatpush1.msra.mxu0 0.0
    %1924 = vmatprep.subr.mxu0 0.0
    %1925 = vmatpush1.msra.mxu0 0.0
    %1926 = vmatprep.subr.mxu0 0.0
    %1927 = vmatpush1.msra.mxu0 0.0
    %1928 = vmatprep.subr.mxu0 0.0
    %1929 = vmatpush1.msra.mxu0 0.0
    %1930 = vmatprep.subr.mxu0 0.0
    %1931 = vmatpush1.msra.mxu0 0.0
    %1932 = vmatprep.subr.mxu0 0.0
    %1933 = vmatpush1.msra.mxu0 0.0
    %1934 = vmatprep.subr.mxu0 0.0
    %1935 = vmatpush1.msra.mxu0 0.0
    %1936 = vmatprep.subr.mxu0 0.0
    %1937 = vmatpush1.msra.mxu0 0.0
    %1938 = vmatprep.subr.mxu0 0.0
    %1939 = vmatpush1.msra.mxu0 0.0
    %1940 = vmatprep.subr.mxu0 0.0
    %1941 = vmatpush1.msra.mxu0 0.0
    %1942 = vmatprep.mubr.f32.mxu0 0.0
    %1943 = vmatmul.mubr.f32.gmra.mrb[0].mxu0 %v1798
    %v1944 = vpop.f32.mrb[0].mxu0
    %v1945 = vadd.f32 %v1124, %v1944
    %v1946 = vpop.f32.mrb[0].mxu0
    %1947 = vdwg.mxu0
    %v1948 = vadd.f32 %v1804, %v1874
    %v1949 = vxor.u32 %v1948, 2147483648
    %v1950 = vmul.f32 %v1949, 1.442695
    %v1951 = vpow.pop %v1950
    %v1952 = vadd.f32 %v1951, 1.0
    %v1953 = vrcp.pop %v1952
    %v1954 = vmul.f32 1.0, %v1953
    %v1955 = vadd.f32 %v1805, %v1876
    %v1956 = vxor.u32 %v1955, 2147483648
    %v1957 = vmul.f32 %v1956, 1.442695
    %v1958 = vpow.pop %v1957
    %v1959 = vadd.f32 %v1958, 1.0
    %v1960 = vrcp.pop %v1959
    %v1961 = vmul.f32 1.0, %v1960
    %v1962 = vmul.f32 %v1954, %v1945
    %v1963 = vadd.f32 %v1806, %v1962
    %v1964 = vtanh.pop %v1963
    %v1965 = vsub.f32 1.0, %v1961
    %v1966 = vmul.f32 %v1965, %v1964
    %v1967 = vmul.f32 %v1961, %v1798
    %v1968 = vadd.f32 %v1966, %v1967
    %s1969 = scalar_lea.vmem [#allocation3], 32
    %1970 = vst [vmem:[%s1969] sm:$0xff] %v1968
    %s1971 = smul.u32 5, 3
    %s1972 = smul.addr %s1971, 8
    %s1973 = scalar_lea.vmem [#allocation2], %s1972
    %v1974 = vld [vmem:[%s1973] sm:$0xff]
    %v1975 = vld [vmem:[%s1973 + $0x8] sm:$0xff]
    %v1976 = vld [vmem:[%s1973 + $0x10] sm:$0xff]
    %1977 = vmatprep.subr.mxu0 %v1056
    %1978 = vmatpush1.msra.mxu0 %v1055
    %1979 = vmatprep.subr.mxu0 %v1059
    %1980 = vmatpush1.msra.mxu0 %v1058
    %1981 = vmatprep.subr.mxu0 %v1062
    %1982 = vmatpush1.msra.mxu0 %v1061
    %1983 = vmatprep.subr.mxu0 %v1065
    %1984 = vmatpush1.msra.mxu0 %v1064
    %1985 = vmatprep.subr.mxu0 %v1068
    %1986 = vmatpush1.msra.mxu0 %v1067
    %1987 = vmatprep.subr.mxu0 %v1071
    %1988 = vmatpush1.msra.mxu0 %v1070
    %1989 = vmatprep.subr.mxu0 %v1074
    %1990 = vmatpush1.msra.mxu0 %v1073
    %1991 = vmatprep.subr.mxu0 %v1077
    %1992 = vmatpush1.msra.mxu0 %v1076
    %1993 = vmatprep.subr.mxu0 %v1080
    %1994 = vmatpush1.msra.mxu0 %v1079
    %1995 = vmatprep.subr.mxu0 %v1083
    %1996 = vmatpush1.msra.mxu0 %v1082
    %1997 = vmatprep.subr.mxu0 %v1086
    %1998 = vmatpush1.msra.mxu0 %v1085
    %1999 = vmatprep.subr.mxu0 %v1089
    %2000 = vmatpush1.msra.mxu0 %v1088
    %2001 = vmatprep.subr.mxu0 %v1092
    %2002 = vmatpush1.msra.mxu0 %v1091
    %2003 = vmatprep.subr.mxu0 %v1095
    %2004 = vmatpush1.msra.mxu0 %v1094
    %2005 = vmatprep.subr.mxu0 %v1098
    %2006 = vmatpush1.msra.mxu0 %v1097
    %2007 = vmatprep.subr.mxu0 %v1101
    %2008 = vmatpush1.msra.mxu0 %v1100
    %2009 = vmatprep.subr.mxu0 0.0
    %2010 = vmatpush1.msra.mxu0 0.0
    %2011 = vmatprep.subr.mxu0 0.0
    %2012 = vmatpush1.msra.mxu0 0.0
    %2013 = vmatprep.subr.mxu0 0.0
    %2014 = vmatpush1.msra.mxu0 0.0
    %2015 = vmatprep.subr.mxu0 0.0
    %2016 = vmatpush1.msra.mxu0 0.0
    %2017 = vmatprep.subr.mxu0 0.0
    %2018 = vmatpush1.msra.mxu0 0.0
    %2019 = vmatprep.subr.mxu0 0.0
    %2020 = vmatpush1.msra.mxu0 0.0
    %2021 = vmatprep.subr.mxu0 0.0
    %2022 = vmatpush1.msra.mxu0 0.0
    %2023 = vmatprep.subr.mxu0 0.0
    %2024 = vmatpush1.msra.mxu0 0.0
    %2025 = vmatprep.subr.mxu0 0.0
    %2026 = vmatpush1.msra.mxu0 0.0
    %2027 = vmatprep.subr.mxu0 0.0
    %2028 = vmatpush1.msra.mxu0 0.0
    %2029 = vmatprep.subr.mxu0 0.0
    %2030 = vmatpush1.msra.mxu0 0.0
    %2031 = vmatprep.subr.mxu0 0.0
    %2032 = vmatpush1.msra.mxu0 0.0
    %2033 = vmatprep.subr.mxu0 0.0
    %2034 = vmatpush1.msra.mxu0 0.0
    %2035 = vmatprep.subr.mxu0 0.0
    %2036 = vmatpush1.msra.mxu0 0.0
    %2037 = vmatprep.subr.mxu0 0.0
    %2038 = vmatpush1.msra.mxu0 0.0
    %2039 = vmatprep.subr.mxu0 0.0
    %2040 = vmatpush1.msra.mxu0 0.0
    %2041 = vmatprep.mubr.f32.mxu0 0.0
    %2042 = vmatmul.mubr.f32.gmra.mrb[0].mxu0 %v1968
    %v2043 = vpop.f32.mrb[0].mxu0
    %v2044 = vadd.f32 %v1116, %v2043
    %v2045 = vpop.f32.mrb[0].mxu0
    %v2046 = vadd.f32 %v1120, %v2045
    %2047 = vdwg.mxu0
    %2048 = vmatprep.subr.mxu0 0.0
    %2049 = vmatpush1.msra.mxu0 %v1057
    %2050 = vmatprep.subr.mxu0 0.0
    %2051 = vmatpush1.msra.mxu0 %v1060
    %2052 = vmatprep.subr.mxu0 0.0
    %2053 = vmatpush1.msra.mxu0 %v1063
    %2054 = vmatprep.subr.mxu0 0.0
    %2055 = vmatpush1.msra.mxu0 %v1066
    %2056 = vmatprep.subr.mxu0 0.0
    %2057 = vmatpush1.msra.mxu0 %v1069
    %2058 = vmatprep.subr.mxu0 0.0
    %2059 = vmatpush1.msra.mxu0 %v1072
    %2060 = vmatprep.subr.mxu0 0.0
    %2061 = vmatpush1.msra.mxu0 %v1075
    %2062 = vmatprep.subr.mxu0 0.0
    %2063 = vmatpush1.msra.mxu0 %v1078
    %2064 = vmatprep.subr.mxu0 0.0
    %2065 = vmatpush1.msra.mxu0 %v1081
    %2066 = vmatprep.subr.mxu0 0.0
    %2067 = vmatpush1.msra.mxu0 %v1084
    %2068 = vmatprep.subr.mxu0 0.0
    %2069 = vmatpush1.msra.mxu0 %v1087
    %2070 = vmatprep.subr.mxu0 0.0
    %2071 = vmatpush1.msra.mxu0 %v1090
    %2072 = vmatprep.subr.mxu0 0.0
    %2073 = vmatpush1.msra.mxu0 %v1093
    %2074 = vmatprep.subr.mxu0 0.0
    %2075 = vmatpush1.msra.mxu0 %v1096
    %2076 = vmatprep.subr.mxu0 0.0
    %2077 = vmatpush1.msra.mxu0 %v1099
    %2078 = vmatprep.subr.mxu0 0.0
    %2079 = vmatpush1.msra.mxu0 %v1102
    %2080 = vmatprep.subr.mxu0 0.0
    %2081 = vmatpush1.msra.mxu0 0.0
    %2082 = vmatprep.subr.mxu0 0.0
    %2083 = vmatpush1.msra.mxu0 0.0
    %2084 = vmatprep.subr.mxu0 0.0
    %2085 = vmatpush1.msra.mxu0 0.0
    %2086 = vmatprep.subr.mxu0 0.0
    %2087 = vmatpush1.msra.mxu0 0.0
    %2088 = vmatprep.subr.mxu0 0.0
    %2089 = vmatpush1.msra.mxu0 0.0
    %2090 = vmatprep.subr.mxu0 0.0
    %2091 = vmatpush1.msra.mxu0 0.0
    %2092 = vmatprep.subr.mxu0 0.0
    %2093 = vmatpush1.msra.mxu0 0.0
    %2094 = vmatprep.subr.mxu0 0.0
    %2095 = vmatpush1.msra.mxu0 0.0
    %2096 = vmatprep.subr.mxu0 0.0
    %2097 = vmatpush1.msra.mxu0 0.0
    %2098 = vmatprep.subr.mxu0 0.0
    %2099 = vmatpush1.msra.mxu0 0.0
    %2100 = vmatprep.subr.mxu0 0.0
    %2101 = vmatpush1.msra.mxu0 0.0
    %2102 = vmatprep.subr.mxu0 0.0
    %2103 = vmatpush1.msra.mxu0 0.0
    %2104 = vmatprep.subr.mxu0 0.0
    %2105 = vmatpush1.msra.mxu0 0.0
    %2106 = vmatprep.subr.mxu0 0.0
    %2107 = vmatpush1.msra.mxu0 0.0
    %2108 = vmatprep.subr.mxu0 0.0
    %2109 = vmatpush1.msra.mxu0 0.0
    %2110 = vmatprep.subr.mxu0 0.0
    %2111 = vmatpush1.msra.mxu0 0.0
    %2112 = vmatprep.mubr.f32.mxu0 0.0
    %2113 = vmatmul.mubr.f32.gmra.mrb[0].mxu0 %v1968
    %v2114 = vpop.f32.mrb[0].mxu0
    %v2115 = vadd.f32 %v1124, %v2114
    %v2116 = vpop.f32.mrb[0].mxu0
    %2117 = vdwg.mxu0
    %v2118 = vadd.f32 %v1974, %v2044
    %v2119 = vxor.u32 %v2118, 2147483648
    %v2120 = vmul.f32 %v2119, 1.442695
    %v2121 = vpow.pop %v2120
    %v2122 = vadd.f32 %v2121, 1.0
    %v2123 = vrcp.pop %v2122
    %v2124 = vmul.f32 1.0, %v2123
    %v2125 = vadd.f32 %v1975, %v2046
    %v2126 = vxor.u32 %v2125, 2147483648
    %v2127 = vmul.f32 %v2126, 1.442695
    %v2128 = vpow.pop %v2127
    %v2129 = vadd.f32 %v2128, 1.0
    %v2130 = vrcp.pop %v2129
    %v2131 = vmul.f32 1.0, %v2130
    %v2132 = vmul.f32 %v2124, %v2115
    %v2133 = vadd.f32 %v1976, %v2132
    %v2134 = vtanh.pop %v2133
    %v2135 = vsub.f32 1.0, %v2131
    %v2136 = vmul.f32 %v2135, %v2134
    %v2137 = vmul.f32 %v2131, %v1968
    %v2138 = vadd.f32 %v2136, %v2137
    %s2139 = scalar_lea.vmem [#allocation3], 40
    %2140 = vst [vmem:[%s2139] sm:$0xff] %v2138
    %s2141 = smul.u32 6, 3
    %s2142 = smul.addr %s2141, 8
    %s2143 = scalar_lea.vmem [#allocation2], %s2142
    %v2144 = vld [vmem:[%s2143] sm:$0xff]
    %v2145 = vld [vmem:[%s2143 + $0x8] sm:$0xff]
    %v2146 = vld [vmem:[%s2143 + $0x10] sm:$0xff]
    %2147 = vmatprep.subr.mxu0 %v1056
    %2148 = vmatpush1.msra.mxu0 %v1055
    %2149 = vmatprep.subr.mxu0 %v1059
    %2150 = vmatpush1.msra.mxu0 %v1058
    %2151 = vmatprep.subr.mxu0 %v1062
    %2152 = vmatpush1.msra.mxu0 %v1061
    %2153 = vmatprep.subr.mxu0 %v1065
    %2154 = vmatpush1.msra.mxu0 %v1064
    %2155 = vmatprep.subr.mxu0 %v1068
    %2156 = vmatpush1.msra.mxu0 %v1067
    %2157 = vmatprep.subr.mxu0 %v1071
    %2158 = vmatpush1.msra.mxu0 %v1070
    %2159 = vmatprep.subr.mxu0 %v1074
    %2160 = vmatpush1.msra.mxu0 %v1073
    %2161 = vmatprep.subr.mxu0 %v1077
    %2162 = vmatpush1.msra.mxu0 %v1076
    %2163 = vmatprep.subr.mxu0 %v1080
    %2164 = vmatpush1.msra.mxu0 %v1079
    %2165 = vmatprep.subr.mxu0 %v1083
    %2166 = vmatpush1.msra.mxu0 %v1082
    %2167 = vmatprep.subr.mxu0 %v1086
    %2168 = vmatpush1.msra.mxu0 %v1085
    %2169 = vmatprep.subr.mxu0 %v1089
    %2170 = vmatpush1.msra.mxu0 %v1088
    %2171 = vmatprep.subr.mxu0 %v1092
    %2172 = vmatpush1.msra.mxu0 %v1091
    %2173 = vmatprep.subr.mxu0 %v1095
    %2174 = vmatpush1.msra.mxu0 %v1094
    %2175 = vmatprep.subr.mxu0 %v1098
    %2176 = vmatpush1.msra.mxu0 %v1097
    %2177 = vmatprep.subr.mxu0 %v1101
    %2178 = vmatpush1.msra.mxu0 %v1100
    %2179 = vmatprep.subr.mxu0 0.0
    %2180 = vmatpush1.msra.mxu0 0.0
    %2181 = vmatprep.subr.mxu0 0.0
    %2182 = vmatpush1.msra.mxu0 0.0
    %2183 = vmatprep.subr.mxu0 0.0
    %2184 = vmatpush1.msra.mxu0 0.0
    %2185 = vmatprep.subr.mxu0 0.0
    %2186 = vmatpush1.msra.mxu0 0.0
    %2187 = vmatprep.subr.mxu0 0.0
    %2188 = vmatpush1.msra.mxu0 0.0
    %2189 = vmatprep.subr.mxu0 0.0
    %2190 = vmatpush1.msra.mxu0 0.0
    %2191 = vmatprep.subr.mxu0 0.0
    %2192 = vmatpush1.msra.mxu0 0.0
    %2193 = vmatprep.subr.mxu0 0.0
    %2194 = vmatpush1.msra.mxu0 0.0
    %2195 = vmatprep.subr.mxu0 0.0
    %2196 = vmatpush1.msra.mxu0 0.0
    %2197 = vmatprep.subr.mxu0 0.0
    %2198 = vmatpush1.msra.mxu0 0.0
    %2199 = vmatprep.subr.mxu0 0.0
    %2200 = vmatpush1.msra.mxu0 0.0
    %2201 = vmatprep.subr.mxu0 0.0
    %2202 = vmatpush1.msra.mxu0 0.0
    %2203 = vmatprep.subr.mxu0 0.0
    %2204 = vmatpush1.msra.mxu0 0.0
    %2205 = vmatprep.subr.mxu0 0.0
    %2206 = vmatpush1.msra.mxu0 0.0
    %2207 = vmatprep.subr.mxu0 0.0
    %2208 = vmatpush1.msra.mxu0 0.0
    %2209 = vmatprep.subr.mxu0 0.0
    %2210 = vmatpush1.msra.mxu0 0.0
    %2211 = vmatprep.mubr.f32.mxu0 0.0
    %2212 = vmatmul.mubr.f32.gmra.mrb[0].mxu0 %v2138
    %v2213 = vpop.f32.mrb[0].mxu0
    %v2214 = vadd.f32 %v1116, %v2213
    %v2215 = vpop.f32.mrb[0].mxu0
    %v2216 = vadd.f32 %v1120, %v2215
    %2217 = vdwg.mxu0
    %2218 = vmatprep.subr.mxu0 0.0
    %2219 = vmatpush1.msra.mxu0 %v1057
    %2220 = vmatprep.subr.mxu0 0.0
    %2221 = vmatpush1.msra.mxu0 %v1060
    %2222 = vmatprep.subr.mxu0 0.0
    %2223 = vmatpush1.msra.mxu0 %v1063
    %2224 = vmatprep.subr.mxu0 0.0
    %2225 = vmatpush1.msra.mxu0 %v1066
    %2226 = vmatprep.subr.mxu0 0.0
    %2227 = vmatpush1.msra.mxu0 %v1069
    %2228 = vmatprep.subr.mxu0 0.0
    %2229 = vmatpush1.msra.mxu0 %v1072
    %2230 = vmatprep.subr.mxu0 0.0
    %2231 = vmatpush1.msra.mxu0 %v1075
    %2232 = vmatprep.subr.mxu0 0.0
    %2233 = vmatpush1.msra.mxu0 %v1078
    %2234 = vmatprep.subr.mxu0 0.0
    %2235 = vmatpush1.msra.mxu0 %v1081
    %2236 = vmatprep.subr.mxu0 0.0
    %2237 = vmatpush1.msra.mxu0 %v1084
    %2238 = vmatprep.subr.mxu0 0.0
    %2239 = vmatpush1.msra.mxu0 %v1087
    %2240 = vmatprep.subr.mxu0 0.0
    %2241 = vmatpush1.msra.mxu0 %v1090
    %2242 = vmatprep.subr.mxu0 0.0
    %2243 = vmatpush1.msra.mxu0 %v1093
    %2244 = vmatprep.subr.mxu0 0.0
    %2245 = vmatpush1.msra.mxu0 %v1096
    %2246 = vmatprep.subr.mxu0 0.0
    %2247 = vmatpush1.msra.mxu0 %v1099
    %2248 = vmatprep.subr.mxu0 0.0
    %2249 = vmatpush1.msra.mxu0 %v1102
    %2250 = vmatprep.subr.mxu0 0.0
    %2251 = vmatpush1.msra.mxu0 0.0
    %2252 = vmatprep.subr.mxu0 0.0
    %2253 = vmatpush1.msra.mxu0 0.0
    %2254 = vmatprep.subr.mxu0 0.0
    %2255 = vmatpush1.msra.mxu0 0.0
    %2256 = vmatprep.subr.mxu0 0.0
    %2257 = vmatpush1.msra.mxu0 0.0
    %2258 = vmatprep.subr.mxu0 0.0
    %2259 = vmatpush1.msra.mxu0 0.0
    %2260 = vmatprep.subr.mxu0 0.0
    %2261 = vmatpush1.msra.mxu0 0.0
    %2262 = vmatprep.subr.mxu0 0.0
    %2263 = vmatpush1.msra.mxu0 0.0
    %2264 = vmatprep.subr.mxu0 0.0
    %2265 = vmatpush1.msra.mxu0 0.0
    %2266 = vmatprep.subr.mxu0 0.0
    %2267 = vmatpush1.msra.mxu0 0.0
    %2268 = vmatprep.subr.mxu0 0.0
    %2269 = vmatpush1.msra.mxu0 0.0
    %2270 = vmatprep.subr.mxu0 0.0
    %2271 = vmatpush1.msra.mxu0 0.0
    %2272 = vmatprep.subr.mxu0 0.0
    %2273 = vmatpush1.msra.mxu0 0.0
    %2274 = vmatprep.subr.mxu0 0.0
    %2275 = vmatpush1.msra.mxu0 0.0
    %2276 = vmatprep.subr.mxu0 0.0
    %2277 = vmatpush1.msra.mxu0 0.0
    %2278 = vmatprep.subr.mxu0 0.0
    %2279 = vmatpush1.msra.mxu0 0.0
    %2280 = vmatprep.subr.mxu0 0.0
    %2281 = vmatpush1.msra.mxu0 0.0
    %2282 = vmatprep.mubr.f32.mxu0 0.0
    %2283 = vmatmul.mubr.f32.gmra.mrb[0].mxu0 %v2138
    %v2284 = vpop.f32.mrb[0].mxu0
    %v2285 = vadd.f32 %v1124, %v2284
    %v2286 = vpop.f32.mrb[0].mxu0
    %2287 = vdwg.mxu0
    %v2288 = vadd.f32 %v2144, %v2214
    %v2289 = vxor.u32 %v2288, 2147483648
    %v2290 = vmul.f32 %v2289, 1.442695
    %v2291 = vpow.pop %v2290
    %v2292 = vadd.f32 %v2291, 1.0
    %v2293 = vrcp.pop %v2292
    %v2294 = vmul.f32 1.0, %v2293
    %v2295 = vadd.f32 %v2145, %v2216
    %v2296 = vxor.u32 %v2295, 2147483648
    %v2297 = vmul.f32 %v2296, 1.442695
    %v2298 = vpow.pop %v2297
    %v2299 = vadd.f32 %v2298, 1.0
    %v2300 = vrcp.pop %v2299
    %v2301 = vmul.f32 1.0, %v2300
    %v2302 = vmul.f32 %v2294, %v2285
    %v2303 = vadd.f32 %v2146, %v2302
    %v2304 = vtanh.pop %v2303
    %v2305 = vsub.f32 1.0, %v2301
    %v2306 = vmul.f32 %v2305, %v2304
    %v2307 = vmul.f32 %v2301, %v2138
    %v2308 = vadd.f32 %v2306, %v2307
    %s2309 = scalar_lea.vmem [#allocation3], 48
    %2310 = vst [vmem:[%s2309] sm:$0xff] %v2308
    %s2311 = smul.u32 7, 3
    %s2312 = smul.addr %s2311, 8
    %s2313 = scalar_lea.vmem [#allocation2], %s2312
    %v2314 = vld [vmem:[%s2313] sm:$0xff]
    %v2315 = vld [vmem:[%s2313 + $0x8] sm:$0xff]
    %v2316 = vld [vmem:[%s2313 + $0x10] sm:$0xff]
    %2317 = vmatprep.subr.mxu0 %v1056
    %2318 = vmatpush1.msra.mxu0 %v1055
    %2319 = vmatprep.subr.mxu0 %v1059
    %2320 = vmatpush1.msra.mxu0 %v1058
    %2321 = vmatprep.subr.mxu0 %v1062
    %2322 = vmatpush1.msra.mxu0 %v1061
    %2323 = vmatprep.subr.mxu0 %v1065
    %2324 = vmatpush1.msra.mxu0 %v1064
    %2325 = vmatprep.subr.mxu0 %v1068
    %2326 = vmatpush1.msra.mxu0 %v1067
    %2327 = vmatprep.subr.mxu0 %v1071
    %2328 = vmatpush1.msra.mxu0 %v1070
    %2329 = vmatprep.subr.mxu0 %v1074
    %2330 = vmatpush1.msra.mxu0 %v1073
    %2331 = vmatprep.subr.mxu0 %v1077
    %2332 = vmatpush1.msra.mxu0 %v1076
    %2333 = vmatprep.subr.mxu0 %v1080
    %2334 = vmatpush1.msra.mxu0 %v1079
    %2335 = vmatprep.subr.mxu0 %v1083
    %2336 = vmatpush1.msra.mxu0 %v1082
    %2337 = vmatprep.subr.mxu0 %v1086
    %2338 = vmatpush1.msra.mxu0 %v1085
    %2339 = vmatprep.subr.mxu0 %v1089
    %2340 = vmatpush1.msra.mxu0 %v1088
    %2341 = vmatprep.subr.mxu0 %v1092
    %2342 = vmatpush1.msra.mxu0 %v1091
    %2343 = vmatprep.subr.mxu0 %v1095
    %2344 = vmatpush1.msra.mxu0 %v1094
    %2345 = vmatprep.subr.mxu0 %v1098
    %2346 = vmatpush1.msra.mxu0 %v1097
    %2347 = vmatprep.subr.mxu0 %v1101
    %2348 = vmatpush1.msra.mxu0 %v1100
    %2349 = vmatprep.subr.mxu0 0.0
    %2350 = vmatpush1.msra.mxu0 0.0
    %2351 = vmatprep.subr.mxu0 0.0
    %2352 = vmatpush1.msra.mxu0 0.0
    %2353 = vmatprep.subr.mxu0 0.0
    %2354 = vmatpush1.msra.mxu0 0.0
    %2355 = vmatprep.subr.mxu0 0.0
    %2356 = vmatpush1.msra.mxu0 0.0
    %2357 = vmatprep.subr.mxu0 0.0
    %2358 = vmatpush1.msra.mxu0 0.0
    %2359 = vmatprep.subr.mxu0 0.0
    %2360 = vmatpush1.msra.mxu0 0.0
    %2361 = vmatprep.subr.mxu0 0.0
    %2362 = vmatpush1.msra.mxu0 0.0
    %2363 = vmatprep.subr.mxu0 0.0
    %2364 = vmatpush1.msra.mxu0 0.0
    %2365 = vmatprep.subr.mxu0 0.0
    %2366 = vmatpush1.msra.mxu0 0.0
    %2367 = vmatprep.subr.mxu0 0.0
    %2368 = vmatpush1.msra.mxu0 0.0
    %2369 = vmatprep.subr.mxu0 0.0
    %2370 = vmatpush1.msra.mxu0 0.0
    %2371 = vmatprep.subr.mxu0 0.0
    %2372 = vmatpush1.msra.mxu0 0.0
    %2373 = vmatprep.subr.mxu0 0.0
    %2374 = vmatpush1.msra.mxu0 0.0
    %2375 = vmatprep.subr.mxu0 0.0
    %2376 = vmatpush1.msra.mxu0 0.0
    %2377 = vmatprep.subr.mxu0 0.0
    %2378 = vmatpush1.msra.mxu0 0.0
    %2379 = vmatprep.subr.mxu0 0.0
    %2380 = vmatpush1.msra.mxu0 0.0
    %2381 = vmatprep.mubr.f32.mxu0 0.0
    %2382 = vmatmul.mubr.f32.gmra.mrb[0].mxu0 %v2308
    %v2383 = vpop.f32.mrb[0].mxu0
    %v2384 = vadd.f32 %v1116, %v2383
    %v2385 = vpop.f32.mrb[0].mxu0
    %v2386 = vadd.f32 %v1120, %v2385
    %2387 = vdwg.mxu0
    %2388 = vmatprep.subr.mxu0 0.0
    %2389 = vmatpush1.msra.mxu0 %v1057
    %2390 = vmatprep.subr.mxu0 0.0
    %2391 = vmatpush1.msra.mxu0 %v1060
    %2392 = vmatprep.subr.mxu0 0.0
    %2393 = vmatpush1.msra.mxu0 %v1063
    %2394 = vmatprep.subr.mxu0 0.0
    %2395 = vmatpush1.msra.mxu0 %v1066
    %2396 = vmatprep.subr.mxu0 0.0
    %2397 = vmatpush1.msra.mxu0 %v1069
    %2398 = vmatprep.subr.mxu0 0.0
    %2399 = vmatpush1.msra.mxu0 %v1072
    %2400 = vmatprep.subr.mxu0 0.0
    %2401 = vmatpush1.msra.mxu0 %v1075
    %2402 = vmatprep.subr.mxu0 0.0
    %2403 = vmatpush1.msra.mxu0 %v1078
    %2404 = vmatprep.subr.mxu0 0.0
    %2405 = vmatpush1.msra.mxu0 %v1081
    %2406 = vmatprep.subr.mxu0 0.0
    %2407 = vmatpush1.msra.mxu0 %v1084
    %2408 = vmatprep.subr.mxu0 0.0
    %2409 = vmatpush1.msra.mxu0 %v1087
    %2410 = vmatprep.subr.mxu0 0.0
    %2411 = vmatpush1.msra.mxu0 %v1090
    %2412 = vmatprep.subr.mxu0 0.0
    %2413 = vmatpush1.msra.mxu0 %v1093
    %2414 = vmatprep.subr.mxu0 0.0
    %2415 = vmatpush1.msra.mxu0 %v1096
    %2416 = vmatprep.subr.mxu0 0.0
    %2417 = vmatpush1.msra.mxu0 %v1099
    %2418 = vmatprep.subr.mxu0 0.0
    %2419 = vmatpush1.msra.mxu0 %v1102
    %2420 = vmatprep.subr.mxu0 0.0
    %2421 = vmatpush1.msra.mxu0 0.0
    %2422 = vmatprep.subr.mxu0 0.0
    %2423 = vmatpush1.msra.mxu0 0.0
    %2424 = vmatprep.subr.mxu0 0.0
    %2425 = vmatpush1.msra.mxu0 0.0
    %2426 = vmatprep.subr.mxu0 0.0
    %2427 = vmatpush1.msra.mxu0 0.0
    %2428 = vmatprep.subr.mxu0 0.0
    %2429 = vmatpush1.msra.mxu0 0.0
    %2430 = vmatprep.subr.mxu0 0.0
    %2431 = vmatpush1.msra.mxu0 0.0
    %2432 = vmatprep.subr.mxu0 0.0
    %2433 = vmatpush1.msra.mxu0 0.0
    %2434 = vmatprep.subr.mxu0 0.0
    %2435 = vmatpush1.msra.mxu0 0.0
    %2436 = vmatprep.subr.mxu0 0.0
    %2437 = vmatpush1.msra.mxu0 0.0
    %2438 = vmatprep.subr.mxu0 0.0
    %2439 = vmatpush1.msra.mxu0 0.0
    %2440 = vmatprep.subr.mxu0 0.0
    %2441 = vmatpush1.msra.mxu0 0.0
    %2442 = vmatprep.subr.mxu0 0.0
    %2443 = vmatpush1.msra.mxu0 0.0
    %2444 = vmatprep.subr.mxu0 0.0
    %2445 = vmatpush1.msra.mxu0 0.0
    %2446 = vmatprep.subr.mxu0 0.0
    %2447 = vmatpush1.msra.mxu0 0.0
    %2448 = vmatprep.subr.mxu0 0.0
    %2449 = vmatpush1.msra.mxu0 0.0
    %2450 = vmatprep.subr.mxu0 0.0
    %2451 = vmatpush1.msra.mxu0 0.0
    %2452 = vmatprep.mubr.f32.mxu0 0.0
    %2453 = vmatmul.mubr.f32.gmra.mrb[0].mxu0 %v2308
    %v2454 = vpop.f32.mrb[0].mxu0
    %v2455 = vadd.f32 %v1124, %v2454
    %v2456 = vpop.f32.mrb[0].mxu0
    %2457 = vdwg.mxu0
    %v2458 = vadd.f32 %v2314, %v2384
    %v2459 = vxor.u32 %v2458, 2147483648
    %v2460 = vmul.f32 %v2459, 1.442695
    %v2461 = vpow.pop %v2460
    %v2462 = vadd.f32 %v2461, 1.0
    %v2463 = vrcp.pop %v2462
    %v2464 = vmul.f32 1.0, %v2463
    %v2465 = vadd.f32 %v2315, %v2386
    %v2466 = vxor.u32 %v2465, 2147483648
    %v2467 = vmul.f32 %v2466, 1.442695
    %v2468 = vpow.pop %v2467
    %v2469 = vadd.f32 %v2468, 1.0
    %v2470 = vrcp.pop %v2469
    %v2471 = vmul.f32 1.0, %v2470
    %v2472 = vmul.f32 %v2464, %v2455
    %v2473 = vadd.f32 %v2316, %v2472
    %v2474 = vtanh.pop %v2473
    %v2475 = vsub.f32 1.0, %v2471
    %v2476 = vmul.f32 %v2475, %v2474
    %v2477 = vmul.f32 %v2471, %v2308
    %v2478 = vadd.f32 %v2476, %v2477
    %s2479 = scalar_lea.vmem [#allocation3], 56
    %2480 = vst [vmem:[%s2479] sm:$0xff] %v2478
    %2481 = vst [vmem:[#allocation4] sm:$0xff] %v2478
    %v2482 = vld [vmem:[#allocation5 + $0x390] sm:$0xff]
    %v2483 = vld [vmem:[#allocation5 + $0x3a8] sm:$0xff]
    %v2484 = vld [vmem:[#allocation5 + $0x3c0] sm:$0xff]
    %v2485 = vld [vmem:[#allocation5 + $0x3d8] sm:$0xff]
    %v2486 = vld [vmem:[#allocation5 + $0x3f0] sm:$0xff]
    %v2487 = vld [vmem:[#allocation5 + $0x408] sm:$0xff]
    %v2488 = vld [vmem:[#allocation5 + $0x420] sm:$0xff]
    %v2489 = vld [vmem:[#allocation5 + $0x438] sm:$0xff]
    %v2490 = vld [vmem:[#allocation5 + $0x450] sm:$0xff]
    %v2491 = vld [vmem:[#allocation5 + $0x468] sm:$0xff]
    %v2492 = vld [vmem:[#allocation5 + $0x480] sm:$0xff]
    %v2493 = vld [vmem:[#allocation5 + $0x498] sm:$0xff]
    %v2494 = vld [vmem:[#allocation5 + $0x4b0] sm:$0xff]
    %v2495 = vld [vmem:[#allocation5 + $0x4c8] sm:$0xff]
    %v2496 = vld [vmem:[#allocation5 + $0x4e0] sm:$0xff]
    %v2497 = vld [vmem:[#allocation5 + $0x4f8] sm:$0xff]
    %v2498 = vld [vmem:[#allocation5 + $0x510] sm:$0xff]
    %v2499 = vld [vmem:[#allocation5 + $0x528] sm:$0xff]
    %v2500 = vld [vmem:[#allocation5 + $0x540] sm:$0xff]
    %v2501 = vld [vmem:[#allocation5 + $0x558] sm:$0xff]
    %v2502 = vld [vmem:[#allocation5 + $0x5e8] ss:$0 sm:$0xff]
    %v2503 = vld [vmem:[#allocation3] sm:$0xff]
    %v2504 = vld [vmem:[#allocation3 + $0x8] sm:$0xff]
    %v2505 = vld [vmem:[#allocation3 + $0x10] sm:$0xff]
    %v2506 = vld [vmem:[#allocation3 + $0x18] sm:$0xff]
    %v2507 = vld [vmem:[#allocation3 + $0x20] sm:$0xff]
    %v2508 = vld [vmem:[#allocation3 + $0x28] sm:$0xff]
    %v2509 = vld [vmem:[#allocation3 + $0x30] sm:$0xff]
    %v2510 = vld [vmem:[#allocation3 + $0x38] sm:$0xff]
    %v2512 = vsel %vm186, %v378, 0
    %v2515 = vsel %vm186, %v379, 0
    %v2518 = vsel %vm186, %v380, 0
    %v2521 = vsel %vm186, %v381, 0
    %v2524 = vsel %vm186, %v382, 0
    %v2527 = vsel %vm186, %v383, 0
    %v2530 = vsel %vm186, %v384, 0
    %v2533 = vsel %vm186, %v385, 0
    %2535 = vmatprep.subr.mxu0 0.0
    %2536 = vmatpush1.msra.mxu0 %v2498
    %2537 = vmatprep.subr.mxu0 0.0
    %2538 = vmatpush1.msra.mxu0 %v2499
    %2539 = vmatprep.subr.mxu0 0.0
    %2540 = vmatpush1.msra.mxu0 %v2500
    %2541 = vmatprep.subr.mxu0 0.0
    %2542 = vmatpush1.msra.mxu0 %v2501
    %2543 = vmatprep.subr.mxu0 0.0
    %2544 = vmatpush1.msra.mxu0 0.0
    %2545 = vmatprep.subr.mxu0 0.0
    %2546 = vmatpush1.msra.mxu0 0.0
    %2547 = vmatprep.subr.mxu0 0.0
    %2548 = vmatpush1.msra.mxu0 0.0
    %2549 = vmatprep.subr.mxu0 0.0
    %2550 = vmatpush1.msra.mxu0 0.0
    %2551 = vmatprep.subr.mxu0 0.0
    %2552 = vmatpush1.msra.mxu0 0.0
    %2553 = vmatprep.subr.mxu0 0.0
    %2554 = vmatpush1.msra.mxu0 0.0
    %2555 = vmatprep.subr.mxu0 0.0
    %2556 = vmatpush1.msra.mxu0 0.0
    %2557 = vmatprep.subr.mxu0 0.0
    %2558 = vmatpush1.msra.mxu0 0.0
    %2559 = vmatprep.subr.mxu0 0.0
    %2560 = vmatpush1.msra.mxu0 0.0
    %2561 = vmatprep.subr.mxu0 0.0
    %2562 = vmatpush1.msra.mxu0 0.0
    %2563 = vmatprep.subr.mxu0 0.0
    %2564 = vmatpush1.msra.mxu0 0.0
    %2565 = vmatprep.subr.mxu0 0.0
    %2566 = vmatpush1.msra.mxu0 0.0
    %2567 = vmatprep.subr.mxu0 0.0
    %2568 = vmatpush1.msra.mxu0 0.0
    %2569 = vmatprep.subr.mxu0 0.0
    %2570 = vmatpush1.msra.mxu0 0.0
    %2571 = vmatprep.subr.mxu0 0.0
    %2572 = vmatpush1.msra.mxu0 0.0
    %2573 = vmatprep.subr.mxu0 0.0
    %2574 = vmatpush1.msra.mxu0 0.0
    %2575 = vmatprep.subr.mxu0 0.0
    %2576 = vmatpush1.msra.mxu0 0.0
    %2577 = vmatprep.subr.mxu0 0.0
    %2578 = vmatpush1.msra.mxu0 0.0
    %2579 = vmatprep.subr.mxu0 0.0
    %2580 = vmatpush1.msra.mxu0 0.0
    %2581 = vmatprep.subr.mxu0 0.0
    %2582 = vmatpush1.msra.mxu0 0.0
    %2583 = vmatprep.subr.mxu0 0.0
    %2584 = vmatpush1.msra.mxu0 0.0
    %2585 = vmatprep.subr.mxu0 0.0
    %2586 = vmatpush1.msra.mxu0 0.0
    %2587 = vmatprep.subr.mxu0 0.0
    %2588 = vmatpush1.msra.mxu0 0.0
    %2589 = vmatprep.subr.mxu0 0.0
    %2590 = vmatpush1.msra.mxu0 0.0
    %2591 = vmatprep.subr.mxu0 0.0
    %2592 = vmatpush1.msra.mxu0 0.0
    %2593 = vmatprep.subr.mxu0 0.0
    %2594 = vmatpush1.msra.mxu0 0.0
    %2595 = vmatprep.subr.mxu0 0.0
    %2596 = vmatpush1.msra.mxu0 0.0
    %2597 = vmatprep.subr.mxu0 0.0
    %2598 = vmatpush1.msra.mxu0 0.0
    %2599 = vmatprep.mubr.f32.mxu0 0.0
    %2600 = vmatmul.mubr.f32.gmra.mrb[0].mxu0 %v2512
    %v2601 = vpop.f32.mrb[0].mxu0
    %v2602 = vadd.f32 0.0, %v2601
    %v2603 = vpop.f32.mrb[0].mxu0
    %2604 = vmatprep.mubr.f32.mxu0 0.0
    %2605 = vmatmul.mubr.f32.gmra.mrb[0].mxu0 %v2515
    %v2606 = vpop.f32.mrb[0].mxu0
    %v2607 = vadd.f32 0.0, %v2606
    %v2608 = vpop.f32.mrb[0].mxu0
    %2609 = vmatprep.mubr.f32.mxu0 0.0
    %2610 = vmatmul.mubr.f32.gmra.mrb[0].mxu0 %v2518
    %v2611 = vpop.f32.mrb[0].mxu0
    %v2612 = vadd.f32 0.0, %v2611
    %v2613 = vpop.f32.mrb[0].mxu0
    %2614 = vmatprep.mubr.f32.mxu0 0.0
    %2615 = vmatmul.mubr.f32.gmra.mrb[0].mxu0 %v2521
    %v2616 = vpop.f32.mrb[0].mxu0
    %v2617 = vadd.f32 0.0, %v2616
    %v2618 = vpop.f32.mrb[0].mxu0
    %2619 = vmatprep.mubr.f32.mxu0 0.0
    %2620 = vmatmul.mubr.f32.gmra.mrb[0].mxu0 %v2524
    %v2621 = vpop.f32.mrb[0].mxu0
    %v2622 = vadd.f32 0.0, %v2621
    %v2623 = vpop.f32.mrb[0].mxu0
    %2624 = vmatprep.mubr.f32.mxu0 0.0
    %2625 = vmatmul.mubr.f32.gmra.mrb[0].mxu0 %v2527
    %v2626 = vpop.f32.mrb[0].mxu0
    %v2627 = vadd.f32 0.0, %v2626
    %v2628 = vpop.f32.mrb[0].mxu0
    %2629 = vmatprep.mubr.f32.mxu0 0.0
    %2630 = vmatmul.mubr.f32.gmra.mrb[0].mxu0 %v2530
    %v2631 = vpop.f32.mrb[0].mxu0
    %v2632 = vadd.f32 0.0, %v2631
    %v2633 = vpop.f32.mrb[0].mxu0
    %2634 = vmatprep.mubr.f32.mxu0 0.0
    %2635 = vmatmul.mubr.f32.gmra.mrb[0].mxu0 %v2533
    %v2636 = vpop.f32.mrb[0].mxu0
    %v2637 = vadd.f32 0.0, %v2636
    %v2638 = vpop.f32.mrb[0].mxu0
    %2639 = vdwg.mxu0
    %2640 = vmatprep.subr.mxu0 0.0
    %2641 = vmatpush1.msra.mxu0 %v2482
    %2642 = vmatprep.subr.mxu0 0.0
    %2643 = vmatpush1.msra.mxu0 %v2483
    %2644 = vmatprep.subr.mxu0 0.0
    %2645 = vmatpush1.msra.mxu0 %v2484
    %2646 = vmatprep.subr.mxu0 0.0
    %2647 = vmatpush1.msra.mxu0 %v2485
    %2648 = vmatprep.subr.mxu0 0.0
    %2649 = vmatpush1.msra.mxu0 %v2486
    %2650 = vmatprep.subr.mxu0 0.0
    %2651 = vmatpush1.msra.mxu0 %v2487
    %2652 = vmatprep.subr.mxu0 0.0
    %2653 = vmatpush1.msra.mxu0 %v2488
    %2654 = vmatprep.subr.mxu0 0.0
    %2655 = vmatpush1.msra.mxu0 %v2489
    %2656 = vmatprep.subr.mxu0 0.0
    %2657 = vmatpush1.msra.mxu0 %v2490
    %2658 = vmatprep.subr.mxu0 0.0
    %2659 = vmatpush1.msra.mxu0 %v2491
    %2660 = vmatprep.subr.mxu0 0.0
    %2661 = vmatpush1.msra.mxu0 %v2492
    %2662 = vmatprep.subr.mxu0 0.0
    %2663 = vmatpush1.msra.mxu0 %v2493
    %2664 = vmatprep.subr.mxu0 0.0
    %2665 = vmatpush1.msra.mxu0 %v2494
    %2666 = vmatprep.subr.mxu0 0.0
    %2667 = vmatpush1.msra.mxu0 %v2495
    %2668 = vmatprep.subr.mxu0 0.0
    %2669 = vmatpush1.msra.mxu0 %v2496
    %2670 = vmatprep.subr.mxu0 0.0
    %2671 = vmatpush1.msra.mxu0 %v2497
    %2672 = vmatprep.subr.mxu0 0.0
    %2673 = vmatpush1.msra.mxu0 0.0
    %2674 = vmatprep.subr.mxu0 0.0
    %2675 = vmatpush1.msra.mxu0 0.0
    %2676 = vmatprep.subr.mxu0 0.0
    %2677 = vmatpush1.msra.mxu0 0.0
    %2678 = vmatprep.subr.mxu0 0.0
    %2679 = vmatpush1.msra.mxu0 0.0
    %2680 = vmatprep.subr.mxu0 0.0
    %2681 = vmatpush1.msra.mxu0 0.0
    %2682 = vmatprep.subr.mxu0 0.0
    %2683 = vmatpush1.msra.mxu0 0.0
    %2684 = vmatprep.subr.mxu0 0.0
    %2685 = vmatpush1.msra.mxu0 0.0
    %2686 = vmatprep.subr.mxu0 0.0
    %2687 = vmatpush1.msra.mxu0 0.0
    %2688 = vmatprep.subr.mxu0 0.0
    %2689 = vmatpush1.msra.mxu0 0.0
    %2690 = vmatprep.subr.mxu0 0.0
    %2691 = vmatpush1.msra.mxu0 0.0
    %2692 = vmatprep.subr.mxu0 0.0
    %2693 = vmatpush1.msra.mxu0 0.0
    %2694 = vmatprep.subr.mxu0 0.0
    %2695 = vmatpush1.msra.mxu0 0.0
    %2696 = vmatprep.subr.mxu0 0.0
    %2697 = vmatpush1.msra.mxu0 0.0
    %2698 = vmatprep.subr.mxu0 0.0
    %2699 = vmatpush1.msra.mxu0 0.0
    %2700 = vmatprep.subr.mxu0 0.0
    %2701 = vmatpush1.msra.mxu0 0.0
    %2702 = vmatprep.subr.mxu0 0.0
    %2703 = vmatpush1.msra.mxu0 0.0
    %2704 = vmatprep.mubr.f32.mxu0 0.0
    %2705 = vmatmul.mubr.f32.gmra.mrb[0].mxu0 %v2503
    %v2706 = vpop.f32.mrb[0].mxu0
    %v2707 = vadd.f32 %v2602, %v2706
    %v2708 = vpop.f32.mrb[0].mxu0
    %2709 = vmatprep.mubr.f32.mxu0 0.0
    %2710 = vmatmul.mubr.f32.gmra.mrb[0].mxu0 %v2504
    %v2711 = vpop.f32.mrb[0].mxu0
    %v2712 = vadd.f32 %v2607, %v2711
    %v2713 = vpop.f32.mrb[0].mxu0
    %2714 = vmatprep.mubr.f32.mxu0 0.0
    %2715 = vmatmul.mubr.f32.gmra.mrb[0].mxu0 %v2505
    %v2716 = vpop.f32.mrb[0].mxu0
    %v2717 = vadd.f32 %v2612, %v2716
    %v2718 = vpop.f32.mrb[0].mxu0
    %2719 = vmatprep.mubr.f32.mxu0 0.0
    %2720 = vmatmul.mubr.f32.gmra.mrb[0].mxu0 %v2506
    %v2721 = vpop.f32.mrb[0].mxu0
    %v2722 = vadd.f32 %v2617, %v2721
    %v2723 = vpop.f32.mrb[0].mxu0
    %2724 = vmatprep.mubr.f32.mxu0 0.0
    %2725 = vmatmul.mubr.f32.gmra.mrb[0].mxu0 %v2507
    %v2726 = vpop.f32.mrb[0].mxu0
    %v2727 = vadd.f32 %v2622, %v2726
    %v2728 = vpop.f32.mrb[0].mxu0
    %2729 = vmatprep.mubr.f32.mxu0 0.0
    %2730 = vmatmul.mubr.f32.gmra.mrb[0].mxu0 %v2508
    %v2731 = vpop.f32.mrb[0].mxu0
    %v2732 = vadd.f32 %v2627, %v2731
    %v2733 = vpop.f32.mrb[0].mxu0
    %2734 = vmatprep.mubr.f32.mxu0 0.0
    %2735 = vmatmul.mubr.f32.gmra.mrb[0].mxu0 %v2509
    %v2736 = vpop.f32.mrb[0].mxu0
    %v2737 = vadd.f32 %v2632, %v2736
    %v2738 = vpop.f32.mrb[0].mxu0
    %2739 = vmatprep.mubr.f32.mxu0 0.0
    %2740 = vmatmul.mubr.f32.gmra.mrb[0].mxu0 %v2510
    %v2741 = vpop.f32.mrb[0].mxu0
    %v2742 = vadd.f32 %v2637, %v2741
    %v2743 = vpop.f32.mrb[0].mxu0
    %2744 = vdwg.mxu0
    %v2745 = vadd.f32 %v2707, %v2502
    %v2746 = vadd.f32 %v2712, %v2502
    %v2747 = vadd.f32 %v2717, %v2502
    %v2748 = vadd.f32 %v2722, %v2502
    %v2749 = vadd.f32 %v2727, %v2502
    %v2750 = vadd.f32 %v2732, %v2502
    %v2751 = vadd.f32 %v2737, %v2502
    %v2752 = vadd.f32 %v2742, %v2502
    %vm2753 = vcmask 523264
    %2754 = vst.msk [vmem:[%s3] sm:$0xff] %vm2753, %v2745
    %2755 = vst.msk [vmem:[%s3 + $0x8] sm:$0xff] %vm2753, %v2746
    %2756 = vst.msk [vmem:[%s3 + $0x10] sm:$0xff] %vm2753, %v2747
    %2757 = vst.msk [vmem:[%s3 + $0x18] sm:$0xff] %vm2753, %v2748
    %2758 = vst.msk [vmem:[%s3 + $0x20] sm:$0xff] %vm2753, %v2749
    %2759 = vst.msk [vmem:[%s3 + $0x28] sm:$0xff] %vm2753, %v2750
    %2760 = vst.msk [vmem:[%s3 + $0x30] sm:$0xff] %vm2753, %v2751
    %2761 = vst.msk [vmem:[%s3 + $0x38] sm:$0xff] %vm2753, %v2752
    // Predicated region
    $region22: #{agent_forward_rollout.1} parent=1 // pred_check
      _
    $region23: #{agent_forward_rollout.1} parent=1 // pred_check_branch
      %2763 = sbr.rel (0) target = $region25
    $region24: #{agent_forward_rollout.1} parent=1 // pred_region
      _
    $region25: #{agent_forward_rollout.1} parent=1 // pred_fallthru
      _
    // Predicated region
    $region26: #{agent_forward_rollout.1} parent=1 // pred_check
      _
    $region27: #{agent_forward_rollout.1} parent=1 // pred_check_branch
      %2765 = sbr.rel (0) target = $region29
    $region28: #{agent_forward_rollout.1} parent=1 // pred_region
      _
    $region29: #{agent_forward_rollout.1} parent=1 // pred_fallthru
      _
    %2766 = vsyncpa [#allocation6], 1

</llo_original>
